<compile_context>
chip_gen: v6e
topology: v6e:2x2x1
jax: 0.10.0
libtpu: 0.0.40
codegen_flags: <defaults>
</compile_context>

<pallas_src>
import jax
import jax.numpy as jnp
from jax.experimental import pallas as pl
from jax.experimental.pallas import tpu as pltpu

PAD = 128     # lane-dense channel padding (full-width stores, MXU-friendly N)
K_DIM = 32    # real channel count == trimmed contraction dim of every X @ W
NUM_W = 16    # 14 conv layers, conv13/conv03 split into top/bottom halves


# ----------------------------------------------------------------------------
# Pallas kernel: whole U-Net forward for a chunk of batch-folded graphs.
# Nodes of all graphs in the chunk live on the sublane axis; channels (padded
# to 128) on the lane axis.  Per-graph independence comes from block-diagonal
# left matrices built on the host.
# ----------------------------------------------------------------------------
def _unet_kernel(x_ref, a0_ref, a1_ref, a2_ref,
                 a1p1_ref, a2p2_ref, a1u2_ref, a0u1_ref,
                 w_ref, b_ref, o_ref):
    f32, bf16 = jnp.float32, jnp.bfloat16

    def xw(x, li):
        # Trimmed-K (32) bf16-operand MXU matmul, f32 accumulation.
        return jnp.dot(x[:, :K_DIM].astype(bf16), w_ref[li],
                       preferred_element_type=f32)

    def agg(a_bf16, v_f32):
        # A_hat @ (X W): bf16 operands, f32 accumulator.
        return jnp.dot(a_bf16, v_f32.astype(bf16), preferred_element_type=f32)

    def conv(a_bf16, x, li):
        return agg(a_bf16, xw(x, li)) + b_ref[li]

    A0 = a0_ref[...]
    A1 = a1_ref[...]
    A2 = a2_ref[...]

    x = x_ref[...]                      # (chunk*N0, PAD) f32
    x = conv(A0, x, 0)                  # conv01
    x = conv(A0, x, 1)                  # conv02
    copy0 = x
    x = conv(a1p1_ref[...], x, 2)       # pool1 folded into conv11: (A1@P1)@(xW)
    x = conv(A1, x, 3)                  # conv12
    copy1 = x
    x = conv(a2p2_ref[...], x, 4)       # pool2 folded into conv21
    x = conv(A2, x, 5)                  # conv22
    # unpool2 + skip-concat + conv13:
    #   A1 @ ([U2 x, copy1] @ W13) == (A1@U2)@(x W13_top) + A1@(copy1 W13_bot)
    x = agg(a1u2_ref[...], xw(x, 6)) + agg(A1, xw(copy1, 7)) + b_ref[6]
    x = conv(A1, x, 8)                  # conv14
    x = conv(A1, x, 9)                  # conv15
    x = conv(A1, x, 10)                 # conv16
    # unpool1 + skip-concat + conv03 (same folding with A0@U1)
    x = agg(a0u1_ref[...], xw(x, 11)) + agg(A0, xw(copy0, 12)) + b_ref[11]
    x = conv(A0, x, 13)                 # conv04
    x = conv(A0, x, 14)                 # conv05
    x = conv(A0, x, 15)                 # conv06
    o_ref[...] = x                      # lane-dense (chunk*N0, 128) f32 store


def _cost_estimate(B, N0, N1, N2, operands, out_nbytes):
    # X@W matmuls (per-row 2*K*PAD flops), counting rows feeding each layer.
    xw_rows = 7 * N0 + 7 * N1 + 2 * N2
    flops = 2 * B * xw_rows * K_DIM * PAD
    # A_hat @ (XW) matmuls (out_rows * in_rows pairs, PAD lanes).
    a_pairs = 6 * N0 * N0 + 2 * N0 * N1 + 5 * N1 * N1 + 2 * N1 * N2 + N2 * N2
    flops += 2 * B * a_pairs * PAD
    bytes_accessed = out_nbytes + sum(int(a.size) * a.dtype.itemsize
                                      for a in operands)
    return pl.CostEstimate(flops=int(flops), transcendentals=0,
                           bytes_accessed=int(bytes_accessed))


def fused_forward(x_pad, graph, Ws, bs, B, N0, n_steps):
    """Single (dual on v7x) grid-step pallas_call over the batch-folded graphs."""
    chunk = B // n_steps
    N1, N2 = graph["A1n"].shape[0], graph["A2n"].shape[0]

    def bd(M):  # per-chunk block-diagonal operator, stored bf16 for the MXU
        return jnp.kron(jnp.eye(chunk, dtype=jnp.float32), M).astype(jnp.bfloat16)

    A0, A1, A2 = bd(graph["A0n"]), bd(graph["A1n"]), bd(graph["A2n"])
    A1P1, A2P2 = bd(graph["A1P1"]), bd(graph["A2P2"])
    A1U2, A0U1 = bd(graph["A1U2"]), bd(graph["A0U1"])

    rows = chunk * N0
    const2 = lambda s: (0, 0)
    const3 = lambda s: (0, 0, 0)
    full2 = lambda M: pl.BlockSpec(M.shape, const2)   # grid-constant, block == array

    operands = (x_pad, A0, A1, A2, A1P1, A2P2, A1U2, A0U1, Ws, bs)
    ce = _cost_estimate(B, N0, N1, N2, operands, out_nbytes=B * N0 * PAD * 4)

    return pl.pallas_call(
        _unet_kernel,
        out_shape=jax.ShapeDtypeStruct((B * N0, PAD), jnp.float32),
        grid=(n_steps,),
        in_specs=[
            pl.BlockSpec((rows, PAD), lambda s: (s, 0)),   # folded per-chunk feats
            full2(A0), full2(A1), full2(A2),
            full2(A1P1), full2(A2P2), full2(A1U2), full2(A0U1),
            pl.BlockSpec(Ws.shape, const3),                # (NUM_W, K_DIM, PAD) bf16
            pl.BlockSpec(bs.shape, const3),                # (NUM_W, 1, PAD)    f32
        ],
        out_specs=pl.BlockSpec((rows, PAD), lambda s: (s, 0)),
        compiler_params=pltpu.CompilerParams(
            dimension_semantics=("parallel",)),            # megacore-shard on v7x
        cost_estimate=ce,
    )(*operands)


def pick_grid_steps(B, N2):
    """2 parallel steps on v7x (2 TensorCores/chip), 1 step on v5e/v6e."""
    try:
        kind = jax.devices()[0].device_kind.lower()
    except Exception:
        kind = ""
    if ("v7" in kind or "7x" in kind) and B % 2 == 0 and ((B // 2) * N2) % 8 == 0:
        return 2
    return 1


# ----------------------------------------------------------------------------
# Graph glue (plain JAX, computed once on the host): adjacency, pooling
# ----------------------------------------------------------------------------
def ring_edges(n):
    i = jnp.arange(n)
    src = jnp.concatenate([i, (i + 1) % n])
    dst = jnp.concatenate([(i + 1) % n, i])
    return src, dst


def dense_adj(src, dst, n):
    return jnp.zeros((n, n), jnp.float32).at[dst, src].set(1.0)


def normalize_adj(A01):
    """Symmetric GCN normalization with self loops: D^-1/2 (A+I) D^-1/2."""
    n = A01.shape[0]
    A = jnp.where(A01 + jnp.eye(n, dtype=jnp.float32) > 0, 1.0, 0.0)
    dinv = jax.lax.rsqrt(A.sum(axis=1))
    return A * dinv[:, None] * dinv[None, :]


def cluster_matrix(n):
    """Deterministic assignment: node i -> cluster i // 2.  Shape [n, n//2]."""
    return (jnp.arange(n)[:, None] // 2 ==
            jnp.arange(n // 2)[None, :]).astype(jnp.float32)


def coarsen_adj(A01, S):
    Ac = jnp.where(S.T @ A01 @ S > 0, 1.0, 0.0)
    return Ac * (1.0 - jnp.eye(Ac.shape[0]))     # self loops re-added by normalize


# TODO(synk): the reference pool1/pool2 operators are undefined in the module;
# a deterministic 2-node mean cluster pool (and broadcast unpool) is used here.
def prepare_graph(A0):
    N0 = A0.shape[0]
    S1 = cluster_matrix(N0)
    P1 = S1.T / S1.sum(axis=0)[:, None]          # cluster-mean pooling matrix
    A1 = coarsen_adj(A0, S1)
    S2 = cluster_matrix(N0 // 2)
    P2 = S2.T / S2.sum(axis=0)[:, None]
    A2 = coarsen_adj(A1, S2)
    A0n, A1n, A2n = normalize_adj(A0), normalize_adj(A1), normalize_adj(A2)
    return dict(A0n=A0n, A1n=A1n, A2n=A2n, P1=P1, U1=S1, P2=P2, U2=S2,
                # pool/unpool folded into the adjacent left matrix (host-side):
                A1P1=A1n @ P1, A2P2=A2n @ P2, A1U2=A1n @ S2, A0U1=A0n @ S1)


# ----------------------------------------------------------------------------
# Feature prep (mirrors the upper-tri gathers + hstack of the reference)
# ----------------------------------------------------------------------------
def build_features(featr3, stmdist):
    rows = jnp.array([0, 0, 0, 1, 1, 2])
    cols = jnp.array([0, 1, 2, 1, 2, 2])
    B, N = featr3.shape[:2]
    t0 = featr3[:, :, 0][..., rows, cols]                 # [B, N, 6]
    t1 = featr3[:, :, 1][..., rows, cols]                 # [B, N, 6]
    t2 = featr3[:, :, 2].reshape(B, N, 9)                 # [B, N, 9]
    return jnp.concatenate([t0, t1, t2, stmdist], axis=-1)


# ----------------------------------------------------------------------------
# Parameter init (torch-Linear-like) + pad/stack to the kernel layout
# ----------------------------------------------------------------------------
def init_linear(key, cin, cout):
    k1, k2 = jax.random.split(key)
    scale = 1.0 / jnp.sqrt(jnp.float32(cin))
    W = jax.random.uniform(k1, (cin, cout), jnp.float32, -scale, scale)
    b = jax.random.uniform(k2, (cout,), jnp.float32, -scale, scale)
    return W, b


def stack_padded_params(params, hid):
    def pw(W):                    # (cin<=K_DIM, cout<=PAD) -> (K_DIM, PAD)
        assert W.shape[0] <= K_DIM and W.shape[1] <= PAD
        return jnp.zeros((K_DIM, PAD), jnp.float32).at[:W.shape[0], :W.shape[1]].set(W)

    def pb(b):
        return jnp.zeros((1, PAD), jnp.float32).at[0, :b.shape[0]].set(b)

    zb = jnp.zeros((1, PAD), jnp.float32)
    W13, b13 = params["conv13"]
    W03, b03 = params["conv03"]
    w_list = [
        pw(params["conv01"][0]), pw(params["conv02"][0]),
        pw(params["conv11"][0]), pw(params["conv12"][0]),
        pw(params["conv21"][0]), pw(params["conv22"][0]),
        pw(W13[:hid]), pw(W13[hid:]),                        # conv13 split
        pw(params["conv14"][0]), pw(params["conv15"][0]), pw(params["conv16"][0]),
        pw(W03[:hid]), pw(W03[hid:]),                        # conv03 split
        pw(params["conv04"][0]), pw(params["conv05"][0]), pw(params["conv06"][0]),
    ]
    b_list = [
        pb(params["conv01"][1]), pb(params["conv02"][1]),
        pb(params["conv11"][1]), pb(params["conv12"][1]),
        pb(params["conv21"][1]), pb(params["conv22"][1]),
        pb(b13), zb,
        pb(params["conv14"][1]), pb(params["conv15"][1]), pb(params["conv16"][1]),
        pb(b03), zb,
        pb(params["conv04"][1]), pb(params["conv05"][1]), pb(params["conv06"][1]),
    ]
    return jnp.stack(w_list).astype(jnp.bfloat16), jnp.stack(b_list)


# ----------------------------------------------------------------------------
# Full forward pass (mirrors Compare.forward), fused into one Pallas call
# ----------------------------------------------------------------------------
def compare_forward(featr3, stmdist, graph, params, hid, n_steps=None):
    B, N0 = featr3.shape[:2]
    x32 = build_features(featr3, stmdist)                       # [B, N0, in_dim]
    in_dim = x32.shape[-1]
    assert in_dim <= K_DIM
    x_pad = jnp.zeros((B * N0, PAD), jnp.float32).at[:, :in_dim].set(
        x32.reshape(B * N0, in_dim))
    Ws, bs = stack_padded_params(params, hid)
    if n_steps is None:
        n_steps = pick_grid_steps(B, graph["A2n"].shape[0])
    out_pad = fused_forward(x_pad, graph, Ws, bs, B, N0, n_steps)
    return out_pad.reshape(B, N0, PAD)[:, :, :hid]


# ----------------------------------------------------------------------------
# References for correctness checking
# ----------------------------------------------------------------------------
def reference_forward(x32, graph, params):
    """Module-faithful pure-f32 reference (explicit pool/unpool/concat)."""
    A0n, A1n, A2n = graph["A0n"], graph["A1n"], graph["A2n"]
    P1, U1, P2, U2 = graph["P1"], graph["U1"], graph["P2"], graph["U2"]

    def conv(name, a, x):
        W, b = params[name]
        return a @ (x @ W) + b

    def single(x):
        x = conv("conv01", A0n, x); x = conv("conv02", A0n, x); c0 = x
        x = P1 @ x
        x = conv("conv11", A1n, x); x = conv("conv12", A1n, x); c1 = x
        x = P2 @ x
        x = conv("conv21", A2n, x); x = conv("conv22", A2n, x)
        x = U2 @ x
        x = jnp.concatenate([x, c1], axis=1)
        x = conv("conv13", A1n, x); x = conv("conv14", A1n, x)
        x = conv("conv15", A1n, x); x = conv("conv16", A1n, x)
        x = U1 @ x
        x = jnp.concatenate([x, c0], axis=1)
        x = conv("conv03", A0n, x); x = conv("conv04", A0n, x)
        x = conv("conv05", A0n, x); x = conv("conv06", A0n, x)
        return x

    return jax.vmap(single)(x32)


def mimic_reference(x32, graph, Ws, bs, hid):
    """Plain-JAX mirror of the kernel's exact algebra & precision (folded
    pool/unpool, bf16 matmul operands, f32 accumulation) — tight check."""
    f32, bf16 = jnp.float32, jnp.bfloat16
    A0 = graph["A0n"].astype(bf16); A1 = graph["A1n"].astype(bf16)
    A2 = graph["A2n"].astype(bf16)
    A1P1 = graph["A1P1"].astype(bf16); A2P2 = graph["A2P2"].astype(bf16)
    A1U2 = graph["A1U2"].astype(bf16); A0U1 = graph["A0U1"].astype(bf16)

    def xw(x, li):
        return jnp.dot(x[:, :K_DIM].astype(bf16), Ws[li], preferred_element_type=f32)

    def agg(a, v):
        return jnp.dot(a, v.astype(bf16), preferred_element_type=f32)

    def conv(a, x, li):
        return agg(a, xw(x, li)) + bs[li]

    def single(x0):
        x = jnp.zeros((x0.shape[0], PAD), f32).at[:, :x0.shape[1]].set(x0)
        x = conv(A0, x, 0); x = conv(A0, x, 1); c0 = x
        x = conv(A1P1, x, 2); x = conv(A1, x, 3); c1 = x
        x = conv(A2P2, x, 4); x = conv(A2, x, 5)
        x = agg(A1U2, xw(x, 6)) + agg(A1, xw(c1, 7)) + bs[6]
        x = conv(A1, x, 8); x = conv(A1, x, 9); x = conv(A1, x, 10)
        x = agg(A0U1, xw(x, 11)) + agg(A0, xw(c0, 12)) + bs[11]
        x = conv(A0, x, 13); x = conv(A0, x, 14); x = conv(A0, x, 15)
        return x[:, :hid]

    return jax.vmap(single)(x32)


if __name__ == "__main__":
    key = jax.random.PRNGKey(0)
    B = 4              # independent graphs, folded onto the sublane axis
    N0 = 16            # fine-level node count  (N1 = 8, N2 = 4 after pooling)
    STM = 11           # stmdist width -> input dim = 6 + 6 + 9 + 11 = 32
    HID = 32           # hidden channels of every conv (== K_DIM)

    k_f, k_s, k_p = jax.random.split(key, 3)
    featr3 = jax.random.normal(k_f, (B, N0, 3, 3, 3), jnp.float32)
    stmdist = jax.random.normal(k_s, (B, N0, STM), jnp.float32)

    in_dim = 6 + 6 + 9 + STM
    layer_dims = {
        "conv01": (in_dim, HID), "conv02": (HID, HID),
        "conv11": (HID, HID),    "conv12": (HID, HID),
        "conv21": (HID, HID),    "conv22": (HID, HID),
        "conv13": (2 * HID, HID), "conv14": (HID, HID),
        "conv15": (HID, HID),     "conv16": (HID, HID),
        "conv03": (2 * HID, HID), "conv04": (HID, HID),
        "conv05": (HID, HID),     "conv06": (HID, HID),
    }
    params = {
        name: init_linear(jax.random.fold_in(k_p, i), ci, co)
        for i, (name, (ci, co)) in enumerate(layer_dims.items())
    }

    src, dst = ring_edges(N0)
    A0 = dense_adj(src, dst, N0)      # scale0_edge_index as dense 0/1 adjacency
    graph = prepare_graph(A0)

    out = jax.block_until_ready(compare_forward(featr3, stmdist, graph, params, HID))
    assert out.shape == (B, N0, HID) and out.dtype == jnp.float32

    x32 = build_features(featr3, stmdist)
    Ws, bs = stack_padded_params(params, HID)

    def rel_err(a, b):
        return float(jnp.max(jnp.abs(a - b)) / (jnp.max(jnp.abs(b)) + 1e-6))

    # Tight correctness gate: plain-JAX mirror of the kernel's algebra/precision.
    mimic = jax.block_until_ready(mimic_reference(x32, graph, Ws, bs, HID))
    tight = rel_err(out, mimic)
    assert tight < 1e-3, f"kernel vs bf16-mimic reference mismatch: {tight}"

    # Sanity vs the module-faithful f32 reference; the slack here is solely the
    # deliberate bf16 matmul-operand cast (accumulation stays in f32).
    ref = jax.block_until_ready(reference_forward(x32, graph, params))
    loose = rel_err(out, ref)
    assert loose < 6e-2, f"kernel vs f32 reference mismatch: {loose}"

    print("KERNEL_OK")
</pallas_src>

<mosaic_0001>
module attributes {stable_mosaic.version = 11 : i64} {
  func.func @_unet_kernel(%arg0: i32, %arg1: memref<64x128xf32, #tpu.memory_space<vmem>>, %arg2: memref<64x64xbf16, #tpu.memory_space<vmem>>, %arg3: memref<32x32xbf16, #tpu.memory_space<vmem>>, %arg4: memref<16x16xbf16, #tpu.memory_space<vmem>>, %arg5: memref<32x64xbf16, #tpu.memory_space<vmem>>, %arg6: memref<16x32xbf16, #tpu.memory_space<vmem>>, %arg7: memref<32x16xbf16, #tpu.memory_space<vmem>>, %arg8: memref<64x32xbf16, #tpu.memory_space<vmem>>, %arg9: memref<16x32x128xbf16, #tpu.memory_space<vmem>>, %arg10: memref<16x1x128xf32, #tpu.memory_space<vmem>>, %arg11: memref<64x128xf32, #tpu.memory_space<vmem>>) attributes {dimension_semantics = [#tpu.dimension_semantics<parallel>], iteration_bounds = array<i64: 1>, scalar_prefetch = 0 : i64, scratch_operands = 0 : i64, tpu.core_type = #tpu.core_type<tc>, window_params = [{transform_indices = @transform_0, window_bounds = array<i64: 64, 128>}, {pipeline_mode = #tpu.pipeline_mode<synchronous>, transform_indices = @transform_1, window_bounds = array<i64: 64, 64>}, {pipeline_mode = #tpu.pipeline_mode<synchronous>, transform_indices = @transform_2, window_bounds = array<i64: 32, 32>}, {pipeline_mode = #tpu.pipeline_mode<synchronous>, transform_indices = @transform_3, window_bounds = array<i64: 16, 16>}, {pipeline_mode = #tpu.pipeline_mode<synchronous>, transform_indices = @transform_4, window_bounds = array<i64: 32, 64>}, {pipeline_mode = #tpu.pipeline_mode<synchronous>, transform_indices = @transform_5, window_bounds = array<i64: 16, 32>}, {pipeline_mode = #tpu.pipeline_mode<synchronous>, transform_indices = @transform_6, window_bounds = array<i64: 32, 16>}, {pipeline_mode = #tpu.pipeline_mode<synchronous>, transform_indices = @transform_7, window_bounds = array<i64: 64, 32>}, {pipeline_mode = #tpu.pipeline_mode<synchronous>, transform_indices = @transform_8, window_bounds = array<i64: 16, 32, 128>}, {pipeline_mode = #tpu.pipeline_mode<synchronous>, transform_indices = @transform_9, window_bounds = array<i64: 16, 1, 128>}, {transform_indices = @transform_10, window_bounds = array<i64: 64, 128>}]} {
    %c0 = arith.constant 0 : index
    %c0_0 = arith.constant 0 : index
    %0 = vector.load %arg2[%c0, %c0_0] : memref<64x64xbf16, #tpu.memory_space<vmem>>, vector<64x64xbf16>
    %c0_1 = arith.constant 0 : index
    %c0_2 = arith.constant 0 : index
    %1 = vector.load %arg3[%c0_1, %c0_2] : memref<32x32xbf16, #tpu.memory_space<vmem>>, vector<32x32xbf16>
    %c0_3 = arith.constant 0 : index
    %c0_4 = arith.constant 0 : index
    %2 = vector.load %arg4[%c0_3, %c0_4] : memref<16x16xbf16, #tpu.memory_space<vmem>>, vector<16x16xbf16>
    %c0_5 = arith.constant 0 : index
    %c0_6 = arith.constant 0 : index
    %3 = vector.load %arg1[%c0_5, %c0_6] : memref<64x128xf32, #tpu.memory_space<vmem>>, vector<64x128xf32>
    %4 = vector.extract_strided_slice %3 {offsets = [0, 0], sizes = [64, 32], strides = [1, 1]} : vector<64x128xf32> to vector<64x32xf32>
    %5 = arith.truncf %4 : vector<64x32xf32> to vector<64x32xbf16>
    %c0_7 = arith.constant 0 : index
    %c0_8 = arith.constant 0 : index
    %c0_9 = arith.constant 0 : index
    %6 = vector.load %arg9[%c0_7, %c0_8, %c0_9] : memref<16x32x128xbf16, #tpu.memory_space<vmem>>, vector<1x32x128xbf16>
    %7 = vector.shape_cast %6 : vector<1x32x128xbf16> to vector<32x128xbf16>
    %cst = arith.constant dense<0.000000e+00> : vector<64x128xf32>
    %8 = tpu.matmul %5, %7, %cst {dimension_numbers = #tpu.dot_dimension_numbers<[1], [0], [0], [1], [0, 0, 1, 1], [], []>} : vector<64x32xbf16>, vector<32x128xbf16>, vector<64x128xf32> -> vector<64x128xf32>
    %9 = arith.truncf %8 : vector<64x128xf32> to vector<64x128xbf16>
    %cst_10 = arith.constant dense<0.000000e+00> : vector<64x128xf32>
    %10 = tpu.matmul %0, %9, %cst_10 {dimension_numbers = #tpu.dot_dimension_numbers<[1], [0], [0], [1], [0, 0, 1, 1], [], []>} : vector<64x64xbf16>, vector<64x128xbf16>, vector<64x128xf32> -> vector<64x128xf32>
    %c0_11 = arith.constant 0 : index
    %c0_12 = arith.constant 0 : index
    %c0_13 = arith.constant 0 : index
    %11 = vector.load %arg10[%c0_11, %c0_12, %c0_13] : memref<16x1x128xf32, #tpu.memory_space<vmem>>, vector<1x1x128xf32>
    %12 = vector.shape_cast %11 : vector<1x1x128xf32> to vector<1x128xf32>
    %13 = vector.broadcast %12 : vector<1x128xf32> to vector<64x128xf32>
    %14 = arith.addf %10, %13 : vector<64x128xf32>
    %15 = vector.extract_strided_slice %14 {offsets = [0, 0], sizes = [64, 32], strides = [1, 1]} : vector<64x128xf32> to vector<64x32xf32>
    %16 = arith.truncf %15 : vector<64x32xf32> to vector<64x32xbf16>
    %c1 = arith.constant 1 : index
    %c0_14 = arith.constant 0 : index
    %c0_15 = arith.constant 0 : index
    %17 = vector.load %arg9[%c1, %c0_14, %c0_15] : memref<16x32x128xbf16, #tpu.memory_space<vmem>>, vector<1x32x128xbf16>
    %18 = vector.shape_cast %17 : vector<1x32x128xbf16> to vector<32x128xbf16>
    %cst_16 = arith.constant dense<0.000000e+00> : vector<64x128xf32>
    %19 = tpu.matmul %16, %18, %cst_16 {dimension_numbers = #tpu.dot_dimension_numbers<[1], [0], [0], [1], [0, 0, 1, 1], [], []>} : vector<64x32xbf16>, vector<32x128xbf16>, vector<64x128xf32> -> vector<64x128xf32>
    %20 = arith.truncf %19 : vector<64x128xf32> to vector<64x128xbf16>
    %cst_17 = arith.constant dense<0.000000e+00> : vector<64x128xf32>
    %21 = tpu.matmul %0, %20, %cst_17 {dimension_numbers = #tpu.dot_dimension_numbers<[1], [0], [0], [1], [0, 0, 1, 1], [], []>} : vector<64x64xbf16>, vector<64x128xbf16>, vector<64x128xf32> -> vector<64x128xf32>
    %c1_18 = arith.constant 1 : index
    %c0_19 = arith.constant 0 : index
    %c0_20 = arith.constant 0 : index
    %22 = vector.load %arg10[%c1_18, %c0_19, %c0_20] : memref<16x1x128xf32, #tpu.memory_space<vmem>>, vector<1x1x128xf32>
    %23 = vector.shape_cast %22 : vector<1x1x128xf32> to vector<1x128xf32>
    %24 = vector.broadcast %23 : vector<1x128xf32> to vector<64x128xf32>
    %25 = arith.addf %21, %24 : vector<64x128xf32>
    %c0_21 = arith.constant 0 : index
    %c0_22 = arith.constant 0 : index
    %26 = vector.load %arg5[%c0_21, %c0_22] : memref<32x64xbf16, #tpu.memory_space<vmem>>, vector<32x64xbf16>
    %27 = vector.extract_strided_slice %25 {offsets = [0, 0], sizes = [64, 32], strides = [1, 1]} : vector<64x128xf32> to vector<64x32xf32>
    %28 = arith.truncf %27 : vector<64x32xf32> to vector<64x32xbf16>
    %c2 = arith.constant 2 : index
    %c0_23 = arith.constant 0 : index
    %c0_24 = arith.constant 0 : index
    %29 = vector.load %arg9[%c2, %c0_23, %c0_24] : memref<16x32x128xbf16, #tpu.memory_space<vmem>>, vector<1x32x128xbf16>
    %30 = vector.shape_cast %29 : vector<1x32x128xbf16> to vector<32x128xbf16>
    %cst_25 = arith.constant dense<0.000000e+00> : vector<64x128xf32>
    %31 = tpu.matmul %28, %30, %cst_25 {dimension_numbers = #tpu.dot_dimension_numbers<[1], [0], [0], [1], [0, 0, 1, 1], [], []>} : vector<64x32xbf16>, vector<32x128xbf16>, vector<64x128xf32> -> vector<64x128xf32>
    %32 = arith.truncf %31 : vector<64x128xf32> to vector<64x128xbf16>
    %cst_26 = arith.constant dense<0.000000e+00> : vector<32x128xf32>
    %33 = tpu.matmul %26, %32, %cst_26 {dimension_numbers = #tpu.dot_dimension_numbers<[1], [0], [0], [1], [0, 0, 1, 1], [], []>} : vector<32x64xbf16>, vector<64x128xbf16>, vector<32x128xf32> -> vector<32x128xf32>
    %c2_27 = arith.constant 2 : index
    %c0_28 = arith.constant 0 : index
    %c0_29 = arith.constant 0 : index
    %34 = vector.load %arg10[%c2_27, %c0_28, %c0_29] : memref<16x1x128xf32, #tpu.memory_space<vmem>>, vector<1x1x128xf32>
    %35 = vector.shape_cast %34 : vector<1x1x128xf32> to vector<1x128xf32>
    %36 = vector.broadcast %35 : vector<1x128xf32> to vector<32x128xf32>
    %37 = arith.addf %33, %36 : vector<32x128xf32>
    %38 = vector.extract_strided_slice %37 {offsets = [0, 0], sizes = [32, 32], strides = [1, 1]} : vector<32x128xf32> to vector<32x32xf32>
    %39 = arith.truncf %38 : vector<32x32xf32> to vector<32x32xbf16>
    %c3 = arith.constant 3 : index
    %c0_30 = arith.constant 0 : index
    %c0_31 = arith.constant 0 : index
    %40 = vector.load %arg9[%c3, %c0_30, %c0_31] : memref<16x32x128xbf16, #tpu.memory_space<vmem>>, vector<1x32x128xbf16>
    %41 = vector.shape_cast %40 : vector<1x32x128xbf16> to vector<32x128xbf16>
    %cst_32 = arith.constant dense<0.000000e+00> : vector<32x128xf32>
    %42 = tpu.matmul %39, %41, %cst_32 {dimension_numbers = #tpu.dot_dimension_numbers<[1], [0], [0], [1], [0, 0, 1, 1], [], []>} : vector<32x32xbf16>, vector<32x128xbf16>, vector<32x128xf32> -> vector<32x128xf32>
    %43 = arith.truncf %42 : vector<32x128xf32> to vector<32x128xbf16>
    %cst_33 = arith.constant dense<0.000000e+00> : vector<32x128xf32>
    %44 = tpu.matmul %1, %43, %cst_33 {dimension_numbers = #tpu.dot_dimension_numbers<[1], [0], [0], [1], [0, 0, 1, 1], [], []>} : vector<32x32xbf16>, vector<32x128xbf16>, vector<32x128xf32> -> vector<32x128xf32>
    %c3_34 = arith.constant 3 : index
    %c0_35 = arith.constant 0 : index
    %c0_36 = arith.constant 0 : index
    %45 = vector.load %arg10[%c3_34, %c0_35, %c0_36] : memref<16x1x128xf32, #tpu.memory_space<vmem>>, vector<1x1x128xf32>
    %46 = vector.shape_cast %45 : vector<1x1x128xf32> to vector<1x128xf32>
    %47 = vector.broadcast %46 : vector<1x128xf32> to vector<32x128xf32>
    %48 = arith.addf %44, %47 : vector<32x128xf32>
    %c0_37 = arith.constant 0 : index
    %c0_38 = arith.constant 0 : index
    %49 = vector.load %arg6[%c0_37, %c0_38] : memref<16x32xbf16, #tpu.memory_space<vmem>>, vector<16x32xbf16>
    %50 = vector.extract_strided_slice %48 {offsets = [0, 0], sizes = [32, 32], strides = [1, 1]} : vector<32x128xf32> to vector<32x32xf32>
    %51 = arith.truncf %50 : vector<32x32xf32> to vector<32x32xbf16>
    %c4 = arith.constant 4 : index
    %c0_39 = arith.constant 0 : index
    %c0_40 = arith.constant 0 : index
    %52 = vector.load %arg9[%c4, %c0_39, %c0_40] : memref<16x32x128xbf16, #tpu.memory_space<vmem>>, vector<1x32x128xbf16>
    %53 = vector.shape_cast %52 : vector<1x32x128xbf16> to vector<32x128xbf16>
    %cst_41 = arith.constant dense<0.000000e+00> : vector<32x128xf32>
    %54 = tpu.matmul %51, %53, %cst_41 {dimension_numbers = #tpu.dot_dimension_numbers<[1], [0], [0], [1], [0, 0, 1, 1], [], []>} : vector<32x32xbf16>, vector<32x128xbf16>, vector<32x128xf32> -> vector<32x128xf32>
    %55 = arith.truncf %54 : vector<32x128xf32> to vector<32x128xbf16>
    %cst_42 = arith.constant dense<0.000000e+00> : vector<16x128xf32>
    %56 = tpu.matmul %49, %55, %cst_42 {dimension_numbers = #tpu.dot_dimension_numbers<[1], [0], [0], [1], [0, 0, 1, 1], [], []>} : vector<16x32xbf16>, vector<32x128xbf16>, vector<16x128xf32> -> vector<16x128xf32>
    %c4_43 = arith.constant 4 : index
    %c0_44 = arith.constant 0 : index
    %c0_45 = arith.constant 0 : index
    %57 = vector.load %arg10[%c4_43, %c0_44, %c0_45] : memref<16x1x128xf32, #tpu.memory_space<vmem>>, vector<1x1x128xf32>
    %58 = vector.shape_cast %57 : vector<1x1x128xf32> to vector<1x128xf32>
    %59 = vector.broadcast %58 : vector<1x128xf32> to vector<16x128xf32>
    %60 = arith.addf %56, %59 : vector<16x128xf32>
    %61 = vector.extract_strided_slice %60 {offsets = [0, 0], sizes = [16, 32], strides = [1, 1]} : vector<16x128xf32> to vector<16x32xf32>
    %62 = arith.truncf %61 : vector<16x32xf32> to vector<16x32xbf16>
    %c5 = arith.constant 5 : index
    %c0_46 = arith.constant 0 : index
    %c0_47 = arith.constant 0 : index
    %63 = vector.load %arg9[%c5, %c0_46, %c0_47] : memref<16x32x128xbf16, #tpu.memory_space<vmem>>, vector<1x32x128xbf16>
    %64 = vector.shape_cast %63 : vector<1x32x128xbf16> to vector<32x128xbf16>
    %cst_48 = arith.constant dense<0.000000e+00> : vector<16x128xf32>
    %65 = tpu.matmul %62, %64, %cst_48 {dimension_numbers = #tpu.dot_dimension_numbers<[1], [0], [0], [1], [0, 0, 1, 1], [], []>} : vector<16x32xbf16>, vector<32x128xbf16>, vector<16x128xf32> -> vector<16x128xf32>
    %66 = arith.truncf %65 : vector<16x128xf32> to vector<16x128xbf16>
    %cst_49 = arith.constant dense<0.000000e+00> : vector<16x128xf32>
    %67 = tpu.matmul %2, %66, %cst_49 {dimension_numbers = #tpu.dot_dimension_numbers<[1], [0], [0], [1], [0, 0, 1, 1], [], []>} : vector<16x16xbf16>, vector<16x128xbf16>, vector<16x128xf32> -> vector<16x128xf32>
    %c5_50 = arith.constant 5 : index
    %c0_51 = arith.constant 0 : index
    %c0_52 = arith.constant 0 : index
    %68 = vector.load %arg10[%c5_50, %c0_51, %c0_52] : memref<16x1x128xf32, #tpu.memory_space<vmem>>, vector<1x1x128xf32>
    %69 = vector.shape_cast %68 : vector<1x1x128xf32> to vector<1x128xf32>
    %70 = vector.broadcast %69 : vector<1x128xf32> to vector<16x128xf32>
    %71 = arith.addf %67, %70 : vector<16x128xf32>
    %c0_53 = arith.constant 0 : index
    %c0_54 = arith.constant 0 : index
    %72 = vector.load %arg7[%c0_53, %c0_54] : memref<32x16xbf16, #tpu.memory_space<vmem>>, vector<32x16xbf16>
    %73 = vector.extract_strided_slice %71 {offsets = [0, 0], sizes = [16, 32], strides = [1, 1]} : vector<16x128xf32> to vector<16x32xf32>
    %74 = arith.truncf %73 : vector<16x32xf32> to vector<16x32xbf16>
    %c6 = arith.constant 6 : index
    %c0_55 = arith.constant 0 : index
    %c0_56 = arith.constant 0 : index
    %75 = vector.load %arg9[%c6, %c0_55, %c0_56] : memref<16x32x128xbf16, #tpu.memory_space<vmem>>, vector<1x32x128xbf16>
    %76 = vector.shape_cast %75 : vector<1x32x128xbf16> to vector<32x128xbf16>
    %cst_57 = arith.constant dense<0.000000e+00> : vector<16x128xf32>
    %77 = tpu.matmul %74, %76, %cst_57 {dimension_numbers = #tpu.dot_dimension_numbers<[1], [0], [0], [1], [0, 0, 1, 1], [], []>} : vector<16x32xbf16>, vector<32x128xbf16>, vector<16x128xf32> -> vector<16x128xf32>
    %78 = arith.truncf %77 : vector<16x128xf32> to vector<16x128xbf16>
    %cst_58 = arith.constant dense<0.000000e+00> : vector<32x128xf32>
    %79 = tpu.matmul %72, %78, %cst_58 {dimension_numbers = #tpu.dot_dimension_numbers<[1], [0], [0], [1], [0, 0, 1, 1], [], []>} : vector<32x16xbf16>, vector<16x128xbf16>, vector<32x128xf32> -> vector<32x128xf32>
    %80 = vector.extract_strided_slice %48 {offsets = [0, 0], sizes = [32, 32], strides = [1, 1]} : vector<32x128xf32> to vector<32x32xf32>
    %81 = arith.truncf %80 : vector<32x32xf32> to vector<32x32xbf16>
    %c7 = arith.constant 7 : index
    %c0_59 = arith.constant 0 : index
    %c0_60 = arith.constant 0 : index
    %82 = vector.load %arg9[%c7, %c0_59, %c0_60] : memref<16x32x128xbf16, #tpu.memory_space<vmem>>, vector<1x32x128xbf16>
    %83 = vector.shape_cast %82 : vector<1x32x128xbf16> to vector<32x128xbf16>
    %cst_61 = arith.constant dense<0.000000e+00> : vector<32x128xf32>
    %84 = tpu.matmul %81, %83, %cst_61 {dimension_numbers = #tpu.dot_dimension_numbers<[1], [0], [0], [1], [0, 0, 1, 1], [], []>} : vector<32x32xbf16>, vector<32x128xbf16>, vector<32x128xf32> -> vector<32x128xf32>
    %85 = arith.truncf %84 : vector<32x128xf32> to vector<32x128xbf16>
    %cst_62 = arith.constant dense<0.000000e+00> : vector<32x128xf32>
    %86 = tpu.matmul %1, %85, %cst_62 {dimension_numbers = #tpu.dot_dimension_numbers<[1], [0], [0], [1], [0, 0, 1, 1], [], []>} : vector<32x32xbf16>, vector<32x128xbf16>, vector<32x128xf32> -> vector<32x128xf32>
    %87 = arith.addf %79, %86 : vector<32x128xf32>
    %c6_63 = arith.constant 6 : index
    %c0_64 = arith.constant 0 : index
    %c0_65 = arith.constant 0 : index
    %88 = vector.load %arg10[%c6_63, %c0_64, %c0_65] : memref<16x1x128xf32, #tpu.memory_space<vmem>>, vector<1x1x128xf32>
    %89 = vector.shape_cast %88 : vector<1x1x128xf32> to vector<1x128xf32>
    %90 = vector.broadcast %89 : vector<1x128xf32> to vector<32x128xf32>
    %91 = arith.addf %87, %90 : vector<32x128xf32>
    %92 = vector.extract_strided_slice %91 {offsets = [0, 0], sizes = [32, 32], strides = [1, 1]} : vector<32x128xf32> to vector<32x32xf32>
    %93 = arith.truncf %92 : vector<32x32xf32> to vector<32x32xbf16>
    %c8 = arith.constant 8 : index
    %c0_66 = arith.constant 0 : index
    %c0_67 = arith.constant 0 : index
    %94 = vector.load %arg9[%c8, %c0_66, %c0_67] : memref<16x32x128xbf16, #tpu.memory_space<vmem>>, vector<1x32x128xbf16>
    %95 = vector.shape_cast %94 : vector<1x32x128xbf16> to vector<32x128xbf16>
    %cst_68 = arith.constant dense<0.000000e+00> : vector<32x128xf32>
    %96 = tpu.matmul %93, %95, %cst_68 {dimension_numbers = #tpu.dot_dimension_numbers<[1], [0], [0], [1], [0, 0, 1, 1], [], []>} : vector<32x32xbf16>, vector<32x128xbf16>, vector<32x128xf32> -> vector<32x128xf32>
    %97 = arith.truncf %96 : vector<32x128xf32> to vector<32x128xbf16>
    %cst_69 = arith.constant dense<0.000000e+00> : vector<32x128xf32>
    %98 = tpu.matmul %1, %97, %cst_69 {dimension_numbers = #tpu.dot_dimension_numbers<[1], [0], [0], [1], [0, 0, 1, 1], [], []>} : vector<32x32xbf16>, vector<32x128xbf16>, vector<32x128xf32> -> vector<32x128xf32>
    %c8_70 = arith.constant 8 : index
    %c0_71 = arith.constant 0 : index
    %c0_72 = arith.constant 0 : index
    %99 = vector.load %arg10[%c8_70, %c0_71, %c0_72] : memref<16x1x128xf32, #tpu.memory_space<vmem>>, vector<1x1x128xf32>
    %100 = vector.shape_cast %99 : vector<1x1x128xf32> to vector<1x128xf32>
    %101 = vector.broadcast %100 : vector<1x128xf32> to vector<32x128xf32>
    %102 = arith.addf %98, %101 : vector<32x128xf32>
    %103 = vector.extract_strided_slice %102 {offsets = [0, 0], sizes = [32, 32], strides = [1, 1]} : vector<32x128xf32> to vector<32x32xf32>
    %104 = arith.truncf %103 : vector<32x32xf32> to vector<32x32xbf16>
    %c9 = arith.constant 9 : index
    %c0_73 = arith.constant 0 : index
    %c0_74 = arith.constant 0 : index
    %105 = vector.load %arg9[%c9, %c0_73, %c0_74] : memref<16x32x128xbf16, #tpu.memory_space<vmem>>, vector<1x32x128xbf16>
    %106 = vector.shape_cast %105 : vector<1x32x128xbf16> to vector<32x128xbf16>
    %cst_75 = arith.constant dense<0.000000e+00> : vector<32x128xf32>
    %107 = tpu.matmul %104, %106, %cst_75 {dimension_numbers = #tpu.dot_dimension_numbers<[1], [0], [0], [1], [0, 0, 1, 1], [], []>} : vector<32x32xbf16>, vector<32x128xbf16>, vector<32x128xf32> -> vector<32x128xf32>
    %108 = arith.truncf %107 : vector<32x128xf32> to vector<32x128xbf16>
    %cst_76 = arith.constant dense<0.000000e+00> : vector<32x128xf32>
    %109 = tpu.matmul %1, %108, %cst_76 {dimension_numbers = #tpu.dot_dimension_numbers<[1], [0], [0], [1], [0, 0, 1, 1], [], []>} : vector<32x32xbf16>, vector<32x128xbf16>, vector<32x128xf32> -> vector<32x128xf32>
    %c9_77 = arith.constant 9 : index
    %c0_78 = arith.constant 0 : index
    %c0_79 = arith.constant 0 : index
    %110 = vector.load %arg10[%c9_77, %c0_78, %c0_79] : memref<16x1x128xf32, #tpu.memory_space<vmem>>, vector<1x1x128xf32>
    %111 = vector.shape_cast %110 : vector<1x1x128xf32> to vector<1x128xf32>
    %112 = vector.broadcast %111 : vector<1x128xf32> to vector<32x128xf32>
    %113 = arith.addf %109, %112 : vector<32x128xf32>
    %114 = vector.extract_strided_slice %113 {offsets = [0, 0], sizes = [32, 32], strides = [1, 1]} : vector<32x128xf32> to vector<32x32xf32>
    %115 = arith.truncf %114 : vector<32x32xf32> to vector<32x32xbf16>
    %c10 = arith.constant 10 : index
    %c0_80 = arith.constant 0 : index
    %c0_81 = arith.constant 0 : index
    %116 = vector.load %arg9[%c10, %c0_80, %c0_81] : memref<16x32x128xbf16, #tpu.memory_space<vmem>>, vector<1x32x128xbf16>
    %117 = vector.shape_cast %116 : vector<1x32x128xbf16> to vector<32x128xbf16>
    %cst_82 = arith.constant dense<0.000000e+00> : vector<32x128xf32>
    %118 = tpu.matmul %115, %117, %cst_82 {dimension_numbers = #tpu.dot_dimension_numbers<[1], [0], [0], [1], [0, 0, 1, 1], [], []>} : vector<32x32xbf16>, vector<32x128xbf16>, vector<32x128xf32> -> vector<32x128xf32>
    %119 = arith.truncf %118 : vector<32x128xf32> to vector<32x128xbf16>
    %cst_83 = arith.constant dense<0.000000e+00> : vector<32x128xf32>
    %120 = tpu.matmul %1, %119, %cst_83 {dimension_numbers = #tpu.dot_dimension_numbers<[1], [0], [0], [1], [0, 0, 1, 1], [], []>} : vector<32x32xbf16>, vector<32x128xbf16>, vector<32x128xf32> -> vector<32x128xf32>
    %c10_84 = arith.constant 10 : index
    %c0_85 = arith.constant 0 : index
    %c0_86 = arith.constant 0 : index
    %121 = vector.load %arg10[%c10_84, %c0_85, %c0_86] : memref<16x1x128xf32, #tpu.memory_space<vmem>>, vector<1x1x128xf32>
    %122 = vector.shape_cast %121 : vector<1x1x128xf32> to vector<1x128xf32>
    %123 = vector.broadcast %122 : vector<1x128xf32> to vector<32x128xf32>
    %124 = arith.addf %120, %123 : vector<32x128xf32>
    %c0_87 = arith.constant 0 : index
    %c0_88 = arith.constant 0 : index
    %125 = vector.load %arg8[%c0_87, %c0_88] : memref<64x32xbf16, #tpu.memory_space<vmem>>, vector<64x32xbf16>
    %126 = vector.extract_strided_slice %124 {offsets = [0, 0], sizes = [32, 32], strides = [1, 1]} : vector<32x128xf32> to vector<32x32xf32>
    %127 = arith.truncf %126 : vector<32x32xf32> to vector<32x32xbf16>
    %c11 = arith.constant 11 : index
    %c0_89 = arith.constant 0 : index
    %c0_90 = arith.constant 0 : index
    %128 = vector.load %arg9[%c11, %c0_89, %c0_90] : memref<16x32x128xbf16, #tpu.memory_space<vmem>>, vector<1x32x128xbf16>
    %129 = vector.shape_cast %128 : vector<1x32x128xbf16> to vector<32x128xbf16>
    %cst_91 = arith.constant dense<0.000000e+00> : vector<32x128xf32>
    %130 = tpu.matmul %127, %129, %cst_91 {dimension_numbers = #tpu.dot_dimension_numbers<[1], [0], [0], [1], [0, 0, 1, 1], [], []>} : vector<32x32xbf16>, vector<32x128xbf16>, vector<32x128xf32> -> vector<32x128xf32>
    %131 = arith.truncf %130 : vector<32x128xf32> to vector<32x128xbf16>
    %cst_92 = arith.constant dense<0.000000e+00> : vector<64x128xf32>
    %132 = tpu.matmul %125, %131, %cst_92 {dimension_numbers = #tpu.dot_dimension_numbers<[1], [0], [0], [1], [0, 0, 1, 1], [], []>} : vector<64x32xbf16>, vector<32x128xbf16>, vector<64x128xf32> -> vector<64x128xf32>
    %133 = vector.extract_strided_slice %25 {offsets = [0, 0], sizes = [64, 32], strides = [1, 1]} : vector<64x128xf32> to vector<64x32xf32>
    %134 = arith.truncf %133 : vector<64x32xf32> to vector<64x32xbf16>
    %c12 = arith.constant 12 : index
    %c0_93 = arith.constant 0 : index
    %c0_94 = arith.constant 0 : index
    %135 = vector.load %arg9[%c12, %c0_93, %c0_94] : memref<16x32x128xbf16, #tpu.memory_space<vmem>>, vector<1x32x128xbf16>
    %136 = vector.shape_cast %135 : vector<1x32x128xbf16> to vector<32x128xbf16>
    %cst_95 = arith.constant dense<0.000000e+00> : vector<64x128xf32>
    %137 = tpu.matmul %134, %136, %cst_95 {dimension_numbers = #tpu.dot_dimension_numbers<[1], [0], [0], [1], [0, 0, 1, 1], [], []>} : vector<64x32xbf16>, vector<32x128xbf16>, vector<64x128xf32> -> vector<64x128xf32>
    %138 = arith.truncf %137 : vector<64x128xf32> to vector<64x128xbf16>
    %cst_96 = arith.constant dense<0.000000e+00> : vector<64x128xf32>
    %139 = tpu.matmul %0, %138, %cst_96 {dimension_numbers = #tpu.dot_dimension_numbers<[1], [0], [0], [1], [0, 0, 1, 1], [], []>} : vector<64x64xbf16>, vector<64x128xbf16>, vector<64x128xf32> -> vector<64x128xf32>
    %140 = arith.addf %132, %139 : vector<64x128xf32>
    %c11_97 = arith.constant 11 : index
    %c0_98 = arith.constant 0 : index
    %c0_99 = arith.constant 0 : index
    %141 = vector.load %arg10[%c11_97, %c0_98, %c0_99] : memref<16x1x128xf32, #tpu.memory_space<vmem>>, vector<1x1x128xf32>
    %142 = vector.shape_cast %141 : vector<1x1x128xf32> to vector<1x128xf32>
    %143 = vector.broadcast %142 : vector<1x128xf32> to vector<64x128xf32>
    %144 = arith.addf %140, %143 : vector<64x128xf32>
    %145 = vector.extract_strided_slice %144 {offsets = [0, 0], sizes = [64, 32], strides = [1, 1]} : vector<64x128xf32> to vector<64x32xf32>
    %146 = arith.truncf %145 : vector<64x32xf32> to vector<64x32xbf16>
    %c13 = arith.constant 13 : index
    %c0_100 = arith.constant 0 : index
    %c0_101 = arith.constant 0 : index
    %147 = vector.load %arg9[%c13, %c0_100, %c0_101] : memref<16x32x128xbf16, #tpu.memory_space<vmem>>, vector<1x32x128xbf16>
    %148 = vector.shape_cast %147 : vector<1x32x128xbf16> to vector<32x128xbf16>
    %cst_102 = arith.constant dense<0.000000e+00> : vector<64x128xf32>
    %149 = tpu.matmul %146, %148, %cst_102 {dimension_numbers = #tpu.dot_dimension_numbers<[1], [0], [0], [1], [0, 0, 1, 1], [], []>} : vector<64x32xbf16>, vector<32x128xbf16>, vector<64x128xf32> -> vector<64x128xf32>
    %150 = arith.truncf %149 : vector<64x128xf32> to vector<64x128xbf16>
    %cst_103 = arith.constant dense<0.000000e+00> : vector<64x128xf32>
    %151 = tpu.matmul %0, %150, %cst_103 {dimension_numbers = #tpu.dot_dimension_numbers<[1], [0], [0], [1], [0, 0, 1, 1], [], []>} : vector<64x64xbf16>, vector<64x128xbf16>, vector<64x128xf32> -> vector<64x128xf32>
    %c13_104 = arith.constant 13 : index
    %c0_105 = arith.constant 0 : index
    %c0_106 = arith.constant 0 : index
    %152 = vector.load %arg10[%c13_104, %c0_105, %c0_106] : memref<16x1x128xf32, #tpu.memory_space<vmem>>, vector<1x1x128xf32>
    %153 = vector.shape_cast %152 : vector<1x1x128xf32> to vector<1x128xf32>
    %154 = vector.broadcast %153 : vector<1x128xf32> to vector<64x128xf32>
    %155 = arith.addf %151, %154 : vector<64x128xf32>
    %156 = vector.extract_strided_slice %155 {offsets = [0, 0], sizes = [64, 32], strides = [1, 1]} : vector<64x128xf32> to vector<64x32xf32>
    %157 = arith.truncf %156 : vector<64x32xf32> to vector<64x32xbf16>
    %c14 = arith.constant 14 : index
    %c0_107 = arith.constant 0 : index
    %c0_108 = arith.constant 0 : index
    %158 = vector.load %arg9[%c14, %c0_107, %c0_108] : memref<16x32x128xbf16, #tpu.memory_space<vmem>>, vector<1x32x128xbf16>
    %159 = vector.shape_cast %158 : vector<1x32x128xbf16> to vector<32x128xbf16>
    %cst_109 = arith.constant dense<0.000000e+00> : vector<64x128xf32>
    %160 = tpu.matmul %157, %159, %cst_109 {dimension_numbers = #tpu.dot_dimension_numbers<[1], [0], [0], [1], [0, 0, 1, 1], [], []>} : vector<64x32xbf16>, vector<32x128xbf16>, vector<64x128xf32> -> vector<64x128xf32>
    %161 = arith.truncf %160 : vector<64x128xf32> to vector<64x128xbf16>
    %cst_110 = arith.constant dense<0.000000e+00> : vector<64x128xf32>
    %162 = tpu.matmul %0, %161, %cst_110 {dimension_numbers = #tpu.dot_dimension_numbers<[1], [0], [0], [1], [0, 0, 1, 1], [], []>} : vector<64x64xbf16>, vector<64x128xbf16>, vector<64x128xf32> -> vector<64x128xf32>
    %c14_111 = arith.constant 14 : index
    %c0_112 = arith.constant 0 : index
    %c0_113 = arith.constant 0 : index
    %163 = vector.load %arg10[%c14_111, %c0_112, %c0_113] : memref<16x1x128xf32, #tpu.memory_space<vmem>>, vector<1x1x128xf32>
    %164 = vector.shape_cast %163 : vector<1x1x128xf32> to vector<1x128xf32>
    %165 = vector.broadcast %164 : vector<1x128xf32> to vector<64x128xf32>
    %166 = arith.addf %162, %165 : vector<64x128xf32>
    %167 = vector.extract_strided_slice %166 {offsets = [0, 0], sizes = [64, 32], strides = [1, 1]} : vector<64x128xf32> to vector<64x32xf32>
    %168 = arith.truncf %167 : vector<64x32xf32> to vector<64x32xbf16>
    %c15 = arith.constant 15 : index
    %c0_114 = arith.constant 0 : index
    %c0_115 = arith.constant 0 : index
    %169 = vector.load %arg9[%c15, %c0_114, %c0_115] : memref<16x32x128xbf16, #tpu.memory_space<vmem>>, vector<1x32x128xbf16>
    %170 = vector.shape_cast %169 : vector<1x32x128xbf16> to vector<32x128xbf16>
    %cst_116 = arith.constant dense<0.000000e+00> : vector<64x128xf32>
    %171 = tpu.matmul %168, %170, %cst_116 {dimension_numbers = #tpu.dot_dimension_numbers<[1], [0], [0], [1], [0, 0, 1, 1], [], []>} : vector<64x32xbf16>, vector<32x128xbf16>, vector<64x128xf32> -> vector<64x128xf32>
    %172 = arith.truncf %171 : vector<64x128xf32> to vector<64x128xbf16>
    %cst_117 = arith.constant dense<0.000000e+00> : vector<64x128xf32>
    %173 = tpu.matmul %0, %172, %cst_117 {dimension_numbers = #tpu.dot_dimension_numbers<[1], [0], [0], [1], [0, 0, 1, 1], [], []>} : vector<64x64xbf16>, vector<64x128xbf16>, vector<64x128xf32> -> vector<64x128xf32>
    %c15_118 = arith.constant 15 : index
    %c0_119 = arith.constant 0 : index
    %c0_120 = arith.constant 0 : index
    %174 = vector.load %arg10[%c15_118, %c0_119, %c0_120] : memref<16x1x128xf32, #tpu.memory_space<vmem>>, vector<1x1x128xf32>
    %175 = vector.shape_cast %174 : vector<1x1x128xf32> to vector<1x128xf32>
    %176 = vector.broadcast %175 : vector<1x128xf32> to vector<64x128xf32>
    %177 = arith.addf %173, %176 : vector<64x128xf32>
    %c0_121 = arith.constant 0 : index
    %c0_122 = arith.constant 0 : index
    %178 = vector.load %arg11[%c0_121, %c0_122] : memref<64x128xf32, #tpu.memory_space<vmem>>, vector<64x128xf32>
    tpu.vector_store %arg11[%c0_121, %c0_122], %177 {strides = array<i32>} : memref<64x128xf32, #tpu.memory_space<vmem>>, vector<64x128xf32>,
    return
  }
  func.func @transform_0(%arg0: i32) -> (i32, i32) {
    %c0_i32 = arith.constant 0 : i32
    %c0_i32_0 = arith.constant 0 : i32
    return %arg0, %c0_i32 : i32, i32
  }
  func.func @transform_1(%arg0: i32) -> (i32, i32) {
    %c0_i32 = arith.constant 0 : i32
    %c0_i32_0 = arith.constant 0 : i32
    %c0_i32_1 = arith.constant 0 : i32
    return %c0_i32, %c0_i32_0 : i32, i32
  }
  func.func @transform_2(%arg0: i32) -> (i32, i32) {
    %c0_i32 = arith.constant 0 : i32
    %c0_i32_0 = arith.constant 0 : i32
    %c0_i32_1 = arith.constant 0 : i32
    return %c0_i32, %c0_i32_0 : i32, i32
  }
  func.func @transform_3(%arg0: i32) -> (i32, i32) {
    %c0_i32 = arith.constant 0 : i32
    %c0_i32_0 = arith.constant 0 : i32
    %c0_i32_1 = arith.constant 0 : i32
    return %c0_i32, %c0_i32_0 : i32, i32
  }
  func.func @transform_4(%arg0: i32) -> (i32, i32) {
    %c0_i32 = arith.constant 0 : i32
    %c0_i32_0 = arith.constant 0 : i32
    %c0_i32_1 = arith.constant 0 : i32
    return %c0_i32, %c0_i32_0 : i32, i32
  }
  func.func @transform_5(%arg0: i32) -> (i32, i32) {
    %c0_i32 = arith.constant 0 : i32
    %c0_i32_0 = arith.constant 0 : i32
    %c0_i32_1 = arith.constant 0 : i32
    return %c0_i32, %c0_i32_0 : i32, i32
  }
  func.func @transform_6(%arg0: i32) -> (i32, i32) {
    %c0_i32 = arith.constant 0 : i32
    %c0_i32_0 = arith.constant 0 : i32
    %c0_i32_1 = arith.constant 0 : i32
    return %c0_i32, %c0_i32_0 : i32, i32
  }
  func.func @transform_7(%arg0: i32) -> (i32, i32) {
    %c0_i32 = arith.constant 0 : i32
    %c0_i32_0 = arith.constant 0 : i32
    %c0_i32_1 = arith.constant 0 : i32
    return %c0_i32, %c0_i32_0 : i32, i32
  }
  func.func @transform_8(%arg0: i32) -> (i32, i32, i32) {
    %c0_i32 = arith.constant 0 : i32
    %c0_i32_0 = arith.constant 0 : i32
    %c0_i32_1 = arith.constant 0 : i32
    %c0_i32_2 = arith.constant 0 : i32
    return %c0_i32, %c0_i32_0, %c0_i32_1 : i32, i32, i32
  }
  func.func @transform_9(%arg0: i32) -> (i32, i32, i32) {
    %c0_i32 = arith.constant 0 : i32
    %c0_i32_0 = arith.constant 0 : i32
    %c0_i32_1 = arith.constant 0 : i32
    %c0_i32_2 = arith.constant 0 : i32
    return %c0_i32, %c0_i32_0, %c0_i32_1 : i32, i32, i32
  }
  func.func @transform_10(%arg0: i32) -> (i32, i32) {
    %c0_i32 = arith.constant 0 : i32
    %c0_i32_0 = arith.constant 0 : i32
    return %arg0, %c0_i32 : i32, i32
  }
}

</mosaic_0001>

<llo_original>
// kernel: tpu_custom_call.1
$region0: #{tpu_custom_call.1}
  #allocation0 [shape = 'u32[]', space=smem, size = 0x4, offset = 0x4, fixed_abs, tag = 'smem constant byte address 0x4 - core index']
  #allocation1 [shape = 'u32[144,128]{1,0:T(1,128)}', space=vmem, size = 0x12000, scoped, tag = 'internal scratch']
  %s0 = inlined_call_operand.vmem [shape: f32[64,128], index: 0, kind: input, shape index: {}]
  %s1 = inlined_call_operand.hbm [shape: bf16[64,64], index: 1, kind: input, shape index: {}]
  %s2 = inlined_call_operand.hbm [shape: bf16[32,32], index: 2, kind: input, shape index: {}]
  %s3 = inlined_call_operand.hbm [shape: bf16[16,16], index: 3, kind: input, shape index: {}]
  %s4 = inlined_call_operand.hbm [shape: bf16[32,64], index: 4, kind: input, shape index: {}]
  %s5 = inlined_call_operand.hbm [shape: bf16[16,32], index: 5, kind: input, shape index: {}]
  %s6 = inlined_call_operand.vmem [shape: bf16[32,16], index: 6, kind: input, shape index: {}]
  %s7 = inlined_call_operand.vmem [shape: bf16[64,32], index: 7, kind: input, shape index: {}]
  %s8 = inlined_call_operand.hbm [shape: bf16[16,32,128], index: 8, kind: input, shape index: {}]
  %s9 = inlined_call_operand.hbm [shape: f32[16,1,128], index: 9, kind: input, shape index: {}]
  %s10 = inlined_call_operand.hbm [shape: f32[64,128], index: 10, kind: output, shape index: {}]
  %s11 = sld [smem:[#allocation0]]
  $region78: #{tpu_custom_call.1} parent=0
    _
  %s13 = ssub.s32 1, %s11
  %s14 = scalar_select 0, %s13, %s11
  $region1: #{tpu_custom_call.1} parent=0
    #allocation2 [shape = 'u8[16384]{0}', space=vmem, size = 0x4000, scoped, tag = 'input window, operand 1, single buffered']
    #allocation3 [shape = 's32[1]{0}', space=sflag, size = 0x4, scoped, tag = 'scoped memory for tpu_custom_call.1']
    #allocation4 [shape = 's32[1]{0}', space=sflag, size = 0x4, scoped, tag = 'scoped memory for tpu_custom_call.1']
    #allocation5 [shape = 'u8[8192]{0}', space=vmem, size = 0x2000, scoped, tag = 'input window, operand 2, single buffered']
    #allocation6 [shape = 's32[1]{0}', space=sflag, size = 0x4, scoped, tag = 'scoped memory for tpu_custom_call.1']
    #allocation7 [shape = 'u8[4096]{0}', space=vmem, size = 0x1000, scoped, tag = 'input window, operand 3, single buffered']
    #allocation8 [shape = 'u8[8192]{0}', space=vmem, size = 0x2000, scoped, tag = 'input window, operand 4, single buffered']
    #allocation9 [shape = 's32[1]{0}', space=sflag, size = 0x4, scoped, tag = 'scoped memory for tpu_custom_call.1']
    #allocation10 [shape = 'u8[4096]{0}', space=vmem, size = 0x1000, scoped, tag = 'input window, operand 5, single buffered']
    #allocation11 [shape = 'u8[131072]{0}', space=vmem, size = 0x20000, scoped, tag = 'input window, operand 8, single buffered']
    #allocation12 [shape = 's32[1]{0}', space=sflag, size = 0x4, scoped, tag = 'scoped memory for tpu_custom_call.1']
    #allocation13 [shape = 'u8[8192]{0}', space=vmem, size = 0x2000, scoped, tag = 'input window, operand 9, single buffered']
    #allocation14 [shape = 'u8[32768]{0}', space=vmem, size = 0x8000, scoped, tag = 'output window, operand 0, single buffered']
    %15 = vsyncpa [#allocation3], 0
    %16 = vsyncpa [#allocation6], 0
    %17 = vsyncpa [#allocation9], 0
    %18 = vsyncpa [#allocation12], 0
    %19 = vsyncpa [#allocation4], 0
    // Predicated region
    $region2: #{tpu_custom_call.1} parent=1 // pred_check
      _
    $region3: #{tpu_custom_call.1} parent=1 // pred_check_branch
      %21 = sbr.rel (0) target = $region5
    $region4: #{tpu_custom_call.1} parent=1 // pred_region
      _
    $region5: #{tpu_custom_call.1} parent=1 // pred_fallthru
      _
    // Predicated region
    $region6: #{tpu_custom_call.1} parent=1 // pred_check
      _
    $region7: #{tpu_custom_call.1} parent=1 // pred_check_branch
      %23 = sbr.rel (0) target = $region9
    $region8: #{tpu_custom_call.1} parent=1 // pred_region
      %s25 = ssub.s32 512, 512
      %26 = vsyncadd [#allocation3], %s25
      %s27 = sshll.u32 [#allocation2], 4
      %s28 = int_to_ptr.vmem [resolvable:$true] %s27
      %33 = dma.hbm_to_vmem [thread:$0]  %s1, 512, %s28, [#allocation3], 64, 64, 4
    $region9: #{tpu_custom_call.1} parent=1 // pred_fallthru
      _
    // Predicated region
    $region10: #{tpu_custom_call.1} parent=1 // pred_check
      _
    $region11: #{tpu_custom_call.1} parent=1 // pred_check_branch
      %35 = sbr.rel (0) target = $region13
    $region12: #{tpu_custom_call.1} parent=1 // pred_region
      %s37 = ssub.s32 256, 256
      %38 = vsyncadd [#allocation6], %s37
      %s39 = sshll.u32 [#allocation5], 4
      %s40 = int_to_ptr.vmem [resolvable:$true] %s39
      %45 = dma.hbm_to_vmem [thread:$0]  %s2, 256, %s40, [#allocation6], 64, 64, 4
    $region13: #{tpu_custom_call.1} parent=1 // pred_fallthru
      _
    // Predicated region
    $region14: #{tpu_custom_call.1} parent=1 // pred_check
      _
    $region15: #{tpu_custom_call.1} parent=1 // pred_check_branch
      %47 = sbr.rel (0) target = $region17
    $region16: #{tpu_custom_call.1} parent=1 // pred_region
      %s49 = ssub.s32 128, 128
      %50 = vsyncadd [#allocation6], %s49
      %s51 = sshll.u32 [#allocation7], 4
      %s52 = int_to_ptr.vmem [resolvable:$true] %s51
      %57 = dma.hbm_to_vmem [thread:$0]  %s3, 128, %s52, [#allocation6], 64, 64, 4
    $region17: #{tpu_custom_call.1} parent=1 // pred_fallthru
      _
    // Predicated region
    $region18: #{tpu_custom_call.1} parent=1 // pred_check
      _
    $region19: #{tpu_custom_call.1} parent=1 // pred_check_branch
      %59 = sbr.rel (0) target = $region21
    $region20: #{tpu_custom_call.1} parent=1 // pred_region
      %s61 = ssub.s32 256, 256
      %62 = vsyncadd [#allocation9], %s61
      %s63 = sshll.u32 [#allocation8], 4
      %s64 = int_to_ptr.vmem [resolvable:$true] %s63
      %69 = dma.hbm_to_vmem [thread:$0]  %s4, 256, %s64, [#allocation9], 64, 64, 4
    $region21: #{tpu_custom_call.1} parent=1 // pred_fallthru
      _
    // Predicated region
    $region22: #{tpu_custom_call.1} parent=1 // pred_check
      _
    $region23: #{tpu_custom_call.1} parent=1 // pred_check_branch
      %71 = sbr.rel (0) target = $region25
    $region24: #{tpu_custom_call.1} parent=1 // pred_region
      %s73 = ssub.s32 128, 128
      %74 = vsyncadd [#allocation9], %s73
      %s75 = sshll.u32 [#allocation10], 4
      %s76 = int_to_ptr.vmem [resolvable:$true] %s75
      %81 = dma.hbm_to_vmem [thread:$0]  %s5, 128, %s76, [#allocation9], 64, 64, 4
    $region25: #{tpu_custom_call.1} parent=1 // pred_fallthru
      _
    // Predicated region
    $region26: #{tpu_custom_call.1} parent=1 // pred_check
      _
    $region27: #{tpu_custom_call.1} parent=1 // pred_check_branch
      %83 = sbr.rel (0) target = $region29
    $region28: #{tpu_custom_call.1} parent=1 // pred_region
      _
    $region29: #{tpu_custom_call.1} parent=1 // pred_fallthru
      _
    // Predicated region
    $region30: #{tpu_custom_call.1} parent=1 // pred_check
      _
    $region31: #{tpu_custom_call.1} parent=1 // pred_check_branch
      %85 = sbr.rel (0) target = $region33
    $region32: #{tpu_custom_call.1} parent=1 // pred_region
      _
    $region33: #{tpu_custom_call.1} parent=1 // pred_fallthru
      _
    // Predicated region
    $region34: #{tpu_custom_call.1} parent=1 // pred_check
      _
    $region35: #{tpu_custom_call.1} parent=1 // pred_check_branch
      %87 = sbr.rel (0) target = $region37
    $region36: #{tpu_custom_call.1} parent=1 // pred_region
      %s89 = ssub.s32 4096, 4096
      %90 = vsyncadd [#allocation12], %s89
      %s91 = sshll.u32 [#allocation11], 4
      %s92 = int_to_ptr.vmem [resolvable:$true] %s91
      %97 = dma.hbm_to_vmem [thread:$0]  %s8, 4096, %s92, [#allocation12], 64, 64, 4
    $region37: #{tpu_custom_call.1} parent=1 // pred_fallthru
      _
    // Predicated region
    $region38: #{tpu_custom_call.1} parent=1 // pred_check
      _
    $region39: #{tpu_custom_call.1} parent=1 // pred_check_branch
      %99 = sbr.rel (0) target = $region41
    $region40: #{tpu_custom_call.1} parent=1 // pred_region
      %s101 = ssub.s32 256, 256
      %102 = vsyncadd [#allocation12], %s101
      %s103 = sshll.u32 [#allocation13], 4
      %s104 = int_to_ptr.vmem [resolvable:$true] %s103
      %109 = dma.hbm_to_vmem [thread:$0]  %s9, 256, %s104, [#allocation12], 16, 16, 1
    $region41: #{tpu_custom_call.1} parent=1 // pred_fallthru
      _
    // Predicated region
    $region42: #{tpu_custom_call.1} parent=1 // pred_check
      _
    $region43: #{tpu_custom_call.1} parent=1 // pred_check_branch
      %111 = sbr.rel (0) target = $region45
    $region44: #{tpu_custom_call.1} parent=1 // pred_region
      %112 = dma.done [#allocation3], 512
    $region45: #{tpu_custom_call.1} parent=1 // pred_fallthru
      _
    // Predicated region
    $region46: #{tpu_custom_call.1} parent=1 // pred_check
      _
    $region47: #{tpu_custom_call.1} parent=1 // pred_check_branch
      %114 = sbr.rel (0) target = $region49
    $region48: #{tpu_custom_call.1} parent=1 // pred_region
      %115 = dma.done [#allocation6], 256
    $region49: #{tpu_custom_call.1} parent=1 // pred_fallthru
      _
    // Predicated region
    $region50: #{tpu_custom_call.1} parent=1 // pred_check
      _
    $region51: #{tpu_custom_call.1} parent=1 // pred_check_branch
      %117 = sbr.rel (0) target = $region53
    $region52: #{tpu_custom_call.1} parent=1 // pred_region
      %118 = dma.done [#allocation6], 128
    $region53: #{tpu_custom_call.1} parent=1 // pred_fallthru
      _
    // Predicated region
    $region54: #{tpu_custom_call.1} parent=1 // pred_check
      _
    $region55: #{tpu_custom_call.1} parent=1 // pred_check_branch
      %120 = sbr.rel (0) target = $region57
    $region56: #{tpu_custom_call.1} parent=1 // pred_region
      %121 = dma.done [#allocation9], 256
    $region57: #{tpu_custom_call.1} parent=1 // pred_fallthru
      _
    // Predicated region
    $region58: #{tpu_custom_call.1} parent=1 // pred_check
      _
    $region59: #{tpu_custom_call.1} parent=1 // pred_check_branch
      %123 = sbr.rel (0) target = $region61
    $region60: #{tpu_custom_call.1} parent=1 // pred_region
      %124 = dma.done [#allocation9], 128
    $region61: #{tpu_custom_call.1} parent=1 // pred_fallthru
      _
    // Predicated region
    $region62: #{tpu_custom_call.1} parent=1 // pred_check
      _
    $region63: #{tpu_custom_call.1} parent=1 // pred_check_branch
      %126 = sbr.rel (0) target = $region65
    $region64: #{tpu_custom_call.1} parent=1 // pred_region
      %127 = dma.done [#allocation12], 4096
    $region65: #{tpu_custom_call.1} parent=1 // pred_fallthru
      _
    // Predicated region
    $region66: #{tpu_custom_call.1} parent=1 // pred_check
      _
    $region67: #{tpu_custom_call.1} parent=1 // pred_check_branch
      %129 = sbr.rel (0) target = $region69
    $region68: #{tpu_custom_call.1} parent=1 // pred_region
      %130 = dma.done [#allocation12], 256
    $region69: #{tpu_custom_call.1} parent=1 // pred_fallthru
      _
    %v132 = vld [vmem:[#allocation2] sm:$0xf]
    %v133 = vld [vmem:[#allocation2 + $0x4] sm:$0xf]
    %v134 = vld [vmem:[#allocation2 + $0x8] sm:$0xf]
    %v135 = vld [vmem:[#allocation2 + $0xc] sm:$0xf]
    %v136 = vld [vmem:[#allocation2 + $0x10] sm:$0xf]
    %v137 = vld [vmem:[#allocation2 + $0x14] sm:$0xf]
    %v138 = vld [vmem:[#allocation2 + $0x18] sm:$0xf]
    %v139 = vld [vmem:[#allocation2 + $0x1c] sm:$0xf]
    %v140 = vld [vmem:[#allocation5] sm:$0xf]
    %v141 = vld [vmem:[#allocation5 + $0x4] sm:$0xf]
    %v142 = vld [vmem:[#allocation5 + $0x8] sm:$0xf]
    %v143 = vld [vmem:[#allocation5 + $0xc] sm:$0xf]
    %v144 = vld [vmem:[#allocation7] sm:$0xf]
    %v145 = vld [vmem:[#allocation7 + $0x4] sm:$0xf]
    %v146 = vld [vmem:[%s0] sm:$0xff]
    %v147 = vld [vmem:[%s0 + $0x8] sm:$0xff]
    %v148 = vld [vmem:[%s0 + $0x10] sm:$0xff]
    %v149 = vld [vmem:[%s0 + $0x18] sm:$0xff]
    %v150 = vld [vmem:[%s0 + $0x20] sm:$0xff]
    %v151 = vld [vmem:[%s0 + $0x28] sm:$0xff]
    %v152 = vld [vmem:[%s0 + $0x30] sm:$0xff]
    %v153 = vld [vmem:[%s0 + $0x38] sm:$0xff]
    %v154 = vpack.c.bf16 %v147, %v146
    %v155 = vpack.c.bf16 %v149, %v148
    %v156 = vpack.c.bf16 %v151, %v150
    %v157 = vpack.c.bf16 %v153, %v152
    %v158 = vld [vmem:[#allocation11] sm:$0xf]
    %v159 = vld [vmem:[#allocation11 + $0x4] sm:$0xf]
    %v160 = vld [vmem:[#allocation11 + $0x8] sm:$0xf]
    %v161 = vld [vmem:[#allocation11 + $0xc] sm:$0xf]
    %v166 = vunpack.c.l.b16 %v158
    %v167 = vunpack.c.l.b16 %v159
    %v168 = vunpack.c.l.b16 %v160
    %v169 = vunpack.c.l.b16 %v161
    %v170 = vpack.c.b16 %v167, %v166
    %v171 = vpack.c.b16 %v169, %v168
    %vm174 = vcmask 261120
    %v176 = vsel %vm174, %v154, 0
    %v179 = vsel %vm174, %v155, 0
    %v182 = vsel %vm174, %v156, 0
    %v185 = vsel %vm174, %v157, 0
    %187 = vmatprep.subr.bf16.mxu0 0
    %188 = vmatpush1.bf16.msra.mxu0 0
    %189 = vmatprep.subr.bf16.mxu0 0
    %190 = vmatpush1.bf16.msra.mxu0 0
    %191 = vmatprep.subr.bf16.mxu0 0
    %192 = vmatpush1.bf16.msra.mxu0 0
    %193 = vmatprep.subr.bf16.mxu0 0
    %194 = vmatpush1.bf16.msra.mxu0 0
    %195 = vmatprep.subr.bf16.mxu0 0
    %196 = vmatpush1.bf16.msra.mxu0 0
    %197 = vmatprep.subr.bf16.mxu0 0
    %198 = vmatpush1.bf16.msra.mxu0 0
    %199 = vmatprep.subr.bf16.mxu0 0
    %200 = vmatpush1.bf16.msra.mxu0 %v171
    %201 = vmatprep.subr.bf16.mxu0 0
    %202 = vmatpush1.bf16.msra.mxu0 %v170
    %203 = vmatprep.subr.bf16.mxu0 0
    %204 = vmatpush2.bf16.msra.mxu0 0
    %205 = vmatprep.subr.bf16.mxu0 0
    %206 = vmatpush2.bf16.msra.mxu0 0
    %207 = vmatprep.subr.bf16.mxu0 0
    %208 = vmatpush2.bf16.msra.mxu0 0
    %209 = vmatprep.subr.bf16.mxu0 0
    %210 = vmatpush2.bf16.msra.mxu0 0
    %211 = vmatprep.subr.bf16.mxu0 0
    %212 = vmatpush2.bf16.msra.mxu0 0
    %213 = vmatprep.subr.bf16.mxu0 0
    %214 = vmatpush2.bf16.msra.mxu0 0
    %215 = vmatprep.subr.bf16.mxu0 0
    %216 = vmatpush2.bf16.msra.mxu0 0
    %217 = vmatprep.subr.bf16.mxu0 0
    %218 = vmatpush2.bf16.msra.mxu0 0
    %219 = vmatprep.mubr.bf16.mxu0 0
    %220 = vmatmul.mubr.bf16.gmra.mxu0 %v176
    %v221 = vpop.f32.mrf.mxu0
    %v222 = vadd.f32 0.0, %v221
    %v223 = vpop.f32.mrf.mxu0
    %v224 = vpop.f32.mrf.mxu0
    %v225 = vadd.f32 0.0, %v224
    %v226 = vpop.f32.mrf.mxu0
    %227 = vmatprep.mubr.bf16.mxu0 0
    %228 = vmatmul.mubr.bf16.gmra.mxu0 %v179
    %v229 = vpop.f32.mrf.mxu0
    %v230 = vadd.f32 0.0, %v229
    %v231 = vpop.f32.mrf.mxu0
    %v232 = vpop.f32.mrf.mxu0
    %v233 = vadd.f32 0.0, %v232
    %v234 = vpop.f32.mrf.mxu0
    %235 = vmatprep.mubr.bf16.mxu0 0
    %236 = vmatmul.mubr.bf16.gmra.mxu0 %v182
    %v237 = vpop.f32.mrf.mxu0
    %v238 = vadd.f32 0.0, %v237
    %v239 = vpop.f32.mrf.mxu0
    %v240 = vpop.f32.mrf.mxu0
    %v241 = vadd.f32 0.0, %v240
    %v242 = vpop.f32.mrf.mxu0
    %243 = vmatprep.mubr.bf16.mxu0 0
    %244 = vmatmul.mubr.bf16.gmra.mxu0 %v185
    %v245 = vpop.f32.mrf.mxu0
    %v246 = vadd.f32 0.0, %v245
    %v247 = vpop.f32.mrf.mxu0
    %v248 = vpop.f32.mrf.mxu0
    %v249 = vadd.f32 0.0, %v248
    %v250 = vpop.f32.mrf.mxu0
    %251 = vdwg.mxu0
    %v252 = vpack.c.bf16 %v225, %v222
    %v253 = vpack.c.bf16 %v233, %v230
    %v254 = vpack.c.bf16 %v241, %v238
    %v255 = vpack.c.bf16 %v249, %v246
    %v256 = vld [vmem:[#allocation13] sm:$0x1]
    %v258 = vlaneseq
    %v259 = vshrl.u32 %v258, 7
    %v260 = vsub.s32 0, %v259
    %v261 = vrot.slane %v256, %v260
    %v271 = vunpack.c.l.b16 %v132
    %v272 = vunpack.c.l.b16 %v133
    %v273 = vunpack.c.l.b16 %v134
    %v274 = vunpack.c.l.b16 %v135
    %v275 = vunpack.c.l.b16 %v136
    %v276 = vunpack.c.l.b16 %v137
    %v277 = vunpack.c.l.b16 %v138
    %v278 = vunpack.c.l.b16 %v139
    %v279 = vpack.c.b16 %v272, %v271
    %v280 = vpack.c.b16 %v274, %v273
    %v281 = vpack.c.b16 %v276, %v275
    %v282 = vpack.c.b16 %v278, %v277
    %vm283 = vcmask 523264
    %v285 = vsel %vm283, %v279, 0
    %v288 = vsel %vm283, %v280, 0
    %v291 = vsel %vm283, %v281, 0
    %v294 = vsel %vm283, %v282, 0
    %296 = vmatprep.subr.bf16.mxu0 0
    %297 = vmatpush1.bf16.msra.mxu0 0
    %298 = vmatprep.subr.bf16.mxu0 0
    %299 = vmatpush1.bf16.msra.mxu0 0
    %300 = vmatprep.subr.bf16.mxu0 0
    %301 = vmatpush1.bf16.msra.mxu0 0
    %302 = vmatprep.subr.bf16.mxu0 0
    %303 = vmatpush1.bf16.msra.mxu0 0
    %304 = vmatprep.subr.bf16.mxu0 0
    %305 = vmatpush1.bf16.msra.mxu0 %v255
    %306 = vmatprep.subr.bf16.mxu0 0
    %307 = vmatpush1.bf16.msra.mxu0 %v254
    %308 = vmatprep.subr.bf16.mxu0 0
    %309 = vmatpush1.bf16.msra.mxu0 %v253
    %310 = vmatprep.subr.bf16.mxu0 0
    %311 = vmatpush1.bf16.msra.mxu0 %v252
    %312 = vmatprep.subr.bf16.mxu0 0
    %313 = vmatpush2.bf16.msra.mxu0 0
    %314 = vmatprep.subr.bf16.mxu0 0
    %315 = vmatpush2.bf16.msra.mxu0 0
    %316 = vmatprep.subr.bf16.mxu0 0
    %317 = vmatpush2.bf16.msra.mxu0 0
    %318 = vmatprep.subr.bf16.mxu0 0
    %319 = vmatpush2.bf16.msra.mxu0 0
    %320 = vmatprep.subr.bf16.mxu0 0
    %321 = vmatpush2.bf16.msra.mxu0 0
    %322 = vmatprep.subr.bf16.mxu0 0
    %323 = vmatpush2.bf16.msra.mxu0 0
    %324 = vmatprep.subr.bf16.mxu0 0
    %325 = vmatpush2.bf16.msra.mxu0 0
    %326 = vmatprep.subr.bf16.mxu0 0
    %327 = vmatpush2.bf16.msra.mxu0 0
    %328 = vmatprep.mubr.bf16.mxu0 0
    %329 = vmatmul.mubr.bf16.gmra.mxu0 %v285
    %v330 = vpop.f32.mrf.mxu0
    %v331 = vadd.f32 %v261, %v330
    %v332 = vpop.f32.mrf.mxu0
    %v333 = vpop.f32.mrf.mxu0
    %v334 = vadd.f32 %v261, %v333
    %v335 = vpop.f32.mrf.mxu0
    %336 = vmatprep.mubr.bf16.mxu0 0
    %337 = vmatmul.mubr.bf16.gmra.mxu0 %v288
    %v338 = vpop.f32.mrf.mxu0
    %v339 = vadd.f32 %v261, %v338
    %v340 = vpop.f32.mrf.mxu0
    %v341 = vpop.f32.mrf.mxu0
    %v342 = vadd.f32 %v261, %v341
    %v343 = vpop.f32.mrf.mxu0
    %344 = vmatprep.mubr.bf16.mxu0 0
    %345 = vmatmul.mubr.bf16.gmra.mxu0 %v291
    %v346 = vpop.f32.mrf.mxu0
    %v347 = vadd.f32 %v261, %v346
    %v348 = vpop.f32.mrf.mxu0
    %v349 = vpop.f32.mrf.mxu0
    %v350 = vadd.f32 %v261, %v349
    %v351 = vpop.f32.mrf.mxu0
    %352 = vmatprep.mubr.bf16.mxu0 0
    %353 = vmatmul.mubr.bf16.gmra.mxu0 %v294
    %v354 = vpop.f32.mrf.mxu0
    %v355 = vadd.f32 %v261, %v354
    %v356 = vpop.f32.mrf.mxu0
    %v357 = vpop.f32.mrf.mxu0
    %v358 = vadd.f32 %v261, %v357
    %v359 = vpop.f32.mrf.mxu0
    %360 = vdwg.mxu0
    %v361 = vpack.c.bf16 %v334, %v331
    %v362 = vpack.c.bf16 %v342, %v339
    %v363 = vpack.c.bf16 %v350, %v347
    %v364 = vpack.c.bf16 %v358, %v355
    %s365 = scalar_lea.vmem [#allocation11], 16
    %v366 = vld [vmem:[%s365] sm:$0xf]
    %v367 = vld [vmem:[%s365 + $0x4] sm:$0xf]
    %v368 = vld [vmem:[%s365 + $0x8] sm:$0xf]
    %v369 = vld [vmem:[%s365 + $0xc] sm:$0xf]
    %v374 = vunpack.c.l.b16 %v366
    %v375 = vunpack.c.l.b16 %v367
    %v376 = vunpack.c.l.b16 %v368
    %v377 = vunpack.c.l.b16 %v369
    %v378 = vpack.c.b16 %v375, %v374
    %v379 = vpack.c.b16 %v377, %v376
    %v383 = vsel %vm174, %v361, 0
    %v386 = vsel %vm174, %v362, 0
    %v389 = vsel %vm174, %v363, 0
    %v392 = vsel %vm174, %v364, 0
    %394 = vmatprep.subr.bf16.mxu0 0
    %395 = vmatpush1.bf16.msra.mxu0 0
    %396 = vmatprep.subr.bf16.mxu0 0
    %397 = vmatpush1.bf16.msra.mxu0 0
    %398 = vmatprep.subr.bf16.mxu0 0
    %399 = vmatpush1.bf16.msra.mxu0 0
    %400 = vmatprep.subr.bf16.mxu0 0
    %401 = vmatpush1.bf16.msra.mxu0 0
    %402 = vmatprep.subr.bf16.mxu0 0
    %403 = vmatpush1.bf16.msra.mxu0 0
    %404 = vmatprep.subr.bf16.mxu0 0
    %405 = vmatpush1.bf16.msra.mxu0 0
    %406 = vmatprep.subr.bf16.mxu0 0
    %407 = vmatpush1.bf16.msra.mxu0 %v379
    %408 = vmatprep.subr.bf16.mxu0 0
    %409 = vmatpush1.bf16.msra.mxu0 %v378
    %410 = vmatprep.subr.bf16.mxu0 0
    %411 = vmatpush2.bf16.msra.mxu0 0
    %412 = vmatprep.subr.bf16.mxu0 0
    %413 = vmatpush2.bf16.msra.mxu0 0
    %414 = vmatprep.subr.bf16.mxu0 0
    %415 = vmatpush2.bf16.msra.mxu0 0
    %416 = vmatprep.subr.bf16.mxu0 0
    %417 = vmatpush2.bf16.msra.mxu0 0
    %418 = vmatprep.subr.bf16.mxu0 0
    %419 = vmatpush2.bf16.msra.mxu0 0
    %420 = vmatprep.subr.bf16.mxu0 0
    %421 = vmatpush2.bf16.msra.mxu0 0
    %422 = vmatprep.subr.bf16.mxu0 0
    %423 = vmatpush2.bf16.msra.mxu0 0
    %424 = vmatprep.subr.bf16.mxu0 0
    %425 = vmatpush2.bf16.msra.mxu0 0
    %426 = vmatprep.mubr.bf16.mxu0 0
    %427 = vmatmul.mubr.bf16.gmra.mxu0 %v383
    %v428 = vpop.f32.mrf.mxu0
    %v429 = vadd.f32 0.0, %v428
    %v430 = vpop.f32.mrf.mxu0
    %v431 = vpop.f32.mrf.mxu0
    %v432 = vadd.f32 0.0, %v431
    %v433 = vpop.f32.mrf.mxu0
    %434 = vmatprep.mubr.bf16.mxu0 0
    %435 = vmatmul.mubr.bf16.gmra.mxu0 %v386
    %v436 = vpop.f32.mrf.mxu0
    %v437 = vadd.f32 0.0, %v436
    %v438 = vpop.f32.mrf.mxu0
    %v439 = vpop.f32.mrf.mxu0
    %v440 = vadd.f32 0.0, %v439
    %v441 = vpop.f32.mrf.mxu0
    %442 = vmatprep.mubr.bf16.mxu0 0
    %443 = vmatmul.mubr.bf16.gmra.mxu0 %v389
    %v444 = vpop.f32.mrf.mxu0
    %v445 = vadd.f32 0.0, %v444
    %v446 = vpop.f32.mrf.mxu0
    %v447 = vpop.f32.mrf.mxu0
    %v448 = vadd.f32 0.0, %v447
    %v449 = vpop.f32.mrf.mxu0
    %450 = vmatprep.mubr.bf16.mxu0 0
    %451 = vmatmul.mubr.bf16.gmra.mxu0 %v392
    %v452 = vpop.f32.mrf.mxu0
    %v453 = vadd.f32 0.0, %v452
    %v454 = vpop.f32.mrf.mxu0
    %v455 = vpop.f32.mrf.mxu0
    %v456 = vadd.f32 0.0, %v455
    %v457 = vpop.f32.mrf.mxu0
    %458 = vdwg.mxu0
    %v459 = vpack.c.bf16 %v432, %v429
    %v460 = vpack.c.bf16 %v440, %v437
    %v461 = vpack.c.bf16 %v448, %v445
    %v462 = vpack.c.bf16 %v456, %v453
    %s463 = scalar_lea.vmem [#allocation13], 1
    %v464 = vld [vmem:[%s463] sm:$0x1]
    %v466 = vlaneseq
    %v467 = vshrl.u32 %v466, 7
    %v468 = vsub.s32 0, %v467
    %v469 = vrot.slane %v464, %v468
    %471 = vmatprep.subr.bf16.mxu0 0
    %472 = vmatpush1.bf16.msra.mxu0 0
    %473 = vmatprep.subr.bf16.mxu0 0
    %474 = vmatpush1.bf16.msra.mxu0 0
    %475 = vmatprep.subr.bf16.mxu0 0
    %476 = vmatpush1.bf16.msra.mxu0 0
    %477 = vmatprep.subr.bf16.mxu0 0
    %478 = vmatpush1.bf16.msra.mxu0 0
    %479 = vmatprep.subr.bf16.mxu0 0
    %480 = vmatpush1.bf16.msra.mxu0 %v462
    %481 = vmatprep.subr.bf16.mxu0 0
    %482 = vmatpush1.bf16.msra.mxu0 %v461
    %483 = vmatprep.subr.bf16.mxu0 0
    %484 = vmatpush1.bf16.msra.mxu0 %v460
    %485 = vmatprep.subr.bf16.mxu0 0
    %486 = vmatpush1.bf16.msra.mxu0 %v459
    %487 = vmatprep.subr.bf16.mxu0 0
    %488 = vmatpush2.bf16.msra.mxu0 0
    %489 = vmatprep.subr.bf16.mxu0 0
    %490 = vmatpush2.bf16.msra.mxu0 0
    %491 = vmatprep.subr.bf16.mxu0 0
    %492 = vmatpush2.bf16.msra.mxu0 0
    %493 = vmatprep.subr.bf16.mxu0 0
    %494 = vmatpush2.bf16.msra.mxu0 0
    %495 = vmatprep.subr.bf16.mxu0 0
    %496 = vmatpush2.bf16.msra.mxu0 0
    %497 = vmatprep.subr.bf16.mxu0 0
    %498 = vmatpush2.bf16.msra.mxu0 0
    %499 = vmatprep.subr.bf16.mxu0 0
    %500 = vmatpush2.bf16.msra.mxu0 0
    %501 = vmatprep.subr.bf16.mxu0 0
    %502 = vmatpush2.bf16.msra.mxu0 0
    %503 = vmatprep.mubr.bf16.mxu0 0
    %504 = vmatmul.mubr.bf16.gmra.mxu0 %v285
    %v505 = vpop.f32.mrf.mxu0
    %v506 = vadd.f32 %v469, %v505
    %v507 = vpop.f32.mrf.mxu0
    %v508 = vpop.f32.mrf.mxu0
    %v509 = vadd.f32 %v469, %v508
    %v510 = vpop.f32.mrf.mxu0
    %511 = vmatprep.mubr.bf16.mxu0 0
    %512 = vmatmul.mubr.bf16.gmra.mxu0 %v288
    %v513 = vpop.f32.mrf.mxu0
    %v514 = vadd.f32 %v469, %v513
    %v515 = vpop.f32.mrf.mxu0
    %v516 = vpop.f32.mrf.mxu0
    %v517 = vadd.f32 %v469, %v516
    %v518 = vpop.f32.mrf.mxu0
    %519 = vmatprep.mubr.bf16.mxu0 0
    %520 = vmatmul.mubr.bf16.gmra.mxu0 %v291
    %v521 = vpop.f32.mrf.mxu0
    %v522 = vadd.f32 %v469, %v521
    %v523 = vpop.f32.mrf.mxu0
    %v524 = vpop.f32.mrf.mxu0
    %v525 = vadd.f32 %v469, %v524
    %v526 = vpop.f32.mrf.mxu0
    %527 = vmatprep.mubr.bf16.mxu0 0
    %528 = vmatmul.mubr.bf16.gmra.mxu0 %v294
    %v529 = vpop.f32.mrf.mxu0
    %v530 = vadd.f32 %v469, %v529
    %v531 = vpop.f32.mrf.mxu0
    %v532 = vpop.f32.mrf.mxu0
    %v533 = vadd.f32 %v469, %v532
    %v534 = vpop.f32.mrf.mxu0
    %535 = vdwg.mxu0
    %v536 = vld [vmem:[#allocation8] sm:$0xf]
    %v537 = vld [vmem:[#allocation8 + $0x4] sm:$0xf]
    %v538 = vld [vmem:[#allocation8 + $0x8] sm:$0xf]
    %v539 = vld [vmem:[#allocation8 + $0xc] sm:$0xf]
    %v540 = vpack.c.bf16 %v509, %v506
    %v541 = vpack.c.bf16 %v517, %v514
    %v542 = vpack.c.bf16 %v525, %v522
    %v543 = vpack.c.bf16 %v533, %v530
    %s544 = scalar_lea.vmem [#allocation11], 32
    %v545 = vld [vmem:[%s544] sm:$0xf]
    %v546 = vld [vmem:[%s544 + $0x4] sm:$0xf]
    %v547 = vld [vmem:[%s544 + $0x8] sm:$0xf]
    %v548 = vld [vmem:[%s544 + $0xc] sm:$0xf]
    %v553 = vunpack.c.l.b16 %v545
    %v554 = vunpack.c.l.b16 %v546
    %v555 = vunpack.c.l.b16 %v547
    %v556 = vunpack.c.l.b16 %v548
    %v557 = vpack.c.b16 %v554, %v553
    %v558 = vpack.c.b16 %v556, %v555
    %v562 = vsel %vm174, %v540, 0
    %v565 = vsel %vm174, %v541, 0
    %v568 = vsel %vm174, %v542, 0
    %v571 = vsel %vm174, %v543, 0
    %573 = vmatprep.subr.bf16.mxu0 0
    %574 = vmatpush1.bf16.msra.mxu0 0
    %575 = vmatprep.subr.bf16.mxu0 0
    %576 = vmatpush1.bf16.msra.mxu0 0
    %577 = vmatprep.subr.bf16.mxu0 0
    %578 = vmatpush1.bf16.msra.mxu0 0
    %579 = vmatprep.subr.bf16.mxu0 0
    %580 = vmatpush1.bf16.msra.mxu0 0
    %581 = vmatprep.subr.bf16.mxu0 0
    %582 = vmatpush1.bf16.msra.mxu0 0
    %583 = vmatprep.subr.bf16.mxu0 0
    %584 = vmatpush1.bf16.msra.mxu0 0
    %585 = vmatprep.subr.bf16.mxu0 0
    %586 = vmatpush1.bf16.msra.mxu0 %v558
    %587 = vmatprep.subr.bf16.mxu0 0
    %588 = vmatpush1.bf16.msra.mxu0 %v557
    %589 = vmatprep.subr.bf16.mxu0 0
    %590 = vmatpush2.bf16.msra.mxu0 0
    %591 = vmatprep.subr.bf16.mxu0 0
    %592 = vmatpush2.bf16.msra.mxu0 0
    %593 = vmatprep.subr.bf16.mxu0 0
    %594 = vmatpush2.bf16.msra.mxu0 0
    %595 = vmatprep.subr.bf16.mxu0 0
    %596 = vmatpush2.bf16.msra.mxu0 0
    %597 = vmatprep.subr.bf16.mxu0 0
    %598 = vmatpush2.bf16.msra.mxu0 0
    %599 = vmatprep.subr.bf16.mxu0 0
    %600 = vmatpush2.bf16.msra.mxu0 0
    %601 = vmatprep.subr.bf16.mxu0 0
    %602 = vmatpush2.bf16.msra.mxu0 0
    %603 = vmatprep.subr.bf16.mxu0 0
    %604 = vmatpush2.bf16.msra.mxu0 0
    %605 = vmatprep.mubr.bf16.mxu0 0
    %606 = vmatmul.mubr.bf16.gmra.mxu0 %v562
    %v607 = vpop.f32.mrf.mxu0
    %v608 = vadd.f32 0.0, %v607
    %v609 = vpop.f32.mrf.mxu0
    %v610 = vpop.f32.mrf.mxu0
    %v611 = vadd.f32 0.0, %v610
    %v612 = vpop.f32.mrf.mxu0
    %613 = vmatprep.mubr.bf16.mxu0 0
    %614 = vmatmul.mubr.bf16.gmra.mxu0 %v565
    %v615 = vpop.f32.mrf.mxu0
    %v616 = vadd.f32 0.0, %v615
    %v617 = vpop.f32.mrf.mxu0
    %v618 = vpop.f32.mrf.mxu0
    %v619 = vadd.f32 0.0, %v618
    %v620 = vpop.f32.mrf.mxu0
    %621 = vmatprep.mubr.bf16.mxu0 0
    %622 = vmatmul.mubr.bf16.gmra.mxu0 %v568
    %v623 = vpop.f32.mrf.mxu0
    %v624 = vadd.f32 0.0, %v623
    %v625 = vpop.f32.mrf.mxu0
    %v626 = vpop.f32.mrf.mxu0
    %v627 = vadd.f32 0.0, %v626
    %v628 = vpop.f32.mrf.mxu0
    %629 = vmatprep.mubr.bf16.mxu0 0
    %630 = vmatmul.mubr.bf16.gmra.mxu0 %v571
    %v631 = vpop.f32.mrf.mxu0
    %v632 = vadd.f32 0.0, %v631
    %v633 = vpop.f32.mrf.mxu0
    %v634 = vpop.f32.mrf.mxu0
    %v635 = vadd.f32 0.0, %v634
    %v636 = vpop.f32.mrf.mxu0
    %637 = vdwg.mxu0
    %v638 = vpack.c.bf16 %v611, %v608
    %v639 = vpack.c.bf16 %v619, %v616
    %v640 = vpack.c.bf16 %v627, %v624
    %v641 = vpack.c.bf16 %v635, %v632
    %s642 = scalar_lea.vmem [#allocation13], 2
    %v643 = vld [vmem:[%s642] sm:$0x1]
    %v645 = vlaneseq
    %v646 = vshrl.u32 %v645, 7
    %v647 = vsub.s32 0, %v646
    %v648 = vrot.slane %v643, %v647
    %v654 = vunpack.c.l.b16 %v536
    %v655 = vunpack.c.l.b16 %v537
    %v656 = vunpack.c.l.b16 %v538
    %v657 = vunpack.c.l.b16 %v539
    %v658 = vpack.c.b16 %v655, %v654
    %v659 = vpack.c.b16 %v657, %v656
    %v661 = vsel %vm283, %v658, 0
    %v664 = vsel %vm283, %v659, 0
    %666 = vmatprep.subr.bf16.mxu0 0
    %667 = vmatpush1.bf16.msra.mxu0 0
    %668 = vmatprep.subr.bf16.mxu0 0
    %669 = vmatpush1.bf16.msra.mxu0 0
    %670 = vmatprep.subr.bf16.mxu0 0
    %671 = vmatpush1.bf16.msra.mxu0 0
    %672 = vmatprep.subr.bf16.mxu0 0
    %673 = vmatpush1.bf16.msra.mxu0 0
    %674 = vmatprep.subr.bf16.mxu0 0
    %675 = vmatpush1.bf16.msra.mxu0 %v641
    %676 = vmatprep.subr.bf16.mxu0 0
    %677 = vmatpush1.bf16.msra.mxu0 %v640
    %678 = vmatprep.subr.bf16.mxu0 0
    %679 = vmatpush1.bf16.msra.mxu0 %v639
    %680 = vmatprep.subr.bf16.mxu0 0
    %681 = vmatpush1.bf16.msra.mxu0 %v638
    %682 = vmatprep.subr.bf16.mxu0 0
    %683 = vmatpush2.bf16.msra.mxu0 0
    %684 = vmatprep.subr.bf16.mxu0 0
    %685 = vmatpush2.bf16.msra.mxu0 0
    %686 = vmatprep.subr.bf16.mxu0 0
    %687 = vmatpush2.bf16.msra.mxu0 0
    %688 = vmatprep.subr.bf16.mxu0 0
    %689 = vmatpush2.bf16.msra.mxu0 0
    %690 = vmatprep.subr.bf16.mxu0 0
    %691 = vmatpush2.bf16.msra.mxu0 0
    %692 = vmatprep.subr.bf16.mxu0 0
    %693 = vmatpush2.bf16.msra.mxu0 0
    %694 = vmatprep.subr.bf16.mxu0 0
    %695 = vmatpush2.bf16.msra.mxu0 0
    %696 = vmatprep.subr.bf16.mxu0 0
    %697 = vmatpush2.bf16.msra.mxu0 0
    %698 = vmatprep.mubr.bf16.mxu0 0
    %699 = vmatmul.mubr.bf16.gmra.mxu0 %v661
    %v700 = vpop.f32.mrf.mxu0
    %v701 = vadd.f32 %v648, %v700
    %v702 = vpop.f32.mrf.mxu0
    %v703 = vpop.f32.mrf.mxu0
    %v704 = vadd.f32 %v648, %v703
    %v705 = vpop.f32.mrf.mxu0
    %706 = vmatprep.mubr.bf16.mxu0 0
    %707 = vmatmul.mubr.bf16.gmra.mxu0 %v664
    %v708 = vpop.f32.mrf.mxu0
    %v709 = vadd.f32 %v648, %v708
    %v710 = vpop.f32.mrf.mxu0
    %v711 = vpop.f32.mrf.mxu0
    %v712 = vadd.f32 %v648, %v711
    %v713 = vpop.f32.mrf.mxu0
    %714 = vdwg.mxu0
    %v715 = vpack.c.bf16 %v704, %v701
    %v716 = vpack.c.bf16 %v712, %v709
    %s717 = scalar_lea.vmem [#allocation11], 48
    %v718 = vld [vmem:[%s717] sm:$0xf]
    %v719 = vld [vmem:[%s717 + $0x4] sm:$0xf]
    %v720 = vld [vmem:[%s717 + $0x8] sm:$0xf]
    %v721 = vld [vmem:[%s717 + $0xc] sm:$0xf]
    %v726 = vunpack.c.l.b16 %v718
    %v727 = vunpack.c.l.b16 %v719
    %v728 = vunpack.c.l.b16 %v720
    %v729 = vunpack.c.l.b16 %v721
    %v730 = vpack.c.b16 %v727, %v726
    %v731 = vpack.c.b16 %v729, %v728
    %v735 = vsel %vm174, %v715, 0
    %v738 = vsel %vm174, %v716, 0
    %740 = vmatprep.subr.bf16.mxu0 0
    %741 = vmatpush1.bf16.msra.mxu0 0
    %742 = vmatprep.subr.bf16.mxu0 0
    %743 = vmatpush1.bf16.msra.mxu0 0
    %744 = vmatprep.subr.bf16.mxu0 0
    %745 = vmatpush1.bf16.msra.mxu0 0
    %746 = vmatprep.subr.bf16.mxu0 0
    %747 = vmatpush1.bf16.msra.mxu0 0
    %748 = vmatprep.subr.bf16.mxu0 0
    %749 = vmatpush1.bf16.msra.mxu0 0
    %750 = vmatprep.subr.bf16.mxu0 0
    %751 = vmatpush1.bf16.msra.mxu0 0
    %752 = vmatprep.subr.bf16.mxu0 0
    %753 = vmatpush1.bf16.msra.mxu0 %v731
    %754 = vmatprep.subr.bf16.mxu0 0
    %755 = vmatpush1.bf16.msra.mxu0 %v730
    %756 = vmatprep.subr.bf16.mxu0 0
    %757 = vmatpush2.bf16.msra.mxu0 0
    %758 = vmatprep.subr.bf16.mxu0 0
    %759 = vmatpush2.bf16.msra.mxu0 0
    %760 = vmatprep.subr.bf16.mxu0 0
    %761 = vmatpush2.bf16.msra.mxu0 0
    %762 = vmatprep.subr.bf16.mxu0 0
    %763 = vmatpush2.bf16.msra.mxu0 0
    %764 = vmatprep.subr.bf16.mxu0 0
    %765 = vmatpush2.bf16.msra.mxu0 0
    %766 = vmatprep.subr.bf16.mxu0 0
    %767 = vmatpush2.bf16.msra.mxu0 0
    %768 = vmatprep.subr.bf16.mxu0 0
    %769 = vmatpush2.bf16.msra.mxu0 0
    %770 = vmatprep.subr.bf16.mxu0 0
    %771 = vmatpush2.bf16.msra.mxu0 0
    %772 = vmatprep.mubr.bf16.mxu0 0
    %773 = vmatmul.mubr.bf16.gmra.mxu0 %v735
    %v774 = vpop.f32.mrf.mxu0
    %v775 = vadd.f32 0.0, %v774
    %v776 = vpop.f32.mrf.mxu0
    %v777 = vpop.f32.mrf.mxu0
    %v778 = vadd.f32 0.0, %v777
    %v779 = vpop.f32.mrf.mxu0
    %780 = vmatprep.mubr.bf16.mxu0 0
    %781 = vmatmul.mubr.bf16.gmra.mxu0 %v738
    %v782 = vpop.f32.mrf.mxu0
    %v783 = vadd.f32 0.0, %v782
    %v784 = vpop.f32.mrf.mxu0
    %v785 = vpop.f32.mrf.mxu0
    %v786 = vadd.f32 0.0, %v785
    %v787 = vpop.f32.mrf.mxu0
    %788 = vdwg.mxu0
    %v789 = vpack.c.bf16 %v778, %v775
    %v790 = vpack.c.bf16 %v786, %v783
    %s791 = scalar_lea.vmem [#allocation13], 3
    %v792 = vld [vmem:[%s791] sm:$0x1]
    %v794 = vlaneseq
    %v795 = vshrl.u32 %v794, 7
    %v796 = vsub.s32 0, %v795
    %v797 = vrot.slane %v792, %v796
    %v803 = vunpack.c.l.b16 %v140
    %v804 = vunpack.c.l.b16 %v141
    %v805 = vunpack.c.l.b16 %v142
    %v806 = vunpack.c.l.b16 %v143
    %v807 = vpack.c.b16 %v804, %v803
    %v808 = vpack.c.b16 %v806, %v805
    %v810 = vsel %vm174, %v807, 0
    %v813 = vsel %vm174, %v808, 0
    %815 = vmatprep.subr.bf16.mxu0 0
    %816 = vmatpush1.bf16.msra.mxu0 0
    %817 = vmatprep.subr.bf16.mxu0 0
    %818 = vmatpush1.bf16.msra.mxu0 0
    %819 = vmatprep.subr.bf16.mxu0 0
    %820 = vmatpush1.bf16.msra.mxu0 0
    %821 = vmatprep.subr.bf16.mxu0 0
    %822 = vmatpush1.bf16.msra.mxu0 0
    %823 = vmatprep.subr.bf16.mxu0 0
    %824 = vmatpush1.bf16.msra.mxu0 0
    %825 = vmatprep.subr.bf16.mxu0 0
    %826 = vmatpush1.bf16.msra.mxu0 0
    %827 = vmatprep.subr.bf16.mxu0 0
    %828 = vmatpush1.bf16.msra.mxu0 %v790
    %829 = vmatprep.subr.bf16.mxu0 0
    %830 = vmatpush1.bf16.msra.mxu0 %v789
    %831 = vmatprep.subr.bf16.mxu0 0
    %832 = vmatpush2.bf16.msra.mxu0 0
    %833 = vmatprep.subr.bf16.mxu0 0
    %834 = vmatpush2.bf16.msra.mxu0 0
    %835 = vmatprep.subr.bf16.mxu0 0
    %836 = vmatpush2.bf16.msra.mxu0 0
    %837 = vmatprep.subr.bf16.mxu0 0
    %838 = vmatpush2.bf16.msra.mxu0 0
    %839 = vmatprep.subr.bf16.mxu0 0
    %840 = vmatpush2.bf16.msra.mxu0 0
    %841 = vmatprep.subr.bf16.mxu0 0
    %842 = vmatpush2.bf16.msra.mxu0 0
    %843 = vmatprep.subr.bf16.mxu0 0
    %844 = vmatpush2.bf16.msra.mxu0 0
    %845 = vmatprep.subr.bf16.mxu0 0
    %846 = vmatpush2.bf16.msra.mxu0 0
    %847 = vmatprep.mubr.bf16.mxu0 0
    %848 = vmatmul.mubr.bf16.gmra.mxu0 %v810
    %v849 = vpop.f32.mrf.mxu0
    %v850 = vadd.f32 %v797, %v849
    %v851 = vpop.f32.mrf.mxu0
    %v852 = vpop.f32.mrf.mxu0
    %v853 = vadd.f32 %v797, %v852
    %v854 = vpop.f32.mrf.mxu0
    %855 = vmatprep.mubr.bf16.mxu0 0
    %856 = vmatmul.mubr.bf16.gmra.mxu0 %v813
    %v857 = vpop.f32.mrf.mxu0
    %v858 = vadd.f32 %v797, %v857
    %v859 = vpop.f32.mrf.mxu0
    %v860 = vpop.f32.mrf.mxu0
    %v861 = vadd.f32 %v797, %v860
    %v862 = vpop.f32.mrf.mxu0
    %863 = vdwg.mxu0
    %v864 = vld [vmem:[#allocation10] sm:$0xf]
    %v865 = vld [vmem:[#allocation10 + $0x4] sm:$0xf]
    %v866 = vpack.c.bf16 %v853, %v850
    %v867 = vpack.c.bf16 %v861, %v858
    %s868 = scalar_lea.vmem [#allocation11], 64
    %v869 = vld [vmem:[%s868] sm:$0xf]
    %v870 = vld [vmem:[%s868 + $0x4] sm:$0xf]
    %v871 = vld [vmem:[%s868 + $0x8] sm:$0xf]
    %v872 = vld [vmem:[%s868 + $0xc] sm:$0xf]
    %v877 = vunpack.c.l.b16 %v869
    %v878 = vunpack.c.l.b16 %v870
    %v879 = vunpack.c.l.b16 %v871
    %v880 = vunpack.c.l.b16 %v872
    %v881 = vpack.c.b16 %v878, %v877
    %v882 = vpack.c.b16 %v880, %v879
    %v886 = vsel %vm174, %v866, 0
    %v889 = vsel %vm174, %v867, 0
    %891 = vmatprep.subr.bf16.mxu0 0
    %892 = vmatpush1.bf16.msra.mxu0 0
    %893 = vmatprep.subr.bf16.mxu0 0
    %894 = vmatpush1.bf16.msra.mxu0 0
    %895 = vmatprep.subr.bf16.mxu0 0
    %896 = vmatpush1.bf16.msra.mxu0 0
    %897 = vmatprep.subr.bf16.mxu0 0
    %898 = vmatpush1.bf16.msra.mxu0 0
    %899 = vmatprep.subr.bf16.mxu0 0
    %900 = vmatpush1.bf16.msra.mxu0 0
    %901 = vmatprep.subr.bf16.mxu0 0
    %902 = vmatpush1.bf16.msra.mxu0 0
    %903 = vmatprep.subr.bf16.mxu0 0
    %904 = vmatpush1.bf16.msra.mxu0 %v882
    %905 = vmatprep.subr.bf16.mxu0 0
    %906 = vmatpush1.bf16.msra.mxu0 %v881
    %907 = vmatprep.subr.bf16.mxu0 0
    %908 = vmatpush2.bf16.msra.mxu0 0
    %909 = vmatprep.subr.bf16.mxu0 0
    %910 = vmatpush2.bf16.msra.mxu0 0
    %911 = vmatprep.subr.bf16.mxu0 0
    %912 = vmatpush2.bf16.msra.mxu0 0
    %913 = vmatprep.subr.bf16.mxu0 0
    %914 = vmatpush2.bf16.msra.mxu0 0
    %915 = vmatprep.subr.bf16.mxu0 0
    %916 = vmatpush2.bf16.msra.mxu0 0
    %917 = vmatprep.subr.bf16.mxu0 0
    %918 = vmatpush2.bf16.msra.mxu0 0
    %919 = vmatprep.subr.bf16.mxu0 0
    %920 = vmatpush2.bf16.msra.mxu0 0
    %921 = vmatprep.subr.bf16.mxu0 0
    %922 = vmatpush2.bf16.msra.mxu0 0
    %923 = vmatprep.mubr.bf16.mxu0 0
    %924 = vmatmul.mubr.bf16.gmra.mxu0 %v886
    %v925 = vpop.f32.mrf.mxu0
    %v926 = vadd.f32 0.0, %v925
    %v927 = vpop.f32.mrf.mxu0
    %v928 = vpop.f32.mrf.mxu0
    %v929 = vadd.f32 0.0, %v928
    %v930 = vpop.f32.mrf.mxu0
    %931 = vmatprep.mubr.bf16.mxu0 0
    %932 = vmatmul.mubr.bf16.gmra.mxu0 %v889
    %v933 = vpop.f32.mrf.mxu0
    %v934 = vadd.f32 0.0, %v933
    %v935 = vpop.f32.mrf.mxu0
    %v936 = vpop.f32.mrf.mxu0
    %v937 = vadd.f32 0.0, %v936
    %v938 = vpop.f32.mrf.mxu0
    %939 = vdwg.mxu0
    %v940 = vpack.c.bf16 %v929, %v926
    %v941 = vpack.c.bf16 %v937, %v934
    %s942 = scalar_lea.vmem [#allocation13], 4
    %v943 = vld [vmem:[%s942] sm:$0x1]
    %v945 = vlaneseq
    %v946 = vshrl.u32 %v945, 7
    %v947 = vsub.s32 0, %v946
    %v948 = vrot.slane %v943, %v947
    %v952 = vunpack.c.l.b16 %v864
    %v953 = vunpack.c.l.b16 %v865
    %v954 = vpack.c.b16 %v953, %v952
    %v956 = vsel %vm174, %v954, 0
    %958 = vmatprep.subr.bf16.mxu0 0
    %959 = vmatpush1.bf16.msra.mxu0 0
    %960 = vmatprep.subr.bf16.mxu0 0
    %961 = vmatpush1.bf16.msra.mxu0 0
    %962 = vmatprep.subr.bf16.mxu0 0
    %963 = vmatpush1.bf16.msra.mxu0 0
    %964 = vmatprep.subr.bf16.mxu0 0
    %965 = vmatpush1.bf16.msra.mxu0 0
    %966 = vmatprep.subr.bf16.mxu0 0
    %967 = vmatpush1.bf16.msra.mxu0 0
    %968 = vmatprep.subr.bf16.mxu0 0
    %969 = vmatpush1.bf16.msra.mxu0 0
    %970 = vmatprep.subr.bf16.mxu0 0
    %971 = vmatpush1.bf16.msra.mxu0 %v941
    %972 = vmatprep.subr.bf16.mxu0 0
    %973 = vmatpush1.bf16.msra.mxu0 %v940
    %974 = vmatprep.subr.bf16.mxu0 0
    %975 = vmatpush2.bf16.msra.mxu0 0
    %976 = vmatprep.subr.bf16.mxu0 0
    %977 = vmatpush2.bf16.msra.mxu0 0
    %978 = vmatprep.subr.bf16.mxu0 0
    %979 = vmatpush2.bf16.msra.mxu0 0
    %980 = vmatprep.subr.bf16.mxu0 0
    %981 = vmatpush2.bf16.msra.mxu0 0
    %982 = vmatprep.subr.bf16.mxu0 0
    %983 = vmatpush2.bf16.msra.mxu0 0
    %984 = vmatprep.subr.bf16.mxu0 0
    %985 = vmatpush2.bf16.msra.mxu0 0
    %986 = vmatprep.subr.bf16.mxu0 0
    %987 = vmatpush2.bf16.msra.mxu0 0
    %988 = vmatprep.subr.bf16.mxu0 0
    %989 = vmatpush2.bf16.msra.mxu0 0
    %990 = vmatprep.mubr.bf16.mxu0 0
    %991 = vmatmul.mubr.bf16.gmra.mxu0 %v956
    %v992 = vpop.f32.mrf.mxu0
    %v993 = vadd.f32 %v948, %v992
    %v994 = vpop.f32.mrf.mxu0
    %v995 = vpop.f32.mrf.mxu0
    %v996 = vadd.f32 %v948, %v995
    %v997 = vpop.f32.mrf.mxu0
    %998 = vdwg.mxu0
    %v999 = vpack.c.bf16 %v996, %v993
    %s1000 = scalar_lea.vmem [#allocation11], 80
    %v1001 = vld [vmem:[%s1000] sm:$0xf]
    %v1002 = vld [vmem:[%s1000 + $0x4] sm:$0xf]
    %v1003 = vld [vmem:[%s1000 + $0x8] sm:$0xf]
    %v1004 = vld [vmem:[%s1000 + $0xc] sm:$0xf]
    %v1009 = vunpack.c.l.b16 %v1001
    %v1010 = vunpack.c.l.b16 %v1002
    %v1011 = vunpack.c.l.b16 %v1003
    %v1012 = vunpack.c.l.b16 %v1004
    %v1013 = vpack.c.b16 %v1010, %v1009
    %v1014 = vpack.c.b16 %v1012, %v1011
    %v1018 = vsel %vm174, %v999, 0
    %1020 = vmatprep.subr.bf16.mxu0 0
    %1021 = vmatpush1.bf16.msra.mxu0 0
    %1022 = vmatprep.subr.bf16.mxu0 0
    %1023 = vmatpush1.bf16.msra.mxu0 0
    %1024 = vmatprep.subr.bf16.mxu0 0
    %1025 = vmatpush1.bf16.msra.mxu0 0
    %1026 = vmatprep.subr.bf16.mxu0 0
    %1027 = vmatpush1.bf16.msra.mxu0 0
    %1028 = vmatprep.subr.bf16.mxu0 0
    %1029 = vmatpush1.bf16.msra.mxu0 0
    %1030 = vmatprep.subr.bf16.mxu0 0
    %1031 = vmatpush1.bf16.msra.mxu0 0
    %1032 = vmatprep.subr.bf16.mxu0 0
    %1033 = vmatpush1.bf16.msra.mxu0 %v1014
    %1034 = vmatprep.subr.bf16.mxu0 0
    %1035 = vmatpush1.bf16.msra.mxu0 %v1013
    %1036 = vmatprep.subr.bf16.mxu0 0
    %1037 = vmatpush2.bf16.msra.mxu0 0
    %1038 = vmatprep.subr.bf16.mxu0 0
    %1039 = vmatpush2.bf16.msra.mxu0 0
    %1040 = vmatprep.subr.bf16.mxu0 0
    %1041 = vmatpush2.bf16.msra.mxu0 0
    %1042 = vmatprep.subr.bf16.mxu0 0
    %1043 = vmatpush2.bf16.msra.mxu0 0
    %1044 = vmatprep.subr.bf16.mxu0 0
    %1045 = vmatpush2.bf16.msra.mxu0 0
    %1046 = vmatprep.subr.bf16.mxu0 0
    %1047 = vmatpush2.bf16.msra.mxu0 0
    %1048 = vmatprep.subr.bf16.mxu0 0
    %1049 = vmatpush2.bf16.msra.mxu0 0
    %1050 = vmatprep.subr.bf16.mxu0 0
    %1051 = vmatpush2.bf16.msra.mxu0 0
    %1052 = vmatprep.mubr.bf16.mxu0 0
    %1053 = vmatmul.mubr.bf16.gmra.mxu0 %v1018
    %v1054 = vpop.f32.mrf.mxu0
    %v1055 = vadd.f32 0.0, %v1054
    %v1056 = vpop.f32.mrf.mxu0
    %v1057 = vpop.f32.mrf.mxu0
    %v1058 = vadd.f32 0.0, %v1057
    %v1059 = vpop.f32.mrf.mxu0
    %1060 = vdwg.mxu0
    %v1061 = vpack.c.bf16 %v1058, %v1055
    %s1062 = scalar_lea.vmem [#allocation13], 5
    %v1063 = vld [vmem:[%s1062] sm:$0x1]
    %v1065 = vlaneseq
    %v1066 = vshrl.u32 %v1065, 7
    %v1067 = vsub.s32 0, %v1066
    %v1068 = vrot.slane %v1063, %v1067
    %v1072 = vunpack.c.l.b16 %v144
    %v1073 = vunpack.c.l.b16 %v145
    %v1074 = vpack.c.b16 %v1073, %v1072
    %vm1075 = vcmask 130048
    %v1077 = vsel %vm1075, %v1074, 0
    %1079 = vmatprep.subr.bf16.mxu0 0
    %1080 = vmatpush1.bf16.msra.mxu0 0
    %1081 = vmatprep.subr.bf16.mxu0 0
    %1082 = vmatpush1.bf16.msra.mxu0 0
    %1083 = vmatprep.subr.bf16.mxu0 0
    %1084 = vmatpush1.bf16.msra.mxu0 0
    %1085 = vmatprep.subr.bf16.mxu0 0
    %1086 = vmatpush1.bf16.msra.mxu0 0
    %1087 = vmatprep.subr.bf16.mxu0 0
    %1088 = vmatpush1.bf16.msra.mxu0 0
    %1089 = vmatprep.subr.bf16.mxu0 0
    %1090 = vmatpush1.bf16.msra.mxu0 0
    %1091 = vmatprep.subr.bf16.mxu0 0
    %1092 = vmatpush1.bf16.msra.mxu0 0
    %1093 = vmatprep.subr.bf16.mxu0 0
    %1094 = vmatpush1.bf16.msra.mxu0 %v1061
    %1095 = vmatprep.subr.bf16.mxu0 0
    %1096 = vmatpush2.bf16.msra.mxu0 0
    %1097 = vmatprep.subr.bf16.mxu0 0
    %1098 = vmatpush2.bf16.msra.mxu0 0
    %1099 = vmatprep.subr.bf16.mxu0 0
    %1100 = vmatpush2.bf16.msra.mxu0 0
    %1101 = vmatprep.subr.bf16.mxu0 0
    %1102 = vmatpush2.bf16.msra.mxu0 0
    %1103 = vmatprep.subr.bf16.mxu0 0
    %1104 = vmatpush2.bf16.msra.mxu0 0
    %1105 = vmatprep.subr.bf16.mxu0 0
    %1106 = vmatpush2.bf16.msra.mxu0 0
    %1107 = vmatprep.subr.bf16.mxu0 0
    %1108 = vmatpush2.bf16.msra.mxu0 0
    %1109 = vmatprep.subr.bf16.mxu0 0
    %1110 = vmatpush2.bf16.msra.mxu0 0
    %1111 = vmatprep.mubr.bf16.mxu0 0
    %1112 = vmatmul.mubr.bf16.gmra.mxu0 %v1077
    %v1113 = vpop.f32.mrf.mxu0
    %v1114 = vadd.f32 %v1068, %v1113
    %v1115 = vpop.f32.mrf.mxu0
    %v1116 = vpop.f32.mrf.mxu0
    %v1117 = vadd.f32 %v1068, %v1116
    %v1118 = vpop.f32.mrf.mxu0
    %1119 = vdwg.mxu0
    %v1120 = vld [vmem:[%s6] sm:$0xf]
    %v1121 = vld [vmem:[%s6 + $0x4] sm:$0xf]
    %v1122 = vld [vmem:[%s6 + $0x8] sm:$0xf]
    %v1123 = vld [vmem:[%s6 + $0xc] sm:$0xf]
    %v1124 = vpack.c.bf16 %v1117, %v1114
    %s1125 = scalar_lea.vmem [#allocation11], 96
    %v1126 = vld [vmem:[%s1125] sm:$0xf]
    %v1127 = vld [vmem:[%s1125 + $0x4] sm:$0xf]
    %v1128 = vld [vmem:[%s1125 + $0x8] sm:$0xf]
    %v1129 = vld [vmem:[%s1125 + $0xc] sm:$0xf]
    %v1134 = vunpack.c.l.b16 %v1126
    %v1135 = vunpack.c.l.b16 %v1127
    %v1136 = vunpack.c.l.b16 %v1128
    %v1137 = vunpack.c.l.b16 %v1129
    %v1138 = vpack.c.b16 %v1135, %v1134
    %v1139 = vpack.c.b16 %v1137, %v1136
    %v1143 = vsel %vm174, %v1124, 0
    %1145 = vmatprep.subr.bf16.mxu0 0
    %1146 = vmatpush1.bf16.msra.mxu0 0
    %1147 = vmatprep.subr.bf16.mxu0 0
    %1148 = vmatpush1.bf16.msra.mxu0 0
    %1149 = vmatprep.subr.bf16.mxu0 0
    %1150 = vmatpush1.bf16.msra.mxu0 0
    %1151 = vmatprep.subr.bf16.mxu0 0
    %1152 = vmatpush1.bf16.msra.mxu0 0
    %1153 = vmatprep.subr.bf16.mxu0 0
    %1154 = vmatpush1.bf16.msra.mxu0 0
    %1155 = vmatprep.subr.bf16.mxu0 0
    %1156 = vmatpush1.bf16.msra.mxu0 0
    %1157 = vmatprep.subr.bf16.mxu0 0
    %1158 = vmatpush1.bf16.msra.mxu0 %v1139
    %1159 = vmatprep.subr.bf16.mxu0 0
    %1160 = vmatpush1.bf16.msra.mxu0 %v1138
    %1161 = vmatprep.subr.bf16.mxu0 0
    %1162 = vmatpush2.bf16.msra.mxu0 0
    %1163 = vmatprep.subr.bf16.mxu0 0
    %1164 = vmatpush2.bf16.msra.mxu0 0
    %1165 = vmatprep.subr.bf16.mxu0 0
    %1166 = vmatpush2.bf16.msra.mxu0 0
    %1167 = vmatprep.subr.bf16.mxu0 0
    %1168 = vmatpush2.bf16.msra.mxu0 0
    %1169 = vmatprep.subr.bf16.mxu0 0
    %1170 = vmatpush2.bf16.msra.mxu0 0
    %1171 = vmatprep.subr.bf16.mxu0 0
    %1172 = vmatpush2.bf16.msra.mxu0 0
    %1173 = vmatprep.subr.bf16.mxu0 0
    %1174 = vmatpush2.bf16.msra.mxu0 0
    %1175 = vmatprep.subr.bf16.mxu0 0
    %1176 = vmatpush2.bf16.msra.mxu0 0
    %1177 = vmatprep.mubr.bf16.mxu0 0
    %1178 = vmatmul.mubr.bf16.gmra.mxu0 %v1143
    %v1179 = vpop.f32.mrf.mxu0
    %v1180 = vadd.f32 0.0, %v1179
    %v1181 = vpop.f32.mrf.mxu0
    %v1182 = vpop.f32.mrf.mxu0
    %v1183 = vadd.f32 0.0, %v1182
    %v1184 = vpop.f32.mrf.mxu0
    %1185 = vdwg.mxu0
    %v1186 = vpack.c.bf16 %v1183, %v1180
    %s1187 = scalar_lea.vmem [#allocation11], 112
    %v1188 = vld [vmem:[%s1187] sm:$0xf]
    %v1189 = vld [vmem:[%s1187 + $0x4] sm:$0xf]
    %v1190 = vld [vmem:[%s1187 + $0x8] sm:$0xf]
    %v1191 = vld [vmem:[%s1187 + $0xc] sm:$0xf]
    %v1196 = vunpack.c.l.b16 %v1188
    %v1197 = vunpack.c.l.b16 %v1189
    %v1198 = vunpack.c.l.b16 %v1190
    %v1199 = vunpack.c.l.b16 %v1191
    %v1200 = vpack.c.b16 %v1197, %v1196
    %v1201 = vpack.c.b16 %v1199, %v1198
    %1204 = vmatprep.subr.bf16.mxu0 0
    %1205 = vmatpush1.bf16.msra.mxu0 0
    %1206 = vmatprep.subr.bf16.mxu0 0
    %1207 = vmatpush1.bf16.msra.mxu0 0
    %1208 = vmatprep.subr.bf16.mxu0 0
    %1209 = vmatpush1.bf16.msra.mxu0 0
    %1210 = vmatprep.subr.bf16.mxu0 0
    %1211 = vmatpush1.bf16.msra.mxu0 0
    %1212 = vmatprep.subr.bf16.mxu0 0
    %1213 = vmatpush1.bf16.msra.mxu0 0
    %1214 = vmatprep.subr.bf16.mxu0 0
    %1215 = vmatpush1.bf16.msra.mxu0 0
    %1216 = vmatprep.subr.bf16.mxu0 0
    %1217 = vmatpush1.bf16.msra.mxu0 %v1201
    %1218 = vmatprep.subr.bf16.mxu0 0
    %1219 = vmatpush1.bf16.msra.mxu0 %v1200
    %1220 = vmatprep.subr.bf16.mxu0 0
    %1221 = vmatpush2.bf16.msra.mxu0 0
    %1222 = vmatprep.subr.bf16.mxu0 0
    %1223 = vmatpush2.bf16.msra.mxu0 0
    %1224 = vmatprep.subr.bf16.mxu0 0
    %1225 = vmatpush2.bf16.msra.mxu0 0
    %1226 = vmatprep.subr.bf16.mxu0 0
    %1227 = vmatpush2.bf16.msra.mxu0 0
    %1228 = vmatprep.subr.bf16.mxu0 0
    %1229 = vmatpush2.bf16.msra.mxu0 0
    %1230 = vmatprep.subr.bf16.mxu0 0
    %1231 = vmatpush2.bf16.msra.mxu0 0
    %1232 = vmatprep.subr.bf16.mxu0 0
    %1233 = vmatpush2.bf16.msra.mxu0 0
    %1234 = vmatprep.subr.bf16.mxu0 0
    %1235 = vmatpush2.bf16.msra.mxu0 0
    %1236 = vmatprep.mubr.bf16.mxu0 0
    %1237 = vmatmul.mubr.bf16.gmra.mxu0 %v886
    %v1238 = vpop.f32.mrf.mxu0
    %v1239 = vadd.f32 0.0, %v1238
    %v1240 = vpop.f32.mrf.mxu0
    %v1241 = vpop.f32.mrf.mxu0
    %v1242 = vadd.f32 0.0, %v1241
    %v1243 = vpop.f32.mrf.mxu0
    %1244 = vmatprep.mubr.bf16.mxu0 0
    %1245 = vmatmul.mubr.bf16.gmra.mxu0 %v889
    %v1246 = vpop.f32.mrf.mxu0
    %v1247 = vadd.f32 0.0, %v1246
    %v1248 = vpop.f32.mrf.mxu0
    %v1249 = vpop.f32.mrf.mxu0
    %v1250 = vadd.f32 0.0, %v1249
    %v1251 = vpop.f32.mrf.mxu0
    %1252 = vdwg.mxu0
    %v1253 = vpack.c.bf16 %v1242, %v1239
    %v1254 = vpack.c.bf16 %v1250, %v1247
    %1255 = vmatprep.subr.bf16.mxu0 0
    %1256 = vmatpush1.bf16.msra.mxu0 0
    %1257 = vmatprep.subr.bf16.mxu0 0
    %1258 = vmatpush1.bf16.msra.mxu0 0
    %1259 = vmatprep.subr.bf16.mxu0 0
    %1260 = vmatpush1.bf16.msra.mxu0 0
    %1261 = vmatprep.subr.bf16.mxu0 0
    %1262 = vmatpush1.bf16.msra.mxu0 0
    %1263 = vmatprep.subr.bf16.mxu0 0
    %1264 = vmatpush1.bf16.msra.mxu0 0
    %1265 = vmatprep.subr.bf16.mxu0 0
    %1266 = vmatpush1.bf16.msra.mxu0 0
    %1267 = vmatprep.subr.bf16.mxu0 0
    %1268 = vmatpush1.bf16.msra.mxu0 %v1254
    %1269 = vmatprep.subr.bf16.mxu0 0
    %1270 = vmatpush1.bf16.msra.mxu0 %v1253
    %1271 = vmatprep.subr.bf16.mxu0 0
    %1272 = vmatpush2.bf16.msra.mxu0 0
    %1273 = vmatprep.subr.bf16.mxu0 0
    %1274 = vmatpush2.bf16.msra.mxu0 0
    %1275 = vmatprep.subr.bf16.mxu0 0
    %1276 = vmatpush2.bf16.msra.mxu0 0
    %1277 = vmatprep.subr.bf16.mxu0 0
    %1278 = vmatpush2.bf16.msra.mxu0 0
    %1279 = vmatprep.subr.bf16.mxu0 0
    %1280 = vmatpush2.bf16.msra.mxu0 0
    %1281 = vmatprep.subr.bf16.mxu0 0
    %1282 = vmatpush2.bf16.msra.mxu0 0
    %1283 = vmatprep.subr.bf16.mxu0 0
    %1284 = vmatpush2.bf16.msra.mxu0 0
    %1285 = vmatprep.subr.bf16.mxu0 0
    %1286 = vmatpush2.bf16.msra.mxu0 0
    %1287 = vmatprep.mubr.bf16.mxu0 0
    %1288 = vmatmul.mubr.bf16.gmra.mxu0 %v810
    %v1289 = vpop.f32.mrf.mxu0
    %v1290 = vadd.f32 0.0, %v1289
    %v1291 = vpop.f32.mrf.mxu0
    %v1292 = vpop.f32.mrf.mxu0
    %v1293 = vadd.f32 0.0, %v1292
    %v1294 = vpop.f32.mrf.mxu0
    %1295 = vmatprep.mubr.bf16.mxu0 0
    %1296 = vmatmul.mubr.bf16.gmra.mxu0 %v813
    %v1297 = vpop.f32.mrf.mxu0
    %v1298 = vadd.f32 0.0, %v1297
    %v1299 = vpop.f32.mrf.mxu0
    %v1300 = vpop.f32.mrf.mxu0
    %v1301 = vadd.f32 0.0, %v1300
    %v1302 = vpop.f32.mrf.mxu0
    %1303 = vdwg.mxu0
    %v1308 = vunpack.c.l.b16 %v1120
    %v1309 = vunpack.c.l.b16 %v1121
    %v1310 = vunpack.c.l.b16 %v1122
    %v1311 = vunpack.c.l.b16 %v1123
    %v1312 = vpack.c.b16 %v1309, %v1308
    %v1313 = vpack.c.b16 %v1311, %v1310
    %v1315 = vsel %vm1075, %v1312, 0
    %v1318 = vsel %vm1075, %v1313, 0
    %1320 = vmatprep.subr.bf16.mxu0 0
    %1321 = vmatpush1.bf16.msra.mxu0 0
    %1322 = vmatprep.subr.bf16.mxu0 0
    %1323 = vmatpush1.bf16.msra.mxu0 0
    %1324 = vmatprep.subr.bf16.mxu0 0
    %1325 = vmatpush1.bf16.msra.mxu0 0
    %1326 = vmatprep.subr.bf16.mxu0 0
    %1327 = vmatpush1.bf16.msra.mxu0 0
    %1328 = vmatprep.subr.bf16.mxu0 0
    %1329 = vmatpush1.bf16.msra.mxu0 0
    %1330 = vmatprep.subr.bf16.mxu0 0
    %1331 = vmatpush1.bf16.msra.mxu0 0
    %1332 = vmatprep.subr.bf16.mxu0 0
    %1333 = vmatpush1.bf16.msra.mxu0 0
    %1334 = vmatprep.subr.bf16.mxu0 0
    %1335 = vmatpush1.bf16.msra.mxu0 %v1186
    %1336 = vmatprep.subr.bf16.mxu0 0
    %1337 = vmatpush2.bf16.msra.mxu0 0
    %1338 = vmatprep.subr.bf16.mxu0 0
    %1339 = vmatpush2.bf16.msra.mxu0 0
    %1340 = vmatprep.subr.bf16.mxu0 0
    %1341 = vmatpush2.bf16.msra.mxu0 0
    %1342 = vmatprep.subr.bf16.mxu0 0
    %1343 = vmatpush2.bf16.msra.mxu0 0
    %1344 = vmatprep.subr.bf16.mxu0 0
    %1345 = vmatpush2.bf16.msra.mxu0 0
    %1346 = vmatprep.subr.bf16.mxu0 0
    %1347 = vmatpush2.bf16.msra.mxu0 0
    %1348 = vmatprep.subr.bf16.mxu0 0
    %1349 = vmatpush2.bf16.msra.mxu0 0
    %1350 = vmatprep.subr.bf16.mxu0 0
    %1351 = vmatpush2.bf16.msra.mxu0 0
    %1352 = vmatprep.mubr.bf16.mxu0 0
    %1353 = vmatmul.mubr.bf16.gmra.mxu0 %v1315
    %v1354 = vpop.f32.mrf.mxu0
    %v1355 = vadd.f32 %v1290, %v1354
    %v1356 = vpop.f32.mrf.mxu0
    %v1357 = vpop.f32.mrf.mxu0
    %v1358 = vadd.f32 %v1293, %v1357
    %v1359 = vpop.f32.mrf.mxu0
    %1360 = vmatprep.mubr.bf16.mxu0 0
    %1361 = vmatmul.mubr.bf16.gmra.mxu0 %v1318
    %v1362 = vpop.f32.mrf.mxu0
    %v1363 = vadd.f32 %v1298, %v1362
    %v1364 = vpop.f32.mrf.mxu0
    %v1365 = vpop.f32.mrf.mxu0
    %v1366 = vadd.f32 %v1301, %v1365
    %v1367 = vpop.f32.mrf.mxu0
    %1368 = vdwg.mxu0
    %s1369 = scalar_lea.vmem [#allocation13], 6
    %v1370 = vld [vmem:[%s1369] sm:$0x1]
    %v1372 = vlaneseq
    %v1373 = vshrl.u32 %v1372, 7
    %v1374 = vsub.s32 0, %v1373
    %v1375 = vrot.slane %v1370, %v1374
    %v1377 = vadd.f32 %v1355, %v1375
    %v1378 = vadd.f32 %v1358, %v1375
    %v1379 = vadd.f32 %v1363, %v1375
    %v1380 = vadd.f32 %v1366, %v1375
    %v1381 = vpack.c.bf16 %v1378, %v1377
    %v1382 = vpack.c.bf16 %v1380, %v1379
    %s1383 = scalar_lea.vmem [#allocation11], 128
    %v1384 = vld [vmem:[%s1383] sm:$0xf]
    %v1385 = vld [vmem:[%s1383 + $0x4] sm:$0xf]
    %v1386 = vld [vmem:[%s1383 + $0x8] sm:$0xf]
    %v1387 = vld [vmem:[%s1383 + $0xc] sm:$0xf]
    %v1392 = vunpack.c.l.b16 %v1384
    %v1393 = vunpack.c.l.b16 %v1385
    %v1394 = vunpack.c.l.b16 %v1386
    %v1395 = vunpack.c.l.b16 %v1387
    %v1396 = vpack.c.b16 %v1393, %v1392
    %v1397 = vpack.c.b16 %v1395, %v1394
    %v1401 = vsel %vm174, %v1381, 0
    %v1404 = vsel %vm174, %v1382, 0
    %1406 = vmatprep.subr.bf16.mxu0 0
    %1407 = vmatpush1.bf16.msra.mxu0 0
    %1408 = vmatprep.subr.bf16.mxu0 0
    %1409 = vmatpush1.bf16.msra.mxu0 0
    %1410 = vmatprep.subr.bf16.mxu0 0
    %1411 = vmatpush1.bf16.msra.mxu0 0
    %1412 = vmatprep.subr.bf16.mxu0 0
    %1413 = vmatpush1.bf16.msra.mxu0 0
    %1414 = vmatprep.subr.bf16.mxu0 0
    %1415 = vmatpush1.bf16.msra.mxu0 0
    %1416 = vmatprep.subr.bf16.mxu0 0
    %1417 = vmatpush1.bf16.msra.mxu0 0
    %1418 = vmatprep.subr.bf16.mxu0 0
    %1419 = vmatpush1.bf16.msra.mxu0 %v1397
    %1420 = vmatprep.subr.bf16.mxu0 0
    %1421 = vmatpush1.bf16.msra.mxu0 %v1396
    %1422 = vmatprep.subr.bf16.mxu0 0
    %1423 = vmatpush2.bf16.msra.mxu0 0
    %1424 = vmatprep.subr.bf16.mxu0 0
    %1425 = vmatpush2.bf16.msra.mxu0 0
    %1426 = vmatprep.subr.bf16.mxu0 0
    %1427 = vmatpush2.bf16.msra.mxu0 0
    %1428 = vmatprep.subr.bf16.mxu0 0
    %1429 = vmatpush2.bf16.msra.mxu0 0
    %1430 = vmatprep.subr.bf16.mxu0 0
    %1431 = vmatpush2.bf16.msra.mxu0 0
    %1432 = vmatprep.subr.bf16.mxu0 0
    %1433 = vmatpush2.bf16.msra.mxu0 0
    %1434 = vmatprep.subr.bf16.mxu0 0
    %1435 = vmatpush2.bf16.msra.mxu0 0
    %1436 = vmatprep.subr.bf16.mxu0 0
    %1437 = vmatpush2.bf16.msra.mxu0 0
    %1438 = vmatprep.mubr.bf16.mxu0 0
    %1439 = vmatmul.mubr.bf16.gmra.mxu0 %v1401
    %v1440 = vpop.f32.mrf.mxu0
    %v1441 = vadd.f32 0.0, %v1440
    %v1442 = vpop.f32.mrf.mxu0
    %v1443 = vpop.f32.mrf.mxu0
    %v1444 = vadd.f32 0.0, %v1443
    %v1445 = vpop.f32.mrf.mxu0
    %1446 = vmatprep.mubr.bf16.mxu0 0
    %1447 = vmatmul.mubr.bf16.gmra.mxu0 %v1404
    %v1448 = vpop.f32.mrf.mxu0
    %v1449 = vadd.f32 0.0, %v1448
    %v1450 = vpop.f32.mrf.mxu0
    %v1451 = vpop.f32.mrf.mxu0
    %v1452 = vadd.f32 0.0, %v1451
    %v1453 = vpop.f32.mrf.mxu0
    %1454 = vdwg.mxu0
    %v1455 = vpack.c.bf16 %v1444, %v1441
    %v1456 = vpack.c.bf16 %v1452, %v1449
    %s1457 = scalar_lea.vmem [#allocation13], 8
    %v1458 = vld [vmem:[%s1457] sm:$0x1]
    %v1460 = vlaneseq
    %v1461 = vshrl.u32 %v1460, 7
    %v1462 = vsub.s32 0, %v1461
    %v1463 = vrot.slane %v1458, %v1462
    %1465 = vmatprep.subr.bf16.mxu0 0
    %1466 = vmatpush1.bf16.msra.mxu0 0
    %1467 = vmatprep.subr.bf16.mxu0 0
    %1468 = vmatpush1.bf16.msra.mxu0 0
    %1469 = vmatprep.subr.bf16.mxu0 0
    %1470 = vmatpush1.bf16.msra.mxu0 0
    %1471 = vmatprep.subr.bf16.mxu0 0
    %1472 = vmatpush1.bf16.msra.mxu0 0
    %1473 = vmatprep.subr.bf16.mxu0 0
    %1474 = vmatpush1.bf16.msra.mxu0 0
    %1475 = vmatprep.subr.bf16.mxu0 0
    %1476 = vmatpush1.bf16.msra.mxu0 0
    %1477 = vmatprep.subr.bf16.mxu0 0
    %1478 = vmatpush1.bf16.msra.mxu0 %v1456
    %1479 = vmatprep.subr.bf16.mxu0 0
    %1480 = vmatpush1.bf16.msra.mxu0 %v1455
    %1481 = vmatprep.subr.bf16.mxu0 0
    %1482 = vmatpush2.bf16.msra.mxu0 0
    %1483 = vmatprep.subr.bf16.mxu0 0
    %1484 = vmatpush2.bf16.msra.mxu0 0
    %1485 = vmatprep.subr.bf16.mxu0 0
    %1486 = vmatpush2.bf16.msra.mxu0 0
    %1487 = vmatprep.subr.bf16.mxu0 0
    %1488 = vmatpush2.bf16.msra.mxu0 0
    %1489 = vmatprep.subr.bf16.mxu0 0
    %1490 = vmatpush2.bf16.msra.mxu0 0
    %1491 = vmatprep.subr.bf16.mxu0 0
    %1492 = vmatpush2.bf16.msra.mxu0 0
    %1493 = vmatprep.subr.bf16.mxu0 0
    %1494 = vmatpush2.bf16.msra.mxu0 0
    %1495 = vmatprep.subr.bf16.mxu0 0
    %1496 = vmatpush2.bf16.msra.mxu0 0
    %1497 = vmatprep.mubr.bf16.mxu0 0
    %1498 = vmatmul.mubr.bf16.gmra.mxu0 %v810
    %v1499 = vpop.f32.mrf.mxu0
    %v1500 = vadd.f32 %v1463, %v1499
    %v1501 = vpop.f32.mrf.mxu0
    %v1502 = vpop.f32.mrf.mxu0
    %v1503 = vadd.f32 %v1463, %v1502
    %v1504 = vpop.f32.mrf.mxu0
    %1505 = vmatprep.mubr.bf16.mxu0 0
    %1506 = vmatmul.mubr.bf16.gmra.mxu0 %v813
    %v1507 = vpop.f32.mrf.mxu0
    %v1508 = vadd.f32 %v1463, %v1507
    %v1509 = vpop.f32.mrf.mxu0
    %v1510 = vpop.f32.mrf.mxu0
    %v1511 = vadd.f32 %v1463, %v1510
    %v1512 = vpop.f32.mrf.mxu0
    %1513 = vdwg.mxu0
    %v1514 = vpack.c.bf16 %v1503, %v1500
    %v1515 = vpack.c.bf16 %v1511, %v1508
    %s1516 = scalar_lea.vmem [#allocation11], 144
    %v1517 = vld [vmem:[%s1516] sm:$0xf]
    %v1518 = vld [vmem:[%s1516 + $0x4] sm:$0xf]
    %v1519 = vld [vmem:[%s1516 + $0x8] sm:$0xf]
    %v1520 = vld [vmem:[%s1516 + $0xc] sm:$0xf]
    %v1525 = vunpack.c.l.b16 %v1517
    %v1526 = vunpack.c.l.b16 %v1518
    %v1527 = vunpack.c.l.b16 %v1519
    %v1528 = vunpack.c.l.b16 %v1520
    %v1529 = vpack.c.b16 %v1526, %v1525
    %v1530 = vpack.c.b16 %v1528, %v1527
    %v1534 = vsel %vm174, %v1514, 0
    %v1537 = vsel %vm174, %v1515, 0
    %1539 = vmatprep.subr.bf16.mxu0 0
    %1540 = vmatpush1.bf16.msra.mxu0 0
    %1541 = vmatprep.subr.bf16.mxu0 0
    %1542 = vmatpush1.bf16.msra.mxu0 0
    %1543 = vmatprep.subr.bf16.mxu0 0
    %1544 = vmatpush1.bf16.msra.mxu0 0
    %1545 = vmatprep.subr.bf16.mxu0 0
    %1546 = vmatpush1.bf16.msra.mxu0 0
    %1547 = vmatprep.subr.bf16.mxu0 0
    %1548 = vmatpush1.bf16.msra.mxu0 0
    %1549 = vmatprep.subr.bf16.mxu0 0
    %1550 = vmatpush1.bf16.msra.mxu0 0
    %1551 = vmatprep.subr.bf16.mxu0 0
    %1552 = vmatpush1.bf16.msra.mxu0 %v1530
    %1553 = vmatprep.subr.bf16.mxu0 0
    %1554 = vmatpush1.bf16.msra.mxu0 %v1529
    %1555 = vmatprep.subr.bf16.mxu0 0
    %1556 = vmatpush2.bf16.msra.mxu0 0
    %1557 = vmatprep.subr.bf16.mxu0 0
    %1558 = vmatpush2.bf16.msra.mxu0 0
    %1559 = vmatprep.subr.bf16.mxu0 0
    %1560 = vmatpush2.bf16.msra.mxu0 0
    %1561 = vmatprep.subr.bf16.mxu0 0
    %1562 = vmatpush2.bf16.msra.mxu0 0
    %1563 = vmatprep.subr.bf16.mxu0 0
    %1564 = vmatpush2.bf16.msra.mxu0 0
    %1565 = vmatprep.subr.bf16.mxu0 0
    %1566 = vmatpush2.bf16.msra.mxu0 0
    %1567 = vmatprep.subr.bf16.mxu0 0
    %1568 = vmatpush2.bf16.msra.mxu0 0
    %1569 = vmatprep.subr.bf16.mxu0 0
    %1570 = vmatpush2.bf16.msra.mxu0 0
    %1571 = vmatprep.mubr.bf16.mxu0 0
    %1572 = vmatmul.mubr.bf16.gmra.mxu0 %v1534
    %v1573 = vpop.f32.mrf.mxu0
    %v1574 = vadd.f32 0.0, %v1573
    %v1575 = vpop.f32.mrf.mxu0
    %v1576 = vpop.f32.mrf.mxu0
    %v1577 = vadd.f32 0.0, %v1576
    %v1578 = vpop.f32.mrf.mxu0
    %1579 = vmatprep.mubr.bf16.mxu0 0
    %1580 = vmatmul.mubr.bf16.gmra.mxu0 %v1537
    %v1581 = vpop.f32.mrf.mxu0
    %v1582 = vadd.f32 0.0, %v1581
    %v1583 = vpop.f32.mrf.mxu0
    %v1584 = vpop.f32.mrf.mxu0
    %v1585 = vadd.f32 0.0, %v1584
    %v1586 = vpop.f32.mrf.mxu0
    %1587 = vdwg.mxu0
    %v1588 = vpack.c.bf16 %v1577, %v1574
    %v1589 = vpack.c.bf16 %v1585, %v1582
    %s1590 = scalar_lea.vmem [#allocation13], 9
    %v1591 = vld [vmem:[%s1590] sm:$0x1]
    %v1593 = vlaneseq
    %v1594 = vshrl.u32 %v1593, 7
    %v1595 = vsub.s32 0, %v1594
    %v1596 = vrot.slane %v1591, %v1595
    %1598 = vmatprep.subr.bf16.mxu0 0
    %1599 = vmatpush1.bf16.msra.mxu0 0
    %1600 = vmatprep.subr.bf16.mxu0 0
    %1601 = vmatpush1.bf16.msra.mxu0 0
    %1602 = vmatprep.subr.bf16.mxu0 0
    %1603 = vmatpush1.bf16.msra.mxu0 0
    %1604 = vmatprep.subr.bf16.mxu0 0
    %1605 = vmatpush1.bf16.msra.mxu0 0
    %1606 = vmatprep.subr.bf16.mxu0 0
    %1607 = vmatpush1.bf16.msra.mxu0 0
    %1608 = vmatprep.subr.bf16.mxu0 0
    %1609 = vmatpush1.bf16.msra.mxu0 0
    %1610 = vmatprep.subr.bf16.mxu0 0
    %1611 = vmatpush1.bf16.msra.mxu0 %v1589
    %1612 = vmatprep.subr.bf16.mxu0 0
    %1613 = vmatpush1.bf16.msra.mxu0 %v1588
    %1614 = vmatprep.subr.bf16.mxu0 0
    %1615 = vmatpush2.bf16.msra.mxu0 0
    %1616 = vmatprep.subr.bf16.mxu0 0
    %1617 = vmatpush2.bf16.msra.mxu0 0
    %1618 = vmatprep.subr.bf16.mxu0 0
    %1619 = vmatpush2.bf16.msra.mxu0 0
    %1620 = vmatprep.subr.bf16.mxu0 0
    %1621 = vmatpush2.bf16.msra.mxu0 0
    %1622 = vmatprep.subr.bf16.mxu0 0
    %1623 = vmatpush2.bf16.msra.mxu0 0
    %1624 = vmatprep.subr.bf16.mxu0 0
    %1625 = vmatpush2.bf16.msra.mxu0 0
    %1626 = vmatprep.subr.bf16.mxu0 0
    %1627 = vmatpush2.bf16.msra.mxu0 0
    %1628 = vmatprep.subr.bf16.mxu0 0
    %1629 = vmatpush2.bf16.msra.mxu0 0
    %1630 = vmatprep.mubr.bf16.mxu0 0
    %1631 = vmatmul.mubr.bf16.gmra.mxu0 %v810
    %v1632 = vpop.f32.mrf.mxu0
    %v1633 = vadd.f32 %v1596, %v1632
    %v1634 = vpop.f32.mrf.mxu0
    %v1635 = vpop.f32.mrf.mxu0
    %v1636 = vadd.f32 %v1596, %v1635
    %v1637 = vpop.f32.mrf.mxu0
    %1638 = vmatprep.mubr.bf16.mxu0 0
    %1639 = vmatmul.mubr.bf16.gmra.mxu0 %v813
    %v1640 = vpop.f32.mrf.mxu0
    %v1641 = vadd.f32 %v1596, %v1640
    %v1642 = vpop.f32.mrf.mxu0
    %v1643 = vpop.f32.mrf.mxu0
    %v1644 = vadd.f32 %v1596, %v1643
    %v1645 = vpop.f32.mrf.mxu0
    %1646 = vdwg.mxu0
    %v1647 = vpack.c.bf16 %v1636, %v1633
    %v1648 = vpack.c.bf16 %v1644, %v1641
    %s1649 = scalar_lea.vmem [#allocation11], 160
    %v1650 = vld [vmem:[%s1649] sm:$0xf]
    %v1651 = vld [vmem:[%s1649 + $0x4] sm:$0xf]
    %v1652 = vld [vmem:[%s1649 + $0x8] sm:$0xf]
    %v1653 = vld [vmem:[%s1649 + $0xc] sm:$0xf]
    %v1658 = vunpack.c.l.b16 %v1650
    %v1659 = vunpack.c.l.b16 %v1651
    %v1660 = vunpack.c.l.b16 %v1652
    %v1661 = vunpack.c.l.b16 %v1653
    %v1662 = vpack.c.b16 %v1659, %v1658
    %v1663 = vpack.c.b16 %v1661, %v1660
    %v1667 = vsel %vm174, %v1647, 0
    %v1670 = vsel %vm174, %v1648, 0
    %1672 = vmatprep.subr.bf16.mxu0 0
    %1673 = vmatpush1.bf16.msra.mxu0 0
    %1674 = vmatprep.subr.bf16.mxu0 0
    %1675 = vmatpush1.bf16.msra.mxu0 0
    %1676 = vmatprep.subr.bf16.mxu0 0
    %1677 = vmatpush1.bf16.msra.mxu0 0
    %1678 = vmatprep.subr.bf16.mxu0 0
    %1679 = vmatpush1.bf16.msra.mxu0 0
    %1680 = vmatprep.subr.bf16.mxu0 0
    %1681 = vmatpush1.bf16.msra.mxu0 0
    %1682 = vmatprep.subr.bf16.mxu0 0
    %1683 = vmatpush1.bf16.msra.mxu0 0
    %1684 = vmatprep.subr.bf16.mxu0 0
    %1685 = vmatpush1.bf16.msra.mxu0 %v1663
    %1686 = vmatprep.subr.bf16.mxu0 0
    %1687 = vmatpush1.bf16.msra.mxu0 %v1662
    %1688 = vmatprep.subr.bf16.mxu0 0
    %1689 = vmatpush2.bf16.msra.mxu0 0
    %1690 = vmatprep.subr.bf16.mxu0 0
    %1691 = vmatpush2.bf16.msra.mxu0 0
    %1692 = vmatprep.subr.bf16.mxu0 0
    %1693 = vmatpush2.bf16.msra.mxu0 0
    %1694 = vmatprep.subr.bf16.mxu0 0
    %1695 = vmatpush2.bf16.msra.mxu0 0
    %1696 = vmatprep.subr.bf16.mxu0 0
    %1697 = vmatpush2.bf16.msra.mxu0 0
    %1698 = vmatprep.subr.bf16.mxu0 0
    %1699 = vmatpush2.bf16.msra.mxu0 0
    %1700 = vmatprep.subr.bf16.mxu0 0
    %1701 = vmatpush2.bf16.msra.mxu0 0
    %1702 = vmatprep.subr.bf16.mxu0 0
    %1703 = vmatpush2.bf16.msra.mxu0 0
    %1704 = vmatprep.mubr.bf16.mxu0 0
    %1705 = vmatmul.mubr.bf16.gmra.mxu0 %v1667
    %v1706 = vpop.f32.mrf.mxu0
    %v1707 = vadd.f32 0.0, %v1706
    %v1708 = vpop.f32.mrf.mxu0
    %v1709 = vpop.f32.mrf.mxu0
    %v1710 = vadd.f32 0.0, %v1709
    %v1711 = vpop.f32.mrf.mxu0
    %1712 = vmatprep.mubr.bf16.mxu0 0
    %1713 = vmatmul.mubr.bf16.gmra.mxu0 %v1670
    %v1714 = vpop.f32.mrf.mxu0
    %v1715 = vadd.f32 0.0, %v1714
    %v1716 = vpop.f32.mrf.mxu0
    %v1717 = vpop.f32.mrf.mxu0
    %v1718 = vadd.f32 0.0, %v1717
    %v1719 = vpop.f32.mrf.mxu0
    %1720 = vdwg.mxu0
    %v1721 = vpack.c.bf16 %v1710, %v1707
    %v1722 = vpack.c.bf16 %v1718, %v1715
    %s1723 = scalar_lea.vmem [#allocation13], 10
    %v1724 = vld [vmem:[%s1723] sm:$0x1]
    %v1726 = vlaneseq
    %v1727 = vshrl.u32 %v1726, 7
    %v1728 = vsub.s32 0, %v1727
    %v1729 = vrot.slane %v1724, %v1728
    %1731 = vmatprep.subr.bf16.mxu0 0
    %1732 = vmatpush1.bf16.msra.mxu0 0
    %1733 = vmatprep.subr.bf16.mxu0 0
    %1734 = vmatpush1.bf16.msra.mxu0 0
    %1735 = vmatprep.subr.bf16.mxu0 0
    %1736 = vmatpush1.bf16.msra.mxu0 0
    %1737 = vmatprep.subr.bf16.mxu0 0
    %1738 = vmatpush1.bf16.msra.mxu0 0
    %1739 = vmatprep.subr.bf16.mxu0 0
    %1740 = vmatpush1.bf16.msra.mxu0 0
    %1741 = vmatprep.subr.bf16.mxu0 0
    %1742 = vmatpush1.bf16.msra.mxu0 0
    %1743 = vmatprep.subr.bf16.mxu0 0
    %1744 = vmatpush1.bf16.msra.mxu0 %v1722
    %1745 = vmatprep.subr.bf16.mxu0 0
    %1746 = vmatpush1.bf16.msra.mxu0 %v1721
    %1747 = vmatprep.subr.bf16.mxu0 0
    %1748 = vmatpush2.bf16.msra.mxu0 0
    %1749 = vmatprep.subr.bf16.mxu0 0
    %1750 = vmatpush2.bf16.msra.mxu0 0
    %1751 = vmatprep.subr.bf16.mxu0 0
    %1752 = vmatpush2.bf16.msra.mxu0 0
    %1753 = vmatprep.subr.bf16.mxu0 0
    %1754 = vmatpush2.bf16.msra.mxu0 0
    %1755 = vmatprep.subr.bf16.mxu0 0
    %1756 = vmatpush2.bf16.msra.mxu0 0
    %1757 = vmatprep.subr.bf16.mxu0 0
    %1758 = vmatpush2.bf16.msra.mxu0 0
    %1759 = vmatprep.subr.bf16.mxu0 0
    %1760 = vmatpush2.bf16.msra.mxu0 0
    %1761 = vmatprep.subr.bf16.mxu0 0
    %1762 = vmatpush2.bf16.msra.mxu0 0
    %1763 = vmatprep.mubr.bf16.mxu0 0
    %1764 = vmatmul.mubr.bf16.gmra.mxu0 %v810
    %v1765 = vpop.f32.mrf.mxu0
    %v1766 = vadd.f32 %v1729, %v1765
    %v1767 = vpop.f32.mrf.mxu0
    %v1768 = vpop.f32.mrf.mxu0
    %v1769 = vadd.f32 %v1729, %v1768
    %v1770 = vpop.f32.mrf.mxu0
    %1771 = vmatprep.mubr.bf16.mxu0 0
    %1772 = vmatmul.mubr.bf16.gmra.mxu0 %v813
    %v1773 = vpop.f32.mrf.mxu0
    %v1774 = vadd.f32 %v1729, %v1773
    %v1775 = vpop.f32.mrf.mxu0
    %v1776 = vpop.f32.mrf.mxu0
    %v1777 = vadd.f32 %v1729, %v1776
    %v1778 = vpop.f32.mrf.mxu0
    %1779 = vdwg.mxu0
    %v1780 = vld [vmem:[%s7] sm:$0xf]
    %v1781 = vld [vmem:[%s7 + $0x4] sm:$0xf]
    %v1782 = vld [vmem:[%s7 + $0x8] sm:$0xf]
    %v1783 = vld [vmem:[%s7 + $0xc] sm:$0xf]
    %v1784 = vld [vmem:[%s7 + $0x10] sm:$0xf]
    %v1785 = vld [vmem:[%s7 + $0x14] sm:$0xf]
    %v1786 = vld [vmem:[%s7 + $0x18] sm:$0xf]
    %v1787 = vld [vmem:[%s7 + $0x1c] sm:$0xf]
    %v1788 = vpack.c.bf16 %v1769, %v1766
    %v1789 = vpack.c.bf16 %v1777, %v1774
    %s1790 = scalar_lea.vmem [#allocation11], 176
    %v1791 = vld [vmem:[%s1790] sm:$0xf]
    %v1792 = vld [vmem:[%s1790 + $0x4] sm:$0xf]
    %v1793 = vld [vmem:[%s1790 + $0x8] sm:$0xf]
    %v1794 = vld [vmem:[%s1790 + $0xc] sm:$0xf]
    %v1799 = vunpack.c.l.b16 %v1791
    %v1800 = vunpack.c.l.b16 %v1792
    %v1801 = vunpack.c.l.b16 %v1793
    %v1802 = vunpack.c.l.b16 %v1794
    %v1803 = vpack.c.b16 %v1800, %v1799
    %v1804 = vpack.c.b16 %v1802, %v1801
    %v1808 = vsel %vm174, %v1788, 0
    %v1811 = vsel %vm174, %v1789, 0
    %1813 = vmatprep.subr.bf16.mxu0 0
    %1814 = vmatpush1.bf16.msra.mxu0 0
    %1815 = vmatprep.subr.bf16.mxu0 0
    %1816 = vmatpush1.bf16.msra.mxu0 0
    %1817 = vmatprep.subr.bf16.mxu0 0
    %1818 = vmatpush1.bf16.msra.mxu0 0
    %1819 = vmatprep.subr.bf16.mxu0 0
    %1820 = vmatpush1.bf16.msra.mxu0 0
    %1821 = vmatprep.subr.bf16.mxu0 0
    %1822 = vmatpush1.bf16.msra.mxu0 0
    %1823 = vmatprep.subr.bf16.mxu0 0
    %1824 = vmatpush1.bf16.msra.mxu0 0
    %1825 = vmatprep.subr.bf16.mxu0 0
    %1826 = vmatpush1.bf16.msra.mxu0 %v1804
    %1827 = vmatprep.subr.bf16.mxu0 0
    %1828 = vmatpush1.bf16.msra.mxu0 %v1803
    %1829 = vmatprep.subr.bf16.mxu0 0
    %1830 = vmatpush2.bf16.msra.mxu0 0
    %1831 = vmatprep.subr.bf16.mxu0 0
    %1832 = vmatpush2.bf16.msra.mxu0 0
    %1833 = vmatprep.subr.bf16.mxu0 0
    %1834 = vmatpush2.bf16.msra.mxu0 0
    %1835 = vmatprep.subr.bf16.mxu0 0
    %1836 = vmatpush2.bf16.msra.mxu0 0
    %1837 = vmatprep.subr.bf16.mxu0 0
    %1838 = vmatpush2.bf16.msra.mxu0 0
    %1839 = vmatprep.subr.bf16.mxu0 0
    %1840 = vmatpush2.bf16.msra.mxu0 0
    %1841 = vmatprep.subr.bf16.mxu0 0
    %1842 = vmatpush2.bf16.msra.mxu0 0
    %1843 = vmatprep.subr.bf16.mxu0 0
    %1844 = vmatpush2.bf16.msra.mxu0 0
    %1845 = vmatprep.mubr.bf16.mxu0 0
    %1846 = vmatmul.mubr.bf16.gmra.mxu0 %v1808
    %v1847 = vpop.f32.mrf.mxu0
    %v1848 = vadd.f32 0.0, %v1847
    %v1849 = vpop.f32.mrf.mxu0
    %v1850 = vpop.f32.mrf.mxu0
    %v1851 = vadd.f32 0.0, %v1850
    %v1852 = vpop.f32.mrf.mxu0
    %1853 = vmatprep.mubr.bf16.mxu0 0
    %1854 = vmatmul.mubr.bf16.gmra.mxu0 %v1811
    %v1855 = vpop.f32.mrf.mxu0
    %v1856 = vadd.f32 0.0, %v1855
    %v1857 = vpop.f32.mrf.mxu0
    %v1858 = vpop.f32.mrf.mxu0
    %v1859 = vadd.f32 0.0, %v1858
    %v1860 = vpop.f32.mrf.mxu0
    %1861 = vdwg.mxu0
    %v1862 = vpack.c.bf16 %v1851, %v1848
    %v1863 = vpack.c.bf16 %v1859, %v1856
    %s1864 = scalar_lea.vmem [#allocation11], 192
    %v1865 = vld [vmem:[%s1864] sm:$0xf]
    %v1866 = vld [vmem:[%s1864 + $0x4] sm:$0xf]
    %v1867 = vld [vmem:[%s1864 + $0x8] sm:$0xf]
    %v1868 = vld [vmem:[%s1864 + $0xc] sm:$0xf]
    %v1873 = vunpack.c.l.b16 %v1865
    %v1874 = vunpack.c.l.b16 %v1866
    %v1875 = vunpack.c.l.b16 %v1867
    %v1876 = vunpack.c.l.b16 %v1868
    %v1877 = vpack.c.b16 %v1874, %v1873
    %v1878 = vpack.c.b16 %v1876, %v1875
    %1881 = vmatprep.subr.bf16.mxu0 0
    %1882 = vmatpush1.bf16.msra.mxu0 0
    %1883 = vmatprep.subr.bf16.mxu0 0
    %1884 = vmatpush1.bf16.msra.mxu0 0
    %1885 = vmatprep.subr.bf16.mxu0 0
    %1886 = vmatpush1.bf16.msra.mxu0 0
    %1887 = vmatprep.subr.bf16.mxu0 0
    %1888 = vmatpush1.bf16.msra.mxu0 0
    %1889 = vmatprep.subr.bf16.mxu0 0
    %1890 = vmatpush1.bf16.msra.mxu0 0
    %1891 = vmatprep.subr.bf16.mxu0 0
    %1892 = vmatpush1.bf16.msra.mxu0 0
    %1893 = vmatprep.subr.bf16.mxu0 0
    %1894 = vmatpush1.bf16.msra.mxu0 %v1878
    %1895 = vmatprep.subr.bf16.mxu0 0
    %1896 = vmatpush1.bf16.msra.mxu0 %v1877
    %1897 = vmatprep.subr.bf16.mxu0 0
    %1898 = vmatpush2.bf16.msra.mxu0 0
    %1899 = vmatprep.subr.bf16.mxu0 0
    %1900 = vmatpush2.bf16.msra.mxu0 0
    %1901 = vmatprep.subr.bf16.mxu0 0
    %1902 = vmatpush2.bf16.msra.mxu0 0
    %1903 = vmatprep.subr.bf16.mxu0 0
    %1904 = vmatpush2.bf16.msra.mxu0 0
    %1905 = vmatprep.subr.bf16.mxu0 0
    %1906 = vmatpush2.bf16.msra.mxu0 0
    %1907 = vmatprep.subr.bf16.mxu0 0
    %1908 = vmatpush2.bf16.msra.mxu0 0
    %1909 = vmatprep.subr.bf16.mxu0 0
    %1910 = vmatpush2.bf16.msra.mxu0 0
    %1911 = vmatprep.subr.bf16.mxu0 0
    %1912 = vmatpush2.bf16.msra.mxu0 0
    %1913 = vmatprep.mubr.bf16.mxu0 0
    %1914 = vmatmul.mubr.bf16.gmra.mxu0 %v562
    %v1915 = vpop.f32.mrf.mxu0
    %v1916 = vadd.f32 0.0, %v1915
    %v1917 = vpop.f32.mrf.mxu0
    %v1918 = vpop.f32.mrf.mxu0
    %v1919 = vadd.f32 0.0, %v1918
    %v1920 = vpop.f32.mrf.mxu0
    %1921 = vmatprep.mubr.bf16.mxu0 0
    %1922 = vmatmul.mubr.bf16.gmra.mxu0 %v565
    %v1923 = vpop.f32.mrf.mxu0
    %v1924 = vadd.f32 0.0, %v1923
    %v1925 = vpop.f32.mrf.mxu0
    %v1926 = vpop.f32.mrf.mxu0
    %v1927 = vadd.f32 0.0, %v1926
    %v1928 = vpop.f32.mrf.mxu0
    %1929 = vmatprep.mubr.bf16.mxu0 0
    %1930 = vmatmul.mubr.bf16.gmra.mxu0 %v568
    %v1931 = vpop.f32.mrf.mxu0
    %v1932 = vadd.f32 0.0, %v1931
    %v1933 = vpop.f32.mrf.mxu0
    %v1934 = vpop.f32.mrf.mxu0
    %v1935 = vadd.f32 0.0, %v1934
    %v1936 = vpop.f32.mrf.mxu0
    %1937 = vmatprep.mubr.bf16.mxu0 0
    %1938 = vmatmul.mubr.bf16.gmra.mxu0 %v571
    %v1939 = vpop.f32.mrf.mxu0
    %v1940 = vadd.f32 0.0, %v1939
    %v1941 = vpop.f32.mrf.mxu0
    %v1942 = vpop.f32.mrf.mxu0
    %v1943 = vadd.f32 0.0, %v1942
    %v1944 = vpop.f32.mrf.mxu0
    %1945 = vdwg.mxu0
    %v1946 = vpack.c.bf16 %v1919, %v1916
    %v1947 = vpack.c.bf16 %v1927, %v1924
    %v1948 = vpack.c.bf16 %v1935, %v1932
    %v1949 = vpack.c.bf16 %v1943, %v1940
    %1950 = vmatprep.subr.bf16.mxu0 0
    %1951 = vmatpush1.bf16.msra.mxu0 0
    %1952 = vmatprep.subr.bf16.mxu0 0
    %1953 = vmatpush1.bf16.msra.mxu0 0
    %1954 = vmatprep.subr.bf16.mxu0 0
    %1955 = vmatpush1.bf16.msra.mxu0 0
    %1956 = vmatprep.subr.bf16.mxu0 0
    %1957 = vmatpush1.bf16.msra.mxu0 0
    %1958 = vmatprep.subr.bf16.mxu0 0
    %1959 = vmatpush1.bf16.msra.mxu0 %v1949
    %1960 = vmatprep.subr.bf16.mxu0 0
    %1961 = vmatpush1.bf16.msra.mxu0 %v1948
    %1962 = vmatprep.subr.bf16.mxu0 0
    %1963 = vmatpush1.bf16.msra.mxu0 %v1947
    %1964 = vmatprep.subr.bf16.mxu0 0
    %1965 = vmatpush1.bf16.msra.mxu0 %v1946
    %1966 = vmatprep.subr.bf16.mxu0 0
    %1967 = vmatpush2.bf16.msra.mxu0 0
    %1968 = vmatprep.subr.bf16.mxu0 0
    %1969 = vmatpush2.bf16.msra.mxu0 0
    %1970 = vmatprep.subr.bf16.mxu0 0
    %1971 = vmatpush2.bf16.msra.mxu0 0
    %1972 = vmatprep.subr.bf16.mxu0 0
    %1973 = vmatpush2.bf16.msra.mxu0 0
    %1974 = vmatprep.subr.bf16.mxu0 0
    %1975 = vmatpush2.bf16.msra.mxu0 0
    %1976 = vmatprep.subr.bf16.mxu0 0
    %1977 = vmatpush2.bf16.msra.mxu0 0
    %1978 = vmatprep.subr.bf16.mxu0 0
    %1979 = vmatpush2.bf16.msra.mxu0 0
    %1980 = vmatprep.subr.bf16.mxu0 0
    %1981 = vmatpush2.bf16.msra.mxu0 0
    %1982 = vmatprep.mubr.bf16.mxu0 0
    %1983 = vmatmul.mubr.bf16.gmra.mxu0 %v285
    %v1984 = vpop.f32.mrf.mxu0
    %v1985 = vadd.f32 0.0, %v1984
    %v1986 = vpop.f32.mrf.mxu0
    %v1987 = vpop.f32.mrf.mxu0
    %v1988 = vadd.f32 0.0, %v1987
    %v1989 = vpop.f32.mrf.mxu0
    %1990 = vmatprep.mubr.bf16.mxu0 0
    %1991 = vmatmul.mubr.bf16.gmra.mxu0 %v288
    %v1992 = vpop.f32.mrf.mxu0
    %v1993 = vadd.f32 0.0, %v1992
    %v1994 = vpop.f32.mrf.mxu0
    %v1995 = vpop.f32.mrf.mxu0
    %v1996 = vadd.f32 0.0, %v1995
    %v1997 = vpop.f32.mrf.mxu0
    %1998 = vmatprep.mubr.bf16.mxu0 0
    %1999 = vmatmul.mubr.bf16.gmra.mxu0 %v291
    %v2000 = vpop.f32.mrf.mxu0
    %v2001 = vadd.f32 0.0, %v2000
    %v2002 = vpop.f32.mrf.mxu0
    %v2003 = vpop.f32.mrf.mxu0
    %v2004 = vadd.f32 0.0, %v2003
    %v2005 = vpop.f32.mrf.mxu0
    %2006 = vmatprep.mubr.bf16.mxu0 0
    %2007 = vmatmul.mubr.bf16.gmra.mxu0 %v294
    %v2008 = vpop.f32.mrf.mxu0
    %v2009 = vadd.f32 0.0, %v2008
    %v2010 = vpop.f32.mrf.mxu0
    %v2011 = vpop.f32.mrf.mxu0
    %v2012 = vadd.f32 0.0, %v2011
    %v2013 = vpop.f32.mrf.mxu0
    %2014 = vdwg.mxu0
    %v2023 = vunpack.c.l.b16 %v1780
    %v2024 = vunpack.c.l.b16 %v1781
    %v2025 = vunpack.c.l.b16 %v1782
    %v2026 = vunpack.c.l.b16 %v1783
    %v2027 = vunpack.c.l.b16 %v1784
    %v2028 = vunpack.c.l.b16 %v1785
    %v2029 = vunpack.c.l.b16 %v1786
    %v2030 = vunpack.c.l.b16 %v1787
    %v2031 = vpack.c.b16 %v2024, %v2023
    %v2032 = vpack.c.b16 %v2026, %v2025
    %v2033 = vpack.c.b16 %v2028, %v2027
    %v2034 = vpack.c.b16 %v2030, %v2029
    %v2036 = vsel %vm174, %v2031, 0
    %v2039 = vsel %vm174, %v2032, 0
    %v2042 = vsel %vm174, %v2033, 0
    %v2045 = vsel %vm174, %v2034, 0
    %2047 = vmatprep.subr.bf16.mxu0 0
    %2048 = vmatpush1.bf16.msra.mxu0 0
    %2049 = vmatprep.subr.bf16.mxu0 0
    %2050 = vmatpush1.bf16.msra.mxu0 0
    %2051 = vmatprep.subr.bf16.mxu0 0
    %2052 = vmatpush1.bf16.msra.mxu0 0
    %2053 = vmatprep.subr.bf16.mxu0 0
    %2054 = vmatpush1.bf16.msra.mxu0 0
    %2055 = vmatprep.subr.bf16.mxu0 0
    %2056 = vmatpush1.bf16.msra.mxu0 0
    %2057 = vmatprep.subr.bf16.mxu0 0
    %2058 = vmatpush1.bf16.msra.mxu0 0
    %2059 = vmatprep.subr.bf16.mxu0 0
    %2060 = vmatpush1.bf16.msra.mxu0 %v1863
    %2061 = vmatprep.subr.bf16.mxu0 0
    %2062 = vmatpush1.bf16.msra.mxu0 %v1862
    %2063 = vmatprep.subr.bf16.mxu0 0
    %2064 = vmatpush2.bf16.msra.mxu0 0
    %2065 = vmatprep.subr.bf16.mxu0 0
    %2066 = vmatpush2.bf16.msra.mxu0 0
    %2067 = vmatprep.subr.bf16.mxu0 0
    %2068 = vmatpush2.bf16.msra.mxu0 0
    %2069 = vmatprep.subr.bf16.mxu0 0
    %2070 = vmatpush2.bf16.msra.mxu0 0
    %2071 = vmatprep.subr.bf16.mxu0 0
    %2072 = vmatpush2.bf16.msra.mxu0 0
    %2073 = vmatprep.subr.bf16.mxu0 0
    %2074 = vmatpush2.bf16.msra.mxu0 0
    %2075 = vmatprep.subr.bf16.mxu0 0
    %2076 = vmatpush2.bf16.msra.mxu0 0
    %2077 = vmatprep.subr.bf16.mxu0 0
    %2078 = vmatpush2.bf16.msra.mxu0 0
    %2079 = vmatprep.mubr.bf16.mxu0 0
    %2080 = vmatmul.mubr.bf16.gmra.mxu0 %v2036
    %v2081 = vpop.f32.mrf.mxu0
    %v2082 = vadd.f32 %v1985, %v2081
    %v2083 = vpop.f32.mrf.mxu0
    %v2084 = vpop.f32.mrf.mxu0
    %v2085 = vadd.f32 %v1988, %v2084
    %v2086 = vpop.f32.mrf.mxu0
    %2087 = vmatprep.mubr.bf16.mxu0 0
    %2088 = vmatmul.mubr.bf16.gmra.mxu0 %v2039
    %v2089 = vpop.f32.mrf.mxu0
    %v2090 = vadd.f32 %v1993, %v2089
    %v2091 = vpop.f32.mrf.mxu0
    %v2092 = vpop.f32.mrf.mxu0
    %v2093 = vadd.f32 %v1996, %v2092
    %v2094 = vpop.f32.mrf.mxu0
    %2095 = vmatprep.mubr.bf16.mxu0 0
    %2096 = vmatmul.mubr.bf16.gmra.mxu0 %v2042
    %v2097 = vpop.f32.mrf.mxu0
    %v2098 = vadd.f32 %v2001, %v2097
    %v2099 = vpop.f32.mrf.mxu0
    %v2100 = vpop.f32.mrf.mxu0
    %v2101 = vadd.f32 %v2004, %v2100
    %v2102 = vpop.f32.mrf.mxu0
    %2103 = vmatprep.mubr.bf16.mxu0 0
    %2104 = vmatmul.mubr.bf16.gmra.mxu0 %v2045
    %v2105 = vpop.f32.mrf.mxu0
    %v2106 = vadd.f32 %v2009, %v2105
    %v2107 = vpop.f32.mrf.mxu0
    %v2108 = vpop.f32.mrf.mxu0
    %v2109 = vadd.f32 %v2012, %v2108
    %v2110 = vpop.f32.mrf.mxu0
    %2111 = vdwg.mxu0
    %s2112 = scalar_lea.vmem [#allocation13], 11
    %v2113 = vld [vmem:[%s2112] sm:$0x1]
    %v2115 = vlaneseq
    %v2116 = vshrl.u32 %v2115, 7
    %v2117 = vsub.s32 0, %v2116
    %v2118 = vrot.slane %v2113, %v2117
    %v2120 = vadd.f32 %v2082, %v2118
    %v2121 = vadd.f32 %v2085, %v2118
    %v2122 = vadd.f32 %v2090, %v2118
    %v2123 = vadd.f32 %v2093, %v2118
    %v2124 = vadd.f32 %v2098, %v2118
    %v2125 = vadd.f32 %v2101, %v2118
    %v2126 = vadd.f32 %v2106, %v2118
    %v2127 = vadd.f32 %v2109, %v2118
    %v2128 = vpack.c.bf16 %v2121, %v2120
    %v2129 = vpack.c.bf16 %v2123, %v2122
    %v2130 = vpack.c.bf16 %v2125, %v2124
    %v2131 = vpack.c.bf16 %v2127, %v2126
    %s2132 = scalar_lea.vmem [#allocation11], 208
    %v2133 = vld [vmem:[%s2132] sm:$0xf]
    %v2134 = vld [vmem:[%s2132 + $0x4] sm:$0xf]
    %v2135 = vld [vmem:[%s2132 + $0x8] sm:$0xf]
    %v2136 = vld [vmem:[%s2132 + $0xc] sm:$0xf]
    %v2141 = vunpack.c.l.b16 %v2133
    %v2142 = vunpack.c.l.b16 %v2134
    %v2143 = vunpack.c.l.b16 %v2135
    %v2144 = vunpack.c.l.b16 %v2136
    %v2145 = vpack.c.b16 %v2142, %v2141
    %v2146 = vpack.c.b16 %v2144, %v2143
    %v2150 = vsel %vm174, %v2128, 0
    %v2153 = vsel %vm174, %v2129, 0
    %v2156 = vsel %vm174, %v2130, 0
    %v2159 = vsel %vm174, %v2131, 0
    %2161 = vmatprep.subr.bf16.mxu0 0
    %2162 = vmatpush1.bf16.msra.mxu0 0
    %2163 = vmatprep.subr.bf16.mxu0 0
    %2164 = vmatpush1.bf16.msra.mxu0 0
    %2165 = vmatprep.subr.bf16.mxu0 0
    %2166 = vmatpush1.bf16.msra.mxu0 0
    %2167 = vmatprep.subr.bf16.mxu0 0
    %2168 = vmatpush1.bf16.msra.mxu0 0
    %2169 = vmatprep.subr.bf16.mxu0 0
    %2170 = vmatpush1.bf16.msra.mxu0 0
    %2171 = vmatprep.subr.bf16.mxu0 0
    %2172 = vmatpush1.bf16.msra.mxu0 0
    %2173 = vmatprep.subr.bf16.mxu0 0
    %2174 = vmatpush1.bf16.msra.mxu0 %v2146
    %2175 = vmatprep.subr.bf16.mxu0 0
    %2176 = vmatpush1.bf16.msra.mxu0 %v2145
    %2177 = vmatprep.subr.bf16.mxu0 0
    %2178 = vmatpush2.bf16.msra.mxu0 0
    %2179 = vmatprep.subr.bf16.mxu0 0
    %2180 = vmatpush2.bf16.msra.mxu0 0
    %2181 = vmatprep.subr.bf16.mxu0 0
    %2182 = vmatpush2.bf16.msra.mxu0 0
    %2183 = vmatprep.subr.bf16.mxu0 0
    %2184 = vmatpush2.bf16.msra.mxu0 0
    %2185 = vmatprep.subr.bf16.mxu0 0
    %2186 = vmatpush2.bf16.msra.mxu0 0
    %2187 = vmatprep.subr.bf16.mxu0 0
    %2188 = vmatpush2.bf16.msra.mxu0 0
    %2189 = vmatprep.subr.bf16.mxu0 0
    %2190 = vmatpush2.bf16.msra.mxu0 0
    %2191 = vmatprep.subr.bf16.mxu0 0
    %2192 = vmatpush2.bf16.msra.mxu0 0
    %2193 = vmatprep.mubr.bf16.mxu0 0
    %2194 = vmatmul.mubr.bf16.gmra.mxu0 %v2150
    %v2195 = vpop.f32.mrf.mxu0
    %v2196 = vadd.f32 0.0, %v2195
    %v2197 = vpop.f32.mrf.mxu0
    %v2198 = vpop.f32.mrf.mxu0
    %v2199 = vadd.f32 0.0, %v2198
    %v2200 = vpop.f32.mrf.mxu0
    %2201 = vmatprep.mubr.bf16.mxu0 0
    %2202 = vmatmul.mubr.bf16.gmra.mxu0 %v2153
    %v2203 = vpop.f32.mrf.mxu0
    %v2204 = vadd.f32 0.0, %v2203
    %v2205 = vpop.f32.mrf.mxu0
    %v2206 = vpop.f32.mrf.mxu0
    %v2207 = vadd.f32 0.0, %v2206
    %v2208 = vpop.f32.mrf.mxu0
    %2209 = vmatprep.mubr.bf16.mxu0 0
    %2210 = vmatmul.mubr.bf16.gmra.mxu0 %v2156
    %v2211 = vpop.f32.mrf.mxu0
    %v2212 = vadd.f32 0.0, %v2211
    %v2213 = vpop.f32.mrf.mxu0
    %v2214 = vpop.f32.mrf.mxu0
    %v2215 = vadd.f32 0.0, %v2214
    %v2216 = vpop.f32.mrf.mxu0
    %2217 = vmatprep.mubr.bf16.mxu0 0
    %2218 = vmatmul.mubr.bf16.gmra.mxu0 %v2159
    %v2219 = vpop.f32.mrf.mxu0
    %v2220 = vadd.f32 0.0, %v2219
    %v2221 = vpop.f32.mrf.mxu0
    %v2222 = vpop.f32.mrf.mxu0
    %v2223 = vadd.f32 0.0, %v2222
    %v2224 = vpop.f32.mrf.mxu0
    %2225 = vdwg.mxu0
    %v2226 = vpack.c.bf16 %v2199, %v2196
    %v2227 = vpack.c.bf16 %v2207, %v2204
    %v2228 = vpack.c.bf16 %v2215, %v2212
    %v2229 = vpack.c.bf16 %v2223, %v2220
    %s2230 = scalar_lea.vmem [#allocation13], 13
    %v2231 = vld [vmem:[%s2230] sm:$0x1]
    %v2233 = vlaneseq
    %v2234 = vshrl.u32 %v2233, 7
    %v2235 = vsub.s32 0, %v2234
    %v2236 = vrot.slane %v2231, %v2235
    %2238 = vmatprep.subr.bf16.mxu0 0
    %2239 = vmatpush1.bf16.msra.mxu0 0
    %2240 = vmatprep.subr.bf16.mxu0 0
    %2241 = vmatpush1.bf16.msra.mxu0 0
    %2242 = vmatprep.subr.bf16.mxu0 0
    %2243 = vmatpush1.bf16.msra.mxu0 0
    %2244 = vmatprep.subr.bf16.mxu0 0
    %2245 = vmatpush1.bf16.msra.mxu0 0
    %2246 = vmatprep.subr.bf16.mxu0 0
    %2247 = vmatpush1.bf16.msra.mxu0 %v2229
    %2248 = vmatprep.subr.bf16.mxu0 0
    %2249 = vmatpush1.bf16.msra.mxu0 %v2228
    %2250 = vmatprep.subr.bf16.mxu0 0
    %2251 = vmatpush1.bf16.msra.mxu0 %v2227
    %2252 = vmatprep.subr.bf16.mxu0 0
    %2253 = vmatpush1.bf16.msra.mxu0 %v2226
    %2254 = vmatprep.subr.bf16.mxu0 0
    %2255 = vmatpush2.bf16.msra.mxu0 0
    %2256 = vmatprep.subr.bf16.mxu0 0
    %2257 = vmatpush2.bf16.msra.mxu0 0
    %2258 = vmatprep.subr.bf16.mxu0 0
    %2259 = vmatpush2.bf16.msra.mxu0 0
    %2260 = vmatprep.subr.bf16.mxu0 0
    %2261 = vmatpush2.bf16.msra.mxu0 0
    %2262 = vmatprep.subr.bf16.mxu0 0
    %2263 = vmatpush2.bf16.msra.mxu0 0
    %2264 = vmatprep.subr.bf16.mxu0 0
    %2265 = vmatpush2.bf16.msra.mxu0 0
    %2266 = vmatprep.subr.bf16.mxu0 0
    %2267 = vmatpush2.bf16.msra.mxu0 0
    %2268 = vmatprep.subr.bf16.mxu0 0
    %2269 = vmatpush2.bf16.msra.mxu0 0
    %2270 = vmatprep.mubr.bf16.mxu0 0
    %2271 = vmatmul.mubr.bf16.gmra.mxu0 %v285
    %v2272 = vpop.f32.mrf.mxu0
    %v2273 = vadd.f32 %v2236, %v2272
    %v2274 = vpop.f32.mrf.mxu0
    %v2275 = vpop.f32.mrf.mxu0
    %v2276 = vadd.f32 %v2236, %v2275
    %v2277 = vpop.f32.mrf.mxu0
    %2278 = vmatprep.mubr.bf16.mxu0 0
    %2279 = vmatmul.mubr.bf16.gmra.mxu0 %v288
    %v2280 = vpop.f32.mrf.mxu0
    %v2281 = vadd.f32 %v2236, %v2280
    %v2282 = vpop.f32.mrf.mxu0
    %v2283 = vpop.f32.mrf.mxu0
    %v2284 = vadd.f32 %v2236, %v2283
    %v2285 = vpop.f32.mrf.mxu0
    %2286 = vmatprep.mubr.bf16.mxu0 0
    %2287 = vmatmul.mubr.bf16.gmra.mxu0 %v291
    %v2288 = vpop.f32.mrf.mxu0
    %v2289 = vadd.f32 %v2236, %v2288
    %v2290 = vpop.f32.mrf.mxu0
    %v2291 = vpop.f32.mrf.mxu0
    %v2292 = vadd.f32 %v2236, %v2291
    %v2293 = vpop.f32.mrf.mxu0
    %2294 = vmatprep.mubr.bf16.mxu0 0
    %2295 = vmatmul.mubr.bf16.gmra.mxu0 %v294
    %v2296 = vpop.f32.mrf.mxu0
    %v2297 = vadd.f32 %v2236, %v2296
    %v2298 = vpop.f32.mrf.mxu0
    %v2299 = vpop.f32.mrf.mxu0
    %v2300 = vadd.f32 %v2236, %v2299
    %v2301 = vpop.f32.mrf.mxu0
    %2302 = vdwg.mxu0
    %v2303 = vpack.c.bf16 %v2276, %v2273
    %v2304 = vpack.c.bf16 %v2284, %v2281
    %v2305 = vpack.c.bf16 %v2292, %v2289
    %v2306 = vpack.c.bf16 %v2300, %v2297
    %s2307 = scalar_lea.vmem [#allocation11], 224
    %v2308 = vld [vmem:[%s2307] sm:$0xf]
    %v2309 = vld [vmem:[%s2307 + $0x4] sm:$0xf]
    %v2310 = vld [vmem:[%s2307 + $0x8] sm:$0xf]
    %v2311 = vld [vmem:[%s2307 + $0xc] sm:$0xf]
    %v2316 = vunpack.c.l.b16 %v2308
    %v2317 = vunpack.c.l.b16 %v2309
    %v2318 = vunpack.c.l.b16 %v2310
    %v2319 = vunpack.c.l.b16 %v2311
    %v2320 = vpack.c.b16 %v2317, %v2316
    %v2321 = vpack.c.b16 %v2319, %v2318
    %v2325 = vsel %vm174, %v2303, 0
    %v2328 = vsel %vm174, %v2304, 0
    %v2331 = vsel %vm174, %v2305, 0
    %v2334 = vsel %vm174, %v2306, 0
    %2336 = vmatprep.subr.bf16.mxu0 0
    %2337 = vmatpush1.bf16.msra.mxu0 0
    %2338 = vmatprep.subr.bf16.mxu0 0
    %2339 = vmatpush1.bf16.msra.mxu0 0
    %2340 = vmatprep.subr.bf16.mxu0 0
    %2341 = vmatpush1.bf16.msra.mxu0 0
    %2342 = vmatprep.subr.bf16.mxu0 0
    %2343 = vmatpush1.bf16.msra.mxu0 0
    %2344 = vmatprep.subr.bf16.mxu0 0
    %2345 = vmatpush1.bf16.msra.mxu0 0
    %2346 = vmatprep.subr.bf16.mxu0 0
    %2347 = vmatpush1.bf16.msra.mxu0 0
    %2348 = vmatprep.subr.bf16.mxu0 0
    %2349 = vmatpush1.bf16.msra.mxu0 %v2321
    %2350 = vmatprep.subr.bf16.mxu0 0
    %2351 = vmatpush1.bf16.msra.mxu0 %v2320
    %2352 = vmatprep.subr.bf16.mxu0 0
    %2353 = vmatpush2.bf16.msra.mxu0 0
    %2354 = vmatprep.subr.bf16.mxu0 0
    %2355 = vmatpush2.bf16.msra.mxu0 0
    %2356 = vmatprep.subr.bf16.mxu0 0
    %2357 = vmatpush2.bf16.msra.mxu0 0
    %2358 = vmatprep.subr.bf16.mxu0 0
    %2359 = vmatpush2.bf16.msra.mxu0 0
    %2360 = vmatprep.subr.bf16.mxu0 0
    %2361 = vmatpush2.bf16.msra.mxu0 0
    %2362 = vmatprep.subr.bf16.mxu0 0
    %2363 = vmatpush2.bf16.msra.mxu0 0
    %2364 = vmatprep.subr.bf16.mxu0 0
    %2365 = vmatpush2.bf16.msra.mxu0 0
    %2366 = vmatprep.subr.bf16.mxu0 0
    %2367 = vmatpush2.bf16.msra.mxu0 0
    %2368 = vmatprep.mubr.bf16.mxu0 0
    %2369 = vmatmul.mubr.bf16.gmra.mxu0 %v2325
    %v2370 = vpop.f32.mrf.mxu0
    %v2371 = vadd.f32 0.0, %v2370
    %v2372 = vpop.f32.mrf.mxu0
    %v2373 = vpop.f32.mrf.mxu0
    %v2374 = vadd.f32 0.0, %v2373
    %v2375 = vpop.f32.mrf.mxu0
    %2376 = vmatprep.mubr.bf16.mxu0 0
    %2377 = vmatmul.mubr.bf16.gmra.mxu0 %v2328
    %v2378 = vpop.f32.mrf.mxu0
    %v2379 = vadd.f32 0.0, %v2378
    %v2380 = vpop.f32.mrf.mxu0
    %v2381 = vpop.f32.mrf.mxu0
    %v2382 = vadd.f32 0.0, %v2381
    %v2383 = vpop.f32.mrf.mxu0
    %2384 = vmatprep.mubr.bf16.mxu0 0
    %2385 = vmatmul.mubr.bf16.gmra.mxu0 %v2331
    %v2386 = vpop.f32.mrf.mxu0
    %v2387 = vadd.f32 0.0, %v2386
    %v2388 = vpop.f32.mrf.mxu0
    %v2389 = vpop.f32.mrf.mxu0
    %v2390 = vadd.f32 0.0, %v2389
    %v2391 = vpop.f32.mrf.mxu0
    %2392 = vmatprep.mubr.bf16.mxu0 0
    %2393 = vmatmul.mubr.bf16.gmra.mxu0 %v2334
    %v2394 = vpop.f32.mrf.mxu0
    %v2395 = vadd.f32 0.0, %v2394
    %v2396 = vpop.f32.mrf.mxu0
    %v2397 = vpop.f32.mrf.mxu0
    %v2398 = vadd.f32 0.0, %v2397
    %v2399 = vpop.f32.mrf.mxu0
    %2400 = vdwg.mxu0
    %v2401 = vpack.c.bf16 %v2374, %v2371
    %v2402 = vpack.c.bf16 %v2382, %v2379
    %v2403 = vpack.c.bf16 %v2390, %v2387
    %v2404 = vpack.c.bf16 %v2398, %v2395
    %s2405 = scalar_lea.vmem [#allocation13], 14
    %v2406 = vld [vmem:[%s2405] sm:$0x1]
    %v2408 = vlaneseq
    %v2409 = vshrl.u32 %v2408, 7
    %v2410 = vsub.s32 0, %v2409
    %v2411 = vrot.slane %v2406, %v2410
    %2413 = vmatprep.subr.bf16.mxu0 0
    %2414 = vmatpush1.bf16.msra.mxu0 0
    %2415 = vmatprep.subr.bf16.mxu0 0
    %2416 = vmatpush1.bf16.msra.mxu0 0
    %2417 = vmatprep.subr.bf16.mxu0 0
    %2418 = vmatpush1.bf16.msra.mxu0 0
    %2419 = vmatprep.subr.bf16.mxu0 0
    %2420 = vmatpush1.bf16.msra.mxu0 0
    %2421 = vmatprep.subr.bf16.mxu0 0
    %2422 = vmatpush1.bf16.msra.mxu0 %v2404
    %2423 = vmatprep.subr.bf16.mxu0 0
    %2424 = vmatpush1.bf16.msra.mxu0 %v2403
    %2425 = vmatprep.subr.bf16.mxu0 0
    %2426 = vmatpush1.bf16.msra.mxu0 %v2402
    %2427 = vmatprep.subr.bf16.mxu0 0
    %2428 = vmatpush1.bf16.msra.mxu0 %v2401
    %2429 = vmatprep.subr.bf16.mxu0 0
    %2430 = vmatpush2.bf16.msra.mxu0 0
    %2431 = vmatprep.subr.bf16.mxu0 0
    %2432 = vmatpush2.bf16.msra.mxu0 0
    %2433 = vmatprep.subr.bf16.mxu0 0
    %2434 = vmatpush2.bf16.msra.mxu0 0
    %2435 = vmatprep.subr.bf16.mxu0 0
    %2436 = vmatpush2.bf16.msra.mxu0 0
    %2437 = vmatprep.subr.bf16.mxu0 0
    %2438 = vmatpush2.bf16.msra.mxu0 0
    %2439 = vmatprep.subr.bf16.mxu0 0
    %2440 = vmatpush2.bf16.msra.mxu0 0
    %2441 = vmatprep.subr.bf16.mxu0 0
    %2442 = vmatpush2.bf16.msra.mxu0 0
    %2443 = vmatprep.subr.bf16.mxu0 0
    %2444 = vmatpush2.bf16.msra.mxu0 0
    %2445 = vmatprep.mubr.bf16.mxu0 0
    %2446 = vmatmul.mubr.bf16.gmra.mxu0 %v285
    %v2447 = vpop.f32.mrf.mxu0
    %v2448 = vadd.f32 %v2411, %v2447
    %v2449 = vpop.f32.mrf.mxu0
    %v2450 = vpop.f32.mrf.mxu0
    %v2451 = vadd.f32 %v2411, %v2450
    %v2452 = vpop.f32.mrf.mxu0
    %2453 = vmatprep.mubr.bf16.mxu0 0
    %2454 = vmatmul.mubr.bf16.gmra.mxu0 %v288
    %v2455 = vpop.f32.mrf.mxu0
    %v2456 = vadd.f32 %v2411, %v2455
    %v2457 = vpop.f32.mrf.mxu0
    %v2458 = vpop.f32.mrf.mxu0
    %v2459 = vadd.f32 %v2411, %v2458
    %v2460 = vpop.f32.mrf.mxu0
    %2461 = vmatprep.mubr.bf16.mxu0 0
    %2462 = vmatmul.mubr.bf16.gmra.mxu0 %v291
    %v2463 = vpop.f32.mrf.mxu0
    %v2464 = vadd.f32 %v2411, %v2463
    %v2465 = vpop.f32.mrf.mxu0
    %v2466 = vpop.f32.mrf.mxu0
    %v2467 = vadd.f32 %v2411, %v2466
    %v2468 = vpop.f32.mrf.mxu0
    %2469 = vmatprep.mubr.bf16.mxu0 0
    %2470 = vmatmul.mubr.bf16.gmra.mxu0 %v294
    %v2471 = vpop.f32.mrf.mxu0
    %v2472 = vadd.f32 %v2411, %v2471
    %v2473 = vpop.f32.mrf.mxu0
    %v2474 = vpop.f32.mrf.mxu0
    %v2475 = vadd.f32 %v2411, %v2474
    %v2476 = vpop.f32.mrf.mxu0
    %2477 = vdwg.mxu0
    %v2478 = vpack.c.bf16 %v2451, %v2448
    %v2479 = vpack.c.bf16 %v2459, %v2456
    %v2480 = vpack.c.bf16 %v2467, %v2464
    %v2481 = vpack.c.bf16 %v2475, %v2472
    %s2482 = scalar_lea.vmem [#allocation11], 240
    %v2483 = vld [vmem:[%s2482] sm:$0xf]
    %v2484 = vld [vmem:[%s2482 + $0x4] sm:$0xf]
    %v2485 = vld [vmem:[%s2482 + $0x8] sm:$0xf]
    %v2486 = vld [vmem:[%s2482 + $0xc] sm:$0xf]
    %v2491 = vunpack.c.l.b16 %v2483
    %v2492 = vunpack.c.l.b16 %v2484
    %v2493 = vunpack.c.l.b16 %v2485
    %v2494 = vunpack.c.l.b16 %v2486
    %v2495 = vpack.c.b16 %v2492, %v2491
    %v2496 = vpack.c.b16 %v2494, %v2493
    %v2500 = vsel %vm174, %v2478, 0
    %v2503 = vsel %vm174, %v2479, 0
    %v2506 = vsel %vm174, %v2480, 0
    %v2509 = vsel %vm174, %v2481, 0
    %2511 = vmatprep.subr.bf16.mxu0 0
    %2512 = vmatpush1.bf16.msra.mxu0 0
    %2513 = vmatprep.subr.bf16.mxu0 0
    %2514 = vmatpush1.bf16.msra.mxu0 0
    %2515 = vmatprep.subr.bf16.mxu0 0
    %2516 = vmatpush1.bf16.msra.mxu0 0
    %2517 = vmatprep.subr.bf16.mxu0 0
    %2518 = vmatpush1.bf16.msra.mxu0 0
    %2519 = vmatprep.subr.bf16.mxu0 0
    %2520 = vmatpush1.bf16.msra.mxu0 0
    %2521 = vmatprep.subr.bf16.mxu0 0
    %2522 = vmatpush1.bf16.msra.mxu0 0
    %2523 = vmatprep.subr.bf16.mxu0 0
    %2524 = vmatpush1.bf16.msra.mxu0 %v2496
    %2525 = vmatprep.subr.bf16.mxu0 0
    %2526 = vmatpush1.bf16.msra.mxu0 %v2495
    %2527 = vmatprep.subr.bf16.mxu0 0
    %2528 = vmatpush2.bf16.msra.mxu0 0
    %2529 = vmatprep.subr.bf16.mxu0 0
    %2530 = vmatpush2.bf16.msra.mxu0 0
    %2531 = vmatprep.subr.bf16.mxu0 0
    %2532 = vmatpush2.bf16.msra.mxu0 0
    %2533 = vmatprep.subr.bf16.mxu0 0
    %2534 = vmatpush2.bf16.msra.mxu0 0
    %2535 = vmatprep.subr.bf16.mxu0 0
    %2536 = vmatpush2.bf16.msra.mxu0 0
    %2537 = vmatprep.subr.bf16.mxu0 0
    %2538 = vmatpush2.bf16.msra.mxu0 0
    %2539 = vmatprep.subr.bf16.mxu0 0
    %2540 = vmatpush2.bf16.msra.mxu0 0
    %2541 = vmatprep.subr.bf16.mxu0 0
    %2542 = vmatpush2.bf16.msra.mxu0 0
    %2543 = vmatprep.mubr.bf16.mxu0 0
    %2544 = vmatmul.mubr.bf16.gmra.mxu0 %v2500
    %v2545 = vpop.f32.mrf.mxu0
    %v2546 = vadd.f32 0.0, %v2545
    %v2547 = vpop.f32.mrf.mxu0
    %v2548 = vpop.f32.mrf.mxu0
    %v2549 = vadd.f32 0.0, %v2548
    %v2550 = vpop.f32.mrf.mxu0
    %2551 = vmatprep.mubr.bf16.mxu0 0
    %2552 = vmatmul.mubr.bf16.gmra.mxu0 %v2503
    %v2553 = vpop.f32.mrf.mxu0
    %v2554 = vadd.f32 0.0, %v2553
    %v2555 = vpop.f32.mrf.mxu0
    %v2556 = vpop.f32.mrf.mxu0
    %v2557 = vadd.f32 0.0, %v2556
    %v2558 = vpop.f32.mrf.mxu0
    %2559 = vmatprep.mubr.bf16.mxu0 0
    %2560 = vmatmul.mubr.bf16.gmra.mxu0 %v2506
    %v2561 = vpop.f32.mrf.mxu0
    %v2562 = vadd.f32 0.0, %v2561
    %v2563 = vpop.f32.mrf.mxu0
    %v2564 = vpop.f32.mrf.mxu0
    %v2565 = vadd.f32 0.0, %v2564
    %v2566 = vpop.f32.mrf.mxu0
    %2567 = vmatprep.mubr.bf16.mxu0 0
    %2568 = vmatmul.mubr.bf16.gmra.mxu0 %v2509
    %v2569 = vpop.f32.mrf.mxu0
    %v2570 = vadd.f32 0.0, %v2569
    %v2571 = vpop.f32.mrf.mxu0
    %v2572 = vpop.f32.mrf.mxu0
    %v2573 = vadd.f32 0.0, %v2572
    %v2574 = vpop.f32.mrf.mxu0
    %2575 = vdwg.mxu0
    %v2576 = vpack.c.bf16 %v2549, %v2546
    %v2577 = vpack.c.bf16 %v2557, %v2554
    %v2578 = vpack.c.bf16 %v2565, %v2562
    %v2579 = vpack.c.bf16 %v2573, %v2570
    %s2580 = scalar_lea.vmem [#allocation13], 15
    %v2581 = vld [vmem:[%s2580] sm:$0x1]
    %v2583 = vlaneseq
    %v2584 = vshrl.u32 %v2583, 7
    %v2585 = vsub.s32 0, %v2584
    %v2586 = vrot.slane %v2581, %v2585
    %2588 = vmatprep.subr.bf16.mxu0 0
    %2589 = vmatpush1.bf16.msra.mxu0 0
    %2590 = vmatprep.subr.bf16.mxu0 0
    %2591 = vmatpush1.bf16.msra.mxu0 0
    %2592 = vmatprep.subr.bf16.mxu0 0
    %2593 = vmatpush1.bf16.msra.mxu0 0
    %2594 = vmatprep.subr.bf16.mxu0 0
    %2595 = vmatpush1.bf16.msra.mxu0 0
    %2596 = vmatprep.subr.bf16.mxu0 0
    %2597 = vmatpush1.bf16.msra.mxu0 %v2579
    %2598 = vmatprep.subr.bf16.mxu0 0
    %2599 = vmatpush1.bf16.msra.mxu0 %v2578
    %2600 = vmatprep.subr.bf16.mxu0 0
    %2601 = vmatpush1.bf16.msra.mxu0 %v2577
    %2602 = vmatprep.subr.bf16.mxu0 0
    %2603 = vmatpush1.bf16.msra.mxu0 %v2576
    %2604 = vmatprep.subr.bf16.mxu0 0
    %2605 = vmatpush2.bf16.msra.mxu0 0
    %2606 = vmatprep.subr.bf16.mxu0 0
    %2607 = vmatpush2.bf16.msra.mxu0 0
    %2608 = vmatprep.subr.bf16.mxu0 0
    %2609 = vmatpush2.bf16.msra.mxu0 0
    %2610 = vmatprep.subr.bf16.mxu0 0
    %2611 = vmatpush2.bf16.msra.mxu0 0
    %2612 = vmatprep.subr.bf16.mxu0 0
    %2613 = vmatpush2.bf16.msra.mxu0 0
    %2614 = vmatprep.subr.bf16.mxu0 0
    %2615 = vmatpush2.bf16.msra.mxu0 0
    %2616 = vmatprep.subr.bf16.mxu0 0
    %2617 = vmatpush2.bf16.msra.mxu0 0
    %2618 = vmatprep.subr.bf16.mxu0 0
    %2619 = vmatpush2.bf16.msra.mxu0 0
    %2620 = vmatprep.mubr.bf16.mxu0 0
    %2621 = vmatmul.mubr.bf16.gmra.mxu0 %v285
    %v2622 = vpop.f32.mrf.mxu0
    %v2623 = vadd.f32 %v2586, %v2622
    %v2624 = vpop.f32.mrf.mxu0
    %v2625 = vpop.f32.mrf.mxu0
    %v2626 = vadd.f32 %v2586, %v2625
    %v2627 = vpop.f32.mrf.mxu0
    %2628 = vmatprep.mubr.bf16.mxu0 0
    %2629 = vmatmul.mubr.bf16.gmra.mxu0 %v288
    %v2630 = vpop.f32.mrf.mxu0
    %v2631 = vadd.f32 %v2586, %v2630
    %v2632 = vpop.f32.mrf.mxu0
    %v2633 = vpop.f32.mrf.mxu0
    %v2634 = vadd.f32 %v2586, %v2633
    %v2635 = vpop.f32.mrf.mxu0
    %2636 = vmatprep.mubr.bf16.mxu0 0
    %2637 = vmatmul.mubr.bf16.gmra.mxu0 %v291
    %v2638 = vpop.f32.mrf.mxu0
    %v2639 = vadd.f32 %v2586, %v2638
    %v2640 = vpop.f32.mrf.mxu0
    %v2641 = vpop.f32.mrf.mxu0
    %v2642 = vadd.f32 %v2586, %v2641
    %v2643 = vpop.f32.mrf.mxu0
    %2644 = vmatprep.mubr.bf16.mxu0 0
    %2645 = vmatmul.mubr.bf16.gmra.mxu0 %v294
    %v2646 = vpop.f32.mrf.mxu0
    %v2647 = vadd.f32 %v2586, %v2646
    %v2648 = vpop.f32.mrf.mxu0
    %v2649 = vpop.f32.mrf.mxu0
    %v2650 = vadd.f32 %v2586, %v2649
    %v2651 = vpop.f32.mrf.mxu0
    %2652 = vdwg.mxu0
    %2653 = vst [vmem:[#allocation14] sm:$0xff] %v2623
    %2654 = vst [vmem:[#allocation14 + $0x8] sm:$0xff] %v2626
    %2655 = vst [vmem:[#allocation14 + $0x10] sm:$0xff] %v2631
    %2656 = vst [vmem:[#allocation14 + $0x18] sm:$0xff] %v2634
    %2657 = vst [vmem:[#allocation14 + $0x20] sm:$0xff] %v2639
    %2658 = vst [vmem:[#allocation14 + $0x28] sm:$0xff] %v2642
    %2659 = vst [vmem:[#allocation14 + $0x30] sm:$0xff] %v2647
    %2660 = vst [vmem:[#allocation14 + $0x38] sm:$0xff] %v2650
    // Predicated region
    $region70: #{tpu_custom_call.1} parent=1 // pred_check
      _
    $region71: #{tpu_custom_call.1} parent=1 // pred_check_branch
      %2662 = sbr.rel (0) target = $region73
    $region72: #{tpu_custom_call.1} parent=1 // pred_region
      %s2664 = ssub.s32 1024, 1024
      %2665 = vsyncadd [#allocation4], %s2664
      %s2666 = sshll.u32 [#allocation14], 4
      %s2667 = int_to_ptr.vmem [resolvable:$true] %s2666
      %2672 = dma.vmem_to_hbm [thread:$0]  %s2667, 1024, %s10, [#allocation4], 128, 128, 8
    $region73: #{tpu_custom_call.1} parent=1 // pred_fallthru
      _
    // Predicated region
    $region74: #{tpu_custom_call.1} parent=1 // pred_check
      _
    $region75: #{tpu_custom_call.1} parent=1 // pred_check_branch
      %2674 = sbr.rel (0) target = $region77
    $region76: #{tpu_custom_call.1} parent=1 // pred_region
      %2675 = dma.done [#allocation4], 1024
    $region77: #{tpu_custom_call.1} parent=1 // pred_fallthru
      _
    %2676 = vsyncpa [#allocation3], 1
    %2677 = vsyncpa [#allocation6], 1
    %2678 = vsyncpa [#allocation9], 1
    %2679 = vsyncpa [#allocation12], 1
    %2680 = vsyncpa [#allocation4], 1

</llo_original>
